<compile_context>
chip_gen: v6e
topology: v6e:2x2x1
jax: 0.10.0
libtpu: 0.0.40
codegen_flags: <defaults>
</compile_context>

<pallas_src>
import functools

import jax
import jax.numpy as jnp
from jax.experimental import pallas as pl
from jax.experimental.pallas import tpu as pltpu


# ------------------------------ in-kernel helpers ----------------------------

def _layernorm(x, g, b, eps=1e-5):
    # x: (S, D) f32 ; g, b: (1, D) f32
    mu = jnp.mean(x, axis=-1, keepdims=True)
    var = jnp.mean(jnp.square(x - mu), axis=-1, keepdims=True)
    return (x - mu) * jax.lax.rsqrt(var + eps) * g + b


# ------------------------------ Pallas kernels --------------------------------

def _embed_kernel(patches_ref, w_ref, pos_ref, ln_ref, o_ref):
    # patches_ref: (S, C*P*P) bf16  (row 0 is a zero row standing in for the CLS token)
    # w_ref:       (C*P*P, D) bf16
    # pos_ref:     (S, D) f32       (row 0 already contains pos[0] + class_embedding)
    # ln_ref:      (2, D) f32       (pre-layernorm gamma, beta)
    emb = jnp.dot(patches_ref[...], w_ref[...],
                  preferred_element_type=jnp.float32)           # (S, D) f32
    h = emb + pos_ref[...]
    ln = ln_ref[...]
    o_ref[...] = _layernorm(h, ln[0:1, :], ln[1:2, :])


def _encoder_layer_kernel(h_ref, ln_ref, wqkv_ref, bqkv_ref, wo_ref, bo_ref,
                          w1_ref, b1_ref, w2_ref, b2_ref, o_ref,
                          q3_ref, k3_ref, v3_ref, attn3_ref,
                          *, heads, head_dim):
    # h_ref: (S, D) f32 residual stream (one batch element per grid step)
    h = h_ref[...]
    D = h.shape[-1]
    ln = ln_ref[...]                                            # (4, D) f32

    # ---- LN1 + fused QKV projection (bf16 MXU, f32 accumulation) ----
    # NOTE: the 1/sqrt(head_dim) attention scale is pre-folded into the Q columns of
    # wqkv / bqkv at prepare_params() time, so no per-score scaling happens below.
    x = _layernorm(h, ln[0:1, :], ln[1:2, :])
    qkv = (jnp.dot(x.astype(jnp.bfloat16), wqkv_ref[...],
                   preferred_element_type=jnp.float32) + bqkv_ref[...])  # (S, 3D) f32

    # ---- split into per-head (S, Dh) operands, head-major in VMEM scratch ----
    # Static lane slices + static leading-axis stores: pure data movement, no matmuls.
    for hh in range(heads):
        lo = hh * head_dim
        q3_ref[hh] = qkv[:, lo:lo + head_dim].astype(jnp.bfloat16)
        k3_ref[hh] = qkv[:, D + lo:D + lo + head_dim].astype(jnp.bfloat16)
        v3_ref[hh] = qkv[:, 2 * D + lo:2 * D + lo + head_dim].astype(jnp.bfloat16)

    # ---- attention: exact per-head FLOPs; fori_loop bounds (S, S) live range to one
    #      head at a time (no Python-unrolled matmul loop). ----
    def head_body(hh, carry):
        qh = q3_ref[hh]                                         # (S, Dh) bf16
        kh = k3_ref[hh]
        vh = v3_ref[hh]
        s = jax.lax.dot_general(qh, kh, (((1,), (1,)), ((), ())),
                                preferred_element_type=jnp.float32)      # (S, S) f32
        s = s - jnp.max(s, axis=-1, keepdims=True)
        p = jnp.exp(s)
        p = p * pl.reciprocal(jnp.sum(p, axis=-1, keepdims=True), approx=True)
        attn3_ref[hh] = jnp.dot(p.astype(jnp.bfloat16), vh,
                                preferred_element_type=jnp.float32)      # (S, Dh) f32
        return carry

    jax.lax.fori_loop(0, heads, head_body, 0)
    # TODO(synk): for real CLIP-L (S=577), tile this flash-style over query blocks to
    # shrink the (S, S) tile and expose a second 'parallel' grid axis (v7x megacore).

    # merge heads back to (S, D): static leading-index loads + lane concat (cheap copies)
    attn = jnp.concatenate([attn3_ref[hh] for hh in range(heads)], axis=-1)

    # ---- output projection + residual ----
    h1 = (jnp.dot(attn.astype(jnp.bfloat16), wo_ref[...],
                  preferred_element_type=jnp.float32) + bo_ref[...] + h)

    # ---- LN2 + MLP (quick-GELU) + residual ----
    # TODO(synk): at real CLIP-L sizes, stream w1/w2 over an 'arbitrary' I-tile grid
    # axis (or pltpu.emit_pipeline) so the per-layer weight DMA overlaps the MXU work.
    x2 = _layernorm(h1, ln[2:3, :], ln[3:4, :])
    y = (jnp.dot(x2.astype(jnp.bfloat16), w1_ref[...],
                 preferred_element_type=jnp.float32) + b1_ref[...])
    y = y * jax.nn.sigmoid(1.702 * y)                           # quick-GELU, f32
    out = (jnp.dot(y.astype(jnp.bfloat16), w2_ref[...],
                   preferred_element_type=jnp.float32) + b2_ref[...] + h1)
    o_ref[...] = out


# ------------------------------ Pallas wrappers -------------------------------

@functools.lru_cache(maxsize=None)
def _vmem_limit_bytes():
    """Explicit scoped-VMEM budget: ~100 MB on v5e/v6e, capacity-aware on v7x."""
    try:
        cap = int(pltpu.get_tpu_info().vmem_capacity_bytes)
        return int(min(100 * 1024 * 1024, 0.9 * cap))
    except Exception:
        return 64 * 1024 * 1024   # conservative: fits every current chip's physical VMEM


@functools.lru_cache(maxsize=None)
def _single_buffer_supported():
    """Preflight: can this JAX build single-buffer grid-invariant blocks via
    pipeline_mode=pl.Buffered(1)?  If not, fall back to default double-buffering."""
    try:
        def k(x_ref, o_ref):
            o_ref[...] = x_ref[...] + 1.0
        f = pl.pallas_call(
            k,
            out_shape=jax.ShapeDtypeStruct((16, 128), jnp.float32),
            grid=(2,),
            in_specs=[pl.BlockSpec((8, 128), lambda i: (0, 0),
                                   pipeline_mode=pl.Buffered(1))],
            out_specs=pl.BlockSpec((8, 128), lambda i: (i, 0)),
        )
        jax.block_until_ready(f(jnp.zeros((8, 128), jnp.float32)))
        return True
    except Exception:
        return False


def _const_spec(shape):
    """BlockSpec for grid-invariant weights/biases (index_map always (0, 0)):
    single-buffered when supported -> halves weight VMEM (key for v7x)."""
    index_map = lambda *_: (0,) * len(shape)
    if _single_buffer_supported():
        return pl.BlockSpec(shape, index_map, pipeline_mode=pl.Buffered(1))
    return pl.BlockSpec(shape, index_map)


def _compiler_params():
    # batch grid axis is independent -> "parallel" (megacore sharding on multi-TC chips)
    return pltpu.CompilerParams(dimension_semantics=("parallel",),
                                vmem_limit_bytes=_vmem_limit_bytes())


def pallas_embed(patches_ext, fp, S, D):
    B, _, CPP = patches_ext.shape
    return pl.pallas_call(
        _embed_kernel,
        out_shape=jax.ShapeDtypeStruct((B, S, D), jnp.float32),
        grid=(B,),
        in_specs=[
            pl.BlockSpec((None, S, CPP), lambda b: (b, 0, 0)),  # per-image patches
            _const_spec((CPP, D)),                              # patch weight (bf16)
            _const_spec((S, D)),                                # pos (+ cls in row 0)
            _const_spec((2, D)),                                # pre-LN gamma/beta
        ],
        out_specs=pl.BlockSpec((None, S, D), lambda b: (b, 0, 0)),
        compiler_params=_compiler_params(),
    )(patches_ext, fp['patch_w'], fp['pos_cls'], fp['pre_ln'])


def fused_encoder_layer(h, lp, cfg):
    B, S, D = h.shape
    H = cfg.heads
    Dh = D // H
    I = cfg.intermediate
    kernel = functools.partial(_encoder_layer_kernel, heads=H, head_dim=Dh)
    return pl.pallas_call(
        kernel,
        out_shape=jax.ShapeDtypeStruct((B, S, D), jnp.float32),
        grid=(B,),
        in_specs=[
            pl.BlockSpec((None, S, D), lambda b: (b, 0, 0)),    # residual stream h
            _const_spec((4, D)),                                # ln1_g, ln1_b, ln2_g, ln2_b
            _const_spec((D, 3 * D)),                            # fused wqkv (bf16, Q pre-scaled)
            _const_spec((1, 3 * D)),                            # fused bqkv (Q pre-scaled)
            _const_spec((D, D)),                                # wo (bf16)
            _const_spec((1, D)),                                # bo
            _const_spec((D, I)),                                # w1 (bf16)
            _const_spec((1, I)),                                # b1
            _const_spec((I, D)),                                # w2 (bf16)
            _const_spec((1, D)),                                # b2
        ],
        out_specs=pl.BlockSpec((None, S, D), lambda b: (b, 0, 0)),
        scratch_shapes=[
            pltpu.VMEM((H, S, Dh), jnp.bfloat16),               # per-head q
            pltpu.VMEM((H, S, Dh), jnp.bfloat16),               # per-head k
            pltpu.VMEM((H, S, Dh), jnp.bfloat16),               # per-head v
            pltpu.VMEM((H, S, Dh), jnp.float32),                # per-head attention out
        ],
        input_output_aliases={0: 0},                            # reuse h's HBM buffer
        compiler_params=_compiler_params(),
    )(h, lp['ln'], lp['wqkv'], lp['bqkv'], lp['wo'], lp['bo'],
      lp['w1'], lp['b1'], lp['w2'], lp['b2'])


# --------------------------- config / synthetic params ------------------------

class Config:
    image_size = 32
    patch_size = 8
    channels = 3
    hidden = 128          # lane-dense (multiple of 128) -> unmasked vst output stores
    heads = 4             # head_dim = 32
    intermediate = 512
    layers = 3


def init_params(key, cfg):
    def normal(key, shape, scale=0.02):
        return scale * jax.random.normal(key, shape, dtype=jnp.float32)

    keys = jax.random.split(key, 4 + cfg.layers * 8)
    np_side = cfg.image_size // cfg.patch_size
    num_patches = np_side * np_side
    params = {
        # conv weight in torch layout (hidden, C, p, p); CLIP patch conv has no bias
        'patch_w': normal(keys[0], (cfg.hidden, cfg.channels,
                                    cfg.patch_size, cfg.patch_size)),
        'class_emb': normal(keys[1], (cfg.hidden,)),
        'pos_emb': normal(keys[2], (num_patches + 1, cfg.hidden)),
        'pre_ln_g': jnp.ones((cfg.hidden,), jnp.float32),
        'pre_ln_b': jnp.zeros((cfg.hidden,), jnp.float32),
        'layers': [],
    }
    D, I = cfg.hidden, cfg.intermediate
    for l in range(cfg.layers):
        k = keys[4 + l * 8: 4 + (l + 1) * 8]
        params['layers'].append({
            'ln1_g': jnp.ones((D,), jnp.float32), 'ln1_b': jnp.zeros((D,), jnp.float32),
            'wq': normal(k[0], (D, D)), 'bq': jnp.zeros((D,), jnp.float32),
            'wk': normal(k[1], (D, D)), 'bk': jnp.zeros((D,), jnp.float32),
            'wv': normal(k[2], (D, D)), 'bv': jnp.zeros((D,), jnp.float32),
            'wo': normal(k[3], (D, D)), 'bo': jnp.zeros((D,), jnp.float32),
            'ln2_g': jnp.ones((D,), jnp.float32), 'ln2_b': jnp.zeros((D,), jnp.float32),
            'w1': normal(k[4], (D, I)), 'b1': jnp.zeros((I,), jnp.float32),
            'w2': normal(k[5], (I, D)), 'b2': jnp.zeros((D,), jnp.float32),
        })
    return params


def prepare_params(params, cfg):
    """One-time fusion / layout / dtype prep (NOT part of the per-forward path).
    Folds the 1/sqrt(head_dim) attention scale into the Q projection."""
    D, I = cfg.hidden, cfg.intermediate
    scale = (D // cfg.heads) ** -0.5
    fused = {
        'patch_w': params['patch_w'].reshape(D, -1).T.astype(jnp.bfloat16),  # (C*P*P, D)
        # positional embedding with the class embedding folded into row 0
        'pos_cls': params['pos_emb'].at[0].add(params['class_emb']).astype(jnp.float32),
        'pre_ln': jnp.stack([params['pre_ln_g'], params['pre_ln_b']], axis=0),
        'layers': [],
    }
    for lp in params['layers']:
        wq = lp['wq'] * scale                     # fold attention scale into Q weights
        bq = lp['bq'] * scale
        fused['layers'].append({
            'ln': jnp.stack([lp['ln1_g'], lp['ln1_b'], lp['ln2_g'], lp['ln2_b']], axis=0),
            'wqkv': jnp.concatenate([wq, lp['wk'], lp['wv']],
                                    axis=1).astype(jnp.bfloat16),
            'bqkv': jnp.concatenate([bq, lp['bk'], lp['bv']]).reshape(1, 3 * D)
                       .astype(jnp.float32),
            'wo': lp['wo'].astype(jnp.bfloat16), 'bo': lp['bo'].reshape(1, D),
            'w1': lp['w1'].astype(jnp.bfloat16), 'b1': lp['b1'].reshape(1, I),
            'w2': lp['w2'].astype(jnp.bfloat16), 'b2': lp['b2'].reshape(1, D),
        })
    return fused


# --------------------------- CLIP vision forward ------------------------------

def clip_vision_tower_forward(images, fused_params, cfg,
                              select_layer=-2, select_feature='patch'):
    """images: (B, C, H, W) float32, NCHW (PyTorch convention)."""
    B, C, Himg, Wimg = images.shape
    P = cfg.patch_size
    Hp, Wp = Himg // P, Wimg // P
    num_patches = Hp * Wp
    D = cfg.hidden
    S = num_patches + 1

    # --- patch extraction (glue): strided conv == unfold + matmul (matmul in Pallas) ---
    patches = (images.reshape(B, C, Hp, P, Wp, P)
                     .transpose(0, 2, 4, 1, 3, 5)               # (B, Hp, Wp, C, P, P)
                     .reshape(B, num_patches, C * P * P))
    # prepend a zero row per image standing in for the CLS token so the embed
    # kernel never has to concatenate along the sublane axis.
    patches_ext = jnp.concatenate(
        [jnp.zeros((B, 1, C * P * P), patches.dtype), patches],
        axis=1).astype(jnp.bfloat16)                            # (B, S, C*P*P)

    # --- fused embedding kernel: patch matmul + cls/pos add + pre-layernorm ---
    h = pallas_embed(patches_ext, fused_params, S, D)           # (B, S, D) f32

    # --- encoder: hidden_states[k] only depends on the first k layers, so run
    #     exactly the layers needed for hidden_states[select_layer] (same output
    #     as HF's output_hidden_states=True + feature_select). ---
    n_hidden = cfg.layers + 1
    sel = select_layer if select_layer >= 0 else n_hidden + select_layer
    for li in range(sel):
        h = fused_encoder_layer(h, fused_params['layers'][li], cfg)

    # --- feature_select ---
    feats = h
    if select_feature == 'patch':
        feats = feats[:, 1:]
    elif select_feature == 'cls_patch':
        pass
    else:
        raise ValueError(f'Unexpected select feature: {select_feature}')
    return feats.astype(images.dtype)


# --------------------------------- main ---------------------------------------

if __name__ == "__main__":
    cfg = Config()
    key = jax.random.PRNGKey(0)
    k_img, k_par = jax.random.split(key)

    # warm the capability / device queries outside of jit tracing
    _ = _single_buffer_supported()
    _ = _vmem_limit_bytes()

    # TODO(synk): pretrained CLIPVisionModel checkpoint / CLIPImageProcessor
    # loading has no Pallas equivalent; weights are synthetic & deterministic.
    params = init_params(k_par, cfg)
    fused_params = prepare_params(params, cfg)   # one-time fusion / bf16 / scale folding

    images = jax.random.normal(
        k_img, (2, cfg.channels, cfg.image_size, cfg.image_size),
        dtype=jnp.float32)

    fwd = jax.jit(functools.partial(clip_vision_tower_forward, cfg=cfg,
                                    select_layer=-2, select_feature='patch'))
    feats = fwd(images, fused_params)
    feats = jax.block_until_ready(feats)

    npatch = (cfg.image_size // cfg.patch_size) ** 2
    assert feats.shape == (2, npatch, cfg.hidden), feats.shape
    assert feats.dtype == images.dtype
    print("KERNEL_OK")
</pallas_src>

<mosaic_0001>
module attributes {stable_mosaic.version = 11 : i64} {
  func.func @k(%arg0: i32, %arg1: memref<8x128xf32, #tpu.memory_space<vmem>>, %arg2: memref<8x128xf32, #tpu.memory_space<vmem>>) attributes {dimension_semantics = [#tpu.dimension_semantics<arbitrary>], iteration_bounds = array<i64: 2>, scalar_prefetch = 0 : i64, scratch_operands = 0 : i64, tpu.core_type = #tpu.core_type<tc>, window_params = [{pipeline_mode = #tpu.pipeline_mode<synchronous>, transform_indices = @transform_0, window_bounds = array<i64: 8, 128>}, {transform_indices = @transform_1, window_bounds = array<i64: 8, 128>}]} {
    %c0 = arith.constant 0 : index
    %c0_0 = arith.constant 0 : index
    %0 = vector.load %arg1[%c0, %c0_0] : memref<8x128xf32, #tpu.memory_space<vmem>>, vector<8x128xf32>
    %cst = arith.constant 1.000000e+00 : f32
    %1 = vector.broadcast %cst : f32 to vector<8x128xf32>
    %2 = arith.addf %0, %1 : vector<8x128xf32>
    %c0_1 = arith.constant 0 : index
    %c0_2 = arith.constant 0 : index
    %3 = vector.load %arg2[%c0_1, %c0_2] : memref<8x128xf32, #tpu.memory_space<vmem>>, vector<8x128xf32>
    tpu.vector_store %arg2[%c0_1, %c0_2], %2 {strides = array<i32>} : memref<8x128xf32, #tpu.memory_space<vmem>>, vector<8x128xf32>,
    return
  }
  func.func @transform_0(%arg0: i32) -> (i32, i32) {
    %c0_i32 = arith.constant 0 : i32
    %c0_i32_0 = arith.constant 0 : i32
    %c0_i32_1 = arith.constant 0 : i32
    return %c0_i32, %c0_i32_0 : i32, i32
  }
  func.func @transform_1(%arg0: i32) -> (i32, i32) {
    %c0_i32 = arith.constant 0 : i32
    %c0_i32_0 = arith.constant 0 : i32
    return %arg0, %c0_i32 : i32, i32
  }
}

module attributes {stable_mosaic.version = 11 : i64} {
  func.func @_embed_kernel(%arg0: i32, %arg1: memref<1x17x192xbf16, #tpu.memory_space<vmem>>, %arg2: memref<192x128xbf16, #tpu.memory_space<vmem>>, %arg3: memref<17x128xf32, #tpu.memory_space<vmem>>, %arg4: memref<2x128xf32, #tpu.memory_space<vmem>>, %arg5: memref<1x17x128xf32, #tpu.memory_space<vmem>>) attributes {dimension_semantics = [#tpu.dimension_semantics<parallel>], iteration_bounds = array<i64: 2>, scalar_prefetch = 0 : i64, scratch_operands = 0 : i64, tpu.core_type = #tpu.core_type<tc>, window_params = [{transform_indices = @transform_0, window_bounds = array<i64: 1, 17, 192>}, {pipeline_mode = #tpu.pipeline_mode<synchronous>, transform_indices = @transform_1, window_bounds = array<i64: 192, 128>}, {pipeline_mode = #tpu.pipeline_mode<synchronous>, transform_indices = @transform_2, window_bounds = array<i64: 17, 128>}, {pipeline_mode = #tpu.pipeline_mode<synchronous>, transform_indices = @transform_3, window_bounds = array<i64: 2, 128>}, {transform_indices = @transform_4, window_bounds = array<i64: 1, 17, 128>}]} {
    %c0 = arith.constant 0 : index
    %c0_0 = arith.constant 0 : index
    %c0_1 = arith.constant 0 : index
    %0 = vector.load %arg1[%c0, %c0_0, %c0_1] : memref<1x17x192xbf16, #tpu.memory_space<vmem>>, vector<1x17x192xbf16>
    %1 = vector.shape_cast %0 : vector<1x17x192xbf16> to vector<17x192xbf16>
    %c0_2 = arith.constant 0 : index
    %c0_3 = arith.constant 0 : index
    %2 = vector.load %arg2[%c0_2, %c0_3] : memref<192x128xbf16, #tpu.memory_space<vmem>>, vector<192x128xbf16>
    %cst = arith.constant dense<0.000000e+00> : vector<17x128xf32>
    %3 = tpu.matmul %1, %2, %cst {dimension_numbers = #tpu.dot_dimension_numbers<[1], [0], [0], [1], [0, 0, 1, 1], [], []>} : vector<17x192xbf16>, vector<192x128xbf16>, vector<17x128xf32> -> vector<17x128xf32>
    %c0_4 = arith.constant 0 : index
    %c0_5 = arith.constant 0 : index
    %4 = vector.load %arg3[%c0_4, %c0_5] : memref<17x128xf32, #tpu.memory_space<vmem>>, vector<17x128xf32>
    %5 = arith.addf %3, %4 : vector<17x128xf32>
    %c0_6 = arith.constant 0 : index
    %c0_7 = arith.constant 0 : index
    %6 = vector.load %arg4[%c0_6, %c0_7] : memref<2x128xf32, #tpu.memory_space<vmem>>, vector<2x128xf32>
    %7 = vector.extract_strided_slice %6 {offsets = [0, 0], sizes = [1, 128], strides = [1, 1]} : vector<2x128xf32> to vector<1x128xf32>
    %8 = vector.extract_strided_slice %6 {offsets = [1, 0], sizes = [1, 128], strides = [1, 1]} : vector<2x128xf32> to vector<1x128xf32>
    %cst_8 = arith.constant dense<0.000000e+00> : vector<17xf32>
    %9 = vector.multi_reduction <add>, %5, %cst_8 [1] : vector<17x128xf32> to vector<17xf32>
    %10 = vector.shape_cast %9 : vector<17xf32> to vector<17x1xf32>
    %cst_9 = arith.constant 1.280000e+02 : f32
    %11 = vector.broadcast %cst_9 : f32 to vector<17x1xf32>
    %12 = arith.divf %10, %11 : vector<17x1xf32>
    %13 = vector.broadcast %12 : vector<17x1xf32> to vector<17x128xf32>
    %14 = arith.subf %5, %13 : vector<17x128xf32>
    %15 = arith.mulf %14, %14 : vector<17x128xf32>
    %cst_10 = arith.constant dense<0.000000e+00> : vector<17xf32>
    %16 = vector.multi_reduction <add>, %15, %cst_10 [1] : vector<17x128xf32> to vector<17xf32>
    %17 = vector.shape_cast %16 : vector<17xf32> to vector<17x1xf32>
    %cst_11 = arith.constant 1.280000e+02 : f32
    %18 = vector.broadcast %cst_11 : f32 to vector<17x1xf32>
    %19 = arith.divf %17, %18 : vector<17x1xf32>
    %20 = vector.broadcast %12 : vector<17x1xf32> to vector<17x128xf32>
    %21 = arith.subf %5, %20 : vector<17x128xf32>
    %cst_12 = arith.constant 9.99999974E-6 : f32
    %22 = vector.broadcast %cst_12 : f32 to vector<17x1xf32>
    %23 = arith.addf %19, %22 : vector<17x1xf32>
    %24 = math.rsqrt %23 : vector<17x1xf32>
    %25 = vector.broadcast %24 : vector<17x1xf32> to vector<17x128xf32>
    %26 = arith.mulf %21, %25 : vector<17x128xf32>
    %27 = vector.broadcast %7 : vector<1x128xf32> to vector<17x128xf32>
    %28 = arith.mulf %26, %27 : vector<17x128xf32>
    %29 = vector.broadcast %8 : vector<1x128xf32> to vector<17x128xf32>
    %30 = arith.addf %28, %29 : vector<17x128xf32>
    %c0_13 = arith.constant 0 : index
    %c0_14 = arith.constant 0 : index
    %c0_15 = arith.constant 0 : index
    %31 = vector.load %arg5[%c0_13, %c0_14, %c0_15] : memref<1x17x128xf32, #tpu.memory_space<vmem>>, vector<1x17x128xf32>
    %32 = vector.shape_cast %31 : vector<1x17x128xf32> to vector<17x128xf32>
    %33 = vector.shape_cast %30 : vector<17x128xf32> to vector<1x17x128xf32>
    tpu.vector_store %arg5[%c0_13, %c0_14, %c0_15], %33 {strides = array<i32>} : memref<1x17x128xf32, #tpu.memory_space<vmem>>, vector<1x17x128xf32>,
    return
  }
  func.func @transform_0(%arg0: i32) -> (i32, i32, i32) {
    %c0_i32 = arith.constant 0 : i32
    %c0_i32_0 = arith.constant 0 : i32
    %c0_i32_1 = arith.constant 0 : i32
    return %arg0, %c0_i32, %c0_i32_0 : i32, i32, i32
  }
  func.func @transform_1(%arg0: i32) -> (i32, i32) {
    %c0_i32 = arith.constant 0 : i32
    %c0_i32_0 = arith.constant 0 : i32
    %c0_i32_1 = arith.constant 0 : i32
    return %c0_i32, %c0_i32_0 : i32, i32
  }
  func.func @transform_2(%arg0: i32) -> (i32, i32) {
    %c0_i32 = arith.constant 0 : i32
    %c0_i32_0 = arith.constant 0 : i32
    %c0_i32_1 = arith.constant 0 : i32
    return %c0_i32, %c0_i32_0 : i32, i32
  }
  func.func @transform_3(%arg0: i32) -> (i32, i32) {
    %c0_i32 = arith.constant 0 : i32
    %c0_i32_0 = arith.constant 0 : i32
    %c0_i32_1 = arith.constant 0 : i32
    return %c0_i32, %c0_i32_0 : i32, i32
  }
  func.func @transform_4(%arg0: i32) -> (i32, i32, i32) {
    %c0_i32 = arith.constant 0 : i32
    %c0_i32_0 = arith.constant 0 : i32
    %c0_i32_1 = arith.constant 0 : i32
    return %arg0, %c0_i32, %c0_i32_0 : i32, i32, i32
  }
}

module attributes {stable_mosaic.version = 11 : i64} {
  func.func @_encoder_layer_kernel(%arg0: i32, %arg1: memref<1x17x128xf32, #tpu.memory_space<vmem>>, %arg2: memref<4x128xf32, #tpu.memory_space<vmem>>, %arg3: memref<128x384xbf16, #tpu.memory_space<vmem>>, %arg4: memref<1x384xf32, #tpu.memory_space<vmem>>, %arg5: memref<128x128xbf16, #tpu.memory_space<vmem>>, %arg6: memref<1x128xf32, #tpu.memory_space<vmem>>, %arg7: memref<128x512xbf16, #tpu.memory_space<vmem>>, %arg8: memref<1x512xf32, #tpu.memory_space<vmem>>, %arg9: memref<512x128xbf16, #tpu.memory_space<vmem>>, %arg10: memref<1x128xf32, #tpu.memory_space<vmem>>, %arg11: memref<1x17x128xf32, #tpu.memory_space<vmem>>, %arg12: memref<4x17x32xbf16, #tpu.memory_space<vmem>>, %arg13: memref<4x17x32xbf16, #tpu.memory_space<vmem>>, %arg14: memref<4x17x32xbf16, #tpu.memory_space<vmem>>, %arg15: memref<4x17x32xf32, #tpu.memory_space<vmem>>) attributes {dimension_semantics = [#tpu.dimension_semantics<parallel>], iteration_bounds = array<i64: 2>, scalar_prefetch = 0 : i64, scratch_operands = 4 : i64, tpu.core_type = #tpu.core_type<tc>, window_params = [{transform_indices = @transform_0, window_bounds = array<i64: 1, 17, 128>}, {pipeline_mode = #tpu.pipeline_mode<synchronous>, transform_indices = @transform_1, window_bounds = array<i64: 4, 128>}, {pipeline_mode = #tpu.pipeline_mode<synchronous>, transform_indices = @transform_2, window_bounds = array<i64: 128, 384>}, {pipeline_mode = #tpu.pipeline_mode<synchronous>, transform_indices = @transform_3, window_bounds = array<i64: 1, 384>}, {pipeline_mode = #tpu.pipeline_mode<synchronous>, transform_indices = @transform_4, window_bounds = array<i64: 128, 128>}, {pipeline_mode = #tpu.pipeline_mode<synchronous>, transform_indices = @transform_5, window_bounds = array<i64: 1, 128>}, {pipeline_mode = #tpu.pipeline_mode<synchronous>, transform_indices = @transform_6, window_bounds = array<i64: 128, 512>}, {pipeline_mode = #tpu.pipeline_mode<synchronous>, transform_indices = @transform_7, window_bounds = array<i64: 1, 512>}, {pipeline_mode = #tpu.pipeline_mode<synchronous>, transform_indices = @transform_8, window_bounds = array<i64: 512, 128>}, {pipeline_mode = #tpu.pipeline_mode<synchronous>, transform_indices = @transform_9, window_bounds = array<i64: 1, 128>}, {transform_indices = @transform_10, window_bounds = array<i64: 1, 17, 128>}]} {
    %c0 = arith.constant 0 : index
    %c0_0 = arith.constant 0 : index
    %c0_1 = arith.constant 0 : index
    %0 = vector.load %arg1[%c0, %c0_0, %c0_1] : memref<1x17x128xf32, #tpu.memory_space<vmem>>, vector<1x17x128xf32>
    %1 = vector.shape_cast %0 : vector<1x17x128xf32> to vector<17x128xf32>
    %c0_2 = arith.constant 0 : index
    %c0_3 = arith.constant 0 : index
    %2 = vector.load %arg2[%c0_2, %c0_3] : memref<4x128xf32, #tpu.memory_space<vmem>>, vector<4x128xf32>
    %3 = vector.extract_strided_slice %2 {offsets = [0, 0], sizes = [1, 128], strides = [1, 1]} : vector<4x128xf32> to vector<1x128xf32>
    %4 = vector.extract_strided_slice %2 {offsets = [1, 0], sizes = [1, 128], strides = [1, 1]} : vector<4x128xf32> to vector<1x128xf32>
    %cst = arith.constant dense<0.000000e+00> : vector<17xf32>
    %5 = vector.multi_reduction <add>, %1, %cst [1] : vector<17x128xf32> to vector<17xf32>
    %6 = vector.shape_cast %5 : vector<17xf32> to vector<17x1xf32>
    %cst_4 = arith.constant 1.280000e+02 : f32
    %7 = vector.broadcast %cst_4 : f32 to vector<17x1xf32>
    %8 = arith.divf %6, %7 : vector<17x1xf32>
    %9 = vector.broadcast %8 : vector<17x1xf32> to vector<17x128xf32>
    %10 = arith.subf %1, %9 : vector<17x128xf32>
    %11 = arith.mulf %10, %10 : vector<17x128xf32>
    %cst_5 = arith.constant dense<0.000000e+00> : vector<17xf32>
    %12 = vector.multi_reduction <add>, %11, %cst_5 [1] : vector<17x128xf32> to vector<17xf32>
    %13 = vector.shape_cast %12 : vector<17xf32> to vector<17x1xf32>
    %cst_6 = arith.constant 1.280000e+02 : f32
    %14 = vector.broadcast %cst_6 : f32 to vector<17x1xf32>
    %15 = arith.divf %13, %14 : vector<17x1xf32>
    %16 = vector.broadcast %8 : vector<17x1xf32> to vector<17x128xf32>
    %17 = arith.subf %1, %16 : vector<17x128xf32>
    %cst_7 = arith.constant 9.99999974E-6 : f32
    %18 = vector.broadcast %cst_7 : f32 to vector<17x1xf32>
    %19 = arith.addf %15, %18 : vector<17x1xf32>
    %20 = math.rsqrt %19 : vector<17x1xf32>
    %21 = vector.broadcast %20 : vector<17x1xf32> to vector<17x128xf32>
    %22 = arith.mulf %17, %21 : vector<17x128xf32>
    %23 = vector.broadcast %3 : vector<1x128xf32> to vector<17x128xf32>
    %24 = arith.mulf %22, %23 : vector<17x128xf32>
    %25 = vector.broadcast %4 : vector<1x128xf32> to vector<17x128xf32>
    %26 = arith.addf %24, %25 : vector<17x128xf32>
    %27 = arith.truncf %26 : vector<17x128xf32> to vector<17x128xbf16>
    %c0_8 = arith.constant 0 : index
    %c0_9 = arith.constant 0 : index
    %28 = vector.load %arg3[%c0_8, %c0_9] : memref<128x384xbf16, #tpu.memory_space<vmem>>, vector<128x384xbf16>
    %cst_10 = arith.constant dense<0.000000e+00> : vector<17x384xf32>
    %29 = tpu.matmul %27, %28, %cst_10 {dimension_numbers = #tpu.dot_dimension_numbers<[1], [0], [0], [1], [0, 0, 1, 1], [], []>} : vector<17x128xbf16>, vector<128x384xbf16>, vector<17x384xf32> -> vector<17x384xf32>
    %c0_11 = arith.constant 0 : index
    %c0_12 = arith.constant 0 : index
    %30 = vector.load %arg4[%c0_11, %c0_12] : memref<1x384xf32, #tpu.memory_space<vmem>>, vector<1x384xf32>
    %31 = vector.broadcast %30 : vector<1x384xf32> to vector<17x384xf32>
    %32 = arith.addf %29, %31 : vector<17x384xf32>
    %33 = vector.extract_strided_slice %32 {offsets = [0, 0], sizes = [17, 32], strides = [1, 1]} : vector<17x384xf32> to vector<17x32xf32>
    %34 = arith.truncf %33 : vector<17x32xf32> to vector<17x32xbf16>
    %c0_13 = arith.constant 0 : index
    %c0_14 = arith.constant 0 : index
    %c0_15 = arith.constant 0 : index
    %35 = vector.load %arg12[%c0_13, %c0_14, %c0_15] : memref<4x17x32xbf16, #tpu.memory_space<vmem>>, vector<1x17x32xbf16>
    %36 = vector.shape_cast %35 : vector<1x17x32xbf16> to vector<17x32xbf16>
    %37 = vector.shape_cast %34 : vector<17x32xbf16> to vector<1x17x32xbf16>
    tpu.vector_store %arg12[%c0_13, %c0_14, %c0_15], %37 {strides = array<i32>} : memref<4x17x32xbf16, #tpu.memory_space<vmem>>, vector<1x17x32xbf16>,
    %38 = vector.extract_strided_slice %32 {offsets = [0, 128], sizes = [17, 32], strides = [1, 1]} : vector<17x384xf32> to vector<17x32xf32>
    %39 = arith.truncf %38 : vector<17x32xf32> to vector<17x32xbf16>
    %c0_16 = arith.constant 0 : index
    %c0_17 = arith.constant 0 : index
    %c0_18 = arith.constant 0 : index
    %40 = vector.load %arg13[%c0_16, %c0_17, %c0_18] : memref<4x17x32xbf16, #tpu.memory_space<vmem>>, vector<1x17x32xbf16>
    %41 = vector.shape_cast %40 : vector<1x17x32xbf16> to vector<17x32xbf16>
    %42 = vector.shape_cast %39 : vector<17x32xbf16> to vector<1x17x32xbf16>
    tpu.vector_store %arg13[%c0_16, %c0_17, %c0_18], %42 {strides = array<i32>} : memref<4x17x32xbf16, #tpu.memory_space<vmem>>, vector<1x17x32xbf16>,
    %43 = vector.extract_strided_slice %32 {offsets = [0, 256], sizes = [17, 32], strides = [1, 1]} : vector<17x384xf32> to vector<17x32xf32>
    %44 = arith.truncf %43 : vector<17x32xf32> to vector<17x32xbf16>
    %c0_19 = arith.constant 0 : index
    %c0_20 = arith.constant 0 : index
    %c0_21 = arith.constant 0 : index
    %45 = vector.load %arg14[%c0_19, %c0_20, %c0_21] : memref<4x17x32xbf16, #tpu.memory_space<vmem>>, vector<1x17x32xbf16>
    %46 = vector.shape_cast %45 : vector<1x17x32xbf16> to vector<17x32xbf16>
    %47 = vector.shape_cast %44 : vector<17x32xbf16> to vector<1x17x32xbf16>
    tpu.vector_store %arg14[%c0_19, %c0_20, %c0_21], %47 {strides = array<i32>} : memref<4x17x32xbf16, #tpu.memory_space<vmem>>, vector<1x17x32xbf16>,
    %48 = vector.extract_strided_slice %32 {offsets = [0, 32], sizes = [17, 32], strides = [1, 1]} : vector<17x384xf32> to vector<17x32xf32>
    %49 = arith.truncf %48 : vector<17x32xf32> to vector<17x32xbf16>
    %c1 = arith.constant 1 : index
    %c0_22 = arith.constant 0 : index
    %c0_23 = arith.constant 0 : index
    %50 = vector.load %arg12[%c1, %c0_22, %c0_23] : memref<4x17x32xbf16, #tpu.memory_space<vmem>>, vector<1x17x32xbf16>
    %51 = vector.shape_cast %50 : vector<1x17x32xbf16> to vector<17x32xbf16>
    %52 = vector.shape_cast %49 : vector<17x32xbf16> to vector<1x17x32xbf16>
    tpu.vector_store %arg12[%c1, %c0_22, %c0_23], %52 {strides = array<i32>} : memref<4x17x32xbf16, #tpu.memory_space<vmem>>, vector<1x17x32xbf16>,
    %53 = vector.extract_strided_slice %32 {offsets = [0, 160], sizes = [17, 32], strides = [1, 1]} : vector<17x384xf32> to vector<17x32xf32>
    %54 = arith.truncf %53 : vector<17x32xf32> to vector<17x32xbf16>
    %c1_24 = arith.constant 1 : index
    %c0_25 = arith.constant 0 : index
    %c0_26 = arith.constant 0 : index
    %55 = vector.load %arg13[%c1_24, %c0_25, %c0_26] : memref<4x17x32xbf16, #tpu.memory_space<vmem>>, vector<1x17x32xbf16>
    %56 = vector.shape_cast %55 : vector<1x17x32xbf16> to vector<17x32xbf16>
    %57 = vector.shape_cast %54 : vector<17x32xbf16> to vector<1x17x32xbf16>
    tpu.vector_store %arg13[%c1_24, %c0_25, %c0_26], %57 {strides = array<i32>} : memref<4x17x32xbf16, #tpu.memory_space<vmem>>, vector<1x17x32xbf16>,
    %58 = vector.extract_strided_slice %32 {offsets = [0, 288], sizes = [17, 32], strides = [1, 1]} : vector<17x384xf32> to vector<17x32xf32>
    %59 = arith.truncf %58 : vector<17x32xf32> to vector<17x32xbf16>
    %c1_27 = arith.constant 1 : index
    %c0_28 = arith.constant 0 : index
    %c0_29 = arith.constant 0 : index
    %60 = vector.load %arg14[%c1_27, %c0_28, %c0_29] : memref<4x17x32xbf16, #tpu.memory_space<vmem>>, vector<1x17x32xbf16>
    %61 = vector.shape_cast %60 : vector<1x17x32xbf16> to vector<17x32xbf16>
    %62 = vector.shape_cast %59 : vector<17x32xbf16> to vector<1x17x32xbf16>
    tpu.vector_store %arg14[%c1_27, %c0_28, %c0_29], %62 {strides = array<i32>} : memref<4x17x32xbf16, #tpu.memory_space<vmem>>, vector<1x17x32xbf16>,
    %63 = vector.extract_strided_slice %32 {offsets = [0, 64], sizes = [17, 32], strides = [1, 1]} : vector<17x384xf32> to vector<17x32xf32>
    %64 = arith.truncf %63 : vector<17x32xf32> to vector<17x32xbf16>
    %c2 = arith.constant 2 : index
    %c0_30 = arith.constant 0 : index
    %c0_31 = arith.constant 0 : index
    %65 = vector.load %arg12[%c2, %c0_30, %c0_31] : memref<4x17x32xbf16, #tpu.memory_space<vmem>>, vector<1x17x32xbf16>
    %66 = vector.shape_cast %65 : vector<1x17x32xbf16> to vector<17x32xbf16>
    %67 = vector.shape_cast %64 : vector<17x32xbf16> to vector<1x17x32xbf16>
    tpu.vector_store %arg12[%c2, %c0_30, %c0_31], %67 {strides = array<i32>} : memref<4x17x32xbf16, #tpu.memory_space<vmem>>, vector<1x17x32xbf16>,
    %68 = vector.extract_strided_slice %32 {offsets = [0, 192], sizes = [17, 32], strides = [1, 1]} : vector<17x384xf32> to vector<17x32xf32>
    %69 = arith.truncf %68 : vector<17x32xf32> to vector<17x32xbf16>
    %c2_32 = arith.constant 2 : index
    %c0_33 = arith.constant 0 : index
    %c0_34 = arith.constant 0 : index
    %70 = vector.load %arg13[%c2_32, %c0_33, %c0_34] : memref<4x17x32xbf16, #tpu.memory_space<vmem>>, vector<1x17x32xbf16>
    %71 = vector.shape_cast %70 : vector<1x17x32xbf16> to vector<17x32xbf16>
    %72 = vector.shape_cast %69 : vector<17x32xbf16> to vector<1x17x32xbf16>
    tpu.vector_store %arg13[%c2_32, %c0_33, %c0_34], %72 {strides = array<i32>} : memref<4x17x32xbf16, #tpu.memory_space<vmem>>, vector<1x17x32xbf16>,
    %73 = vector.extract_strided_slice %32 {offsets = [0, 320], sizes = [17, 32], strides = [1, 1]} : vector<17x384xf32> to vector<17x32xf32>
    %74 = arith.truncf %73 : vector<17x32xf32> to vector<17x32xbf16>
    %c2_35 = arith.constant 2 : index
    %c0_36 = arith.constant 0 : index
    %c0_37 = arith.constant 0 : index
    %75 = vector.load %arg14[%c2_35, %c0_36, %c0_37] : memref<4x17x32xbf16, #tpu.memory_space<vmem>>, vector<1x17x32xbf16>
    %76 = vector.shape_cast %75 : vector<1x17x32xbf16> to vector<17x32xbf16>
    %77 = vector.shape_cast %74 : vector<17x32xbf16> to vector<1x17x32xbf16>
    tpu.vector_store %arg14[%c2_35, %c0_36, %c0_37], %77 {strides = array<i32>} : memref<4x17x32xbf16, #tpu.memory_space<vmem>>, vector<1x17x32xbf16>,
    %78 = vector.extract_strided_slice %32 {offsets = [0, 96], sizes = [17, 32], strides = [1, 1]} : vector<17x384xf32> to vector<17x32xf32>
    %79 = arith.truncf %78 : vector<17x32xf32> to vector<17x32xbf16>
    %c3 = arith.constant 3 : index
    %c0_38 = arith.constant 0 : index
    %c0_39 = arith.constant 0 : index
    %80 = vector.load %arg12[%c3, %c0_38, %c0_39] : memref<4x17x32xbf16, #tpu.memory_space<vmem>>, vector<1x17x32xbf16>
    %81 = vector.shape_cast %80 : vector<1x17x32xbf16> to vector<17x32xbf16>
    %82 = vector.shape_cast %79 : vector<17x32xbf16> to vector<1x17x32xbf16>
    tpu.vector_store %arg12[%c3, %c0_38, %c0_39], %82 {strides = array<i32>} : memref<4x17x32xbf16, #tpu.memory_space<vmem>>, vector<1x17x32xbf16>,
    %83 = vector.extract_strided_slice %32 {offsets = [0, 224], sizes = [17, 32], strides = [1, 1]} : vector<17x384xf32> to vector<17x32xf32>
    %84 = arith.truncf %83 : vector<17x32xf32> to vector<17x32xbf16>
    %c3_40 = arith.constant 3 : index
    %c0_41 = arith.constant 0 : index
    %c0_42 = arith.constant 0 : index
    %85 = vector.load %arg13[%c3_40, %c0_41, %c0_42] : memref<4x17x32xbf16, #tpu.memory_space<vmem>>, vector<1x17x32xbf16>
    %86 = vector.shape_cast %85 : vector<1x17x32xbf16> to vector<17x32xbf16>
    %87 = vector.shape_cast %84 : vector<17x32xbf16> to vector<1x17x32xbf16>
    tpu.vector_store %arg13[%c3_40, %c0_41, %c0_42], %87 {strides = array<i32>} : memref<4x17x32xbf16, #tpu.memory_space<vmem>>, vector<1x17x32xbf16>,
    %88 = vector.extract_strided_slice %32 {offsets = [0, 352], sizes = [17, 32], strides = [1, 1]} : vector<17x384xf32> to vector<17x32xf32>
    %89 = arith.truncf %88 : vector<17x32xf32> to vector<17x32xbf16>
    %c3_43 = arith.constant 3 : index
    %c0_44 = arith.constant 0 : index
    %c0_45 = arith.constant 0 : index
    %90 = vector.load %arg14[%c3_43, %c0_44, %c0_45] : memref<4x17x32xbf16, #tpu.memory_space<vmem>>, vector<1x17x32xbf16>
    %91 = vector.shape_cast %90 : vector<1x17x32xbf16> to vector<17x32xbf16>
    %92 = vector.shape_cast %89 : vector<17x32xbf16> to vector<1x17x32xbf16>
    tpu.vector_store %arg14[%c3_43, %c0_44, %c0_45], %92 {strides = array<i32>} : memref<4x17x32xbf16, #tpu.memory_space<vmem>>, vector<1x17x32xbf16>,
    %c0_i32 = arith.constant 0 : i32
    %c4_i32 = arith.constant 4 : i32
    %93 = arith.addi %c0_i32, %c4_i32 : i32
    %c1_i32 = arith.constant 1 : i32
    scf.for %arg16 = %c0_i32 to %93 step %c1_i32  : i32 {
      %158 = arith.index_cast %arg16 : i32 to index
      %c0_84 = arith.constant 0 : index
      %c0_85 = arith.constant 0 : index
      %159 = vector.load %arg12[%158, %c0_84, %c0_85] : memref<4x17x32xbf16, #tpu.memory_space<vmem>>, vector<1x17x32xbf16>
      %160 = vector.shape_cast %159 : vector<1x17x32xbf16> to vector<17x32xbf16>
      %161 = arith.index_cast %arg16 : i32 to index
      %c0_86 = arith.constant 0 : index
      %c0_87 = arith.constant 0 : index
      %162 = vector.load %arg13[%161, %c0_86, %c0_87] : memref<4x17x32xbf16, #tpu.memory_space<vmem>>, vector<1x17x32xbf16>
      %163 = vector.shape_cast %162 : vector<1x17x32xbf16> to vector<17x32xbf16>
      %164 = arith.index_cast %arg16 : i32 to index
      %c0_88 = arith.constant 0 : index
      %c0_89 = arith.constant 0 : index
      %165 = vector.load %arg14[%164, %c0_88, %c0_89] : memref<4x17x32xbf16, #tpu.memory_space<vmem>>, vector<1x17x32xbf16>
      %166 = vector.shape_cast %165 : vector<1x17x32xbf16> to vector<17x32xbf16>
      %cst_90 = arith.constant dense<0.000000e+00> : vector<17x17xf32>
      %167 = tpu.matmul %160, %163, %cst_90 {dimension_numbers = #tpu.dot_dimension_numbers<[1], [1], [0], [0], [0, 0, 1, 0], [], []>} : vector<17x32xbf16>, vector<17x32xbf16>, vector<17x17xf32> -> vector<17x17xf32>
      %cst_91 = arith.constant dense<0xFF800000> : vector<17xf32>
      %168 = vector.multi_reduction <maximumf>, %167, %cst_91 [1] : vector<17x17xf32> to vector<17xf32>
      %169 = vector.shape_cast %168 : vector<17xf32> to vector<17x1xf32>
      %170 = vector.broadcast %169 : vector<17x1xf32> to vector<17x17xf32>
      %171 = arith.subf %167, %170 : vector<17x17xf32>
      %172 = math.exp %171 : vector<17x17xf32>
      %cst_92 = arith.constant dense<0.000000e+00> : vector<17xf32>
      %173 = vector.multi_reduction <add>, %172, %cst_92 [1] : vector<17x17xf32> to vector<17xf32>
      %174 = vector.shape_cast %173 : vector<17xf32> to vector<17x1xf32>
      %175 = tpu.reciprocal %174 {approx = true} : vector<17x1xf32> -> vector<17x1xf32>
      %176 = vector.broadcast %175 : vector<17x1xf32> to vector<17x17xf32>
      %177 = arith.mulf %172, %176 : vector<17x17xf32>
      %178 = arith.truncf %177 : vector<17x17xf32> to vector<17x17xbf16>
      %cst_93 = arith.constant dense<0.000000e+00> : vector<17x32xf32>
      %179 = tpu.matmul %178, %166, %cst_93 {dimension_numbers = #tpu.dot_dimension_numbers<[1], [0], [0], [1], [0, 0, 1, 1], [], []>} : vector<17x17xbf16>, vector<17x32xbf16>, vector<17x32xf32> -> vector<17x32xf32>
      %180 = arith.index_cast %arg16 : i32 to index
      %c0_94 = arith.constant 0 : index
      %c0_95 = arith.constant 0 : index
      %181 = vector.load %arg15[%180, %c0_94, %c0_95] : memref<4x17x32xf32, #tpu.memory_space<vmem>>, vector<1x17x32xf32>
      %182 = vector.shape_cast %181 : vector<1x17x32xf32> to vector<17x32xf32>
      %183 = vector.shape_cast %179 : vector<17x32xf32> to vector<1x17x32xf32>
      tpu.vector_store %arg15[%180, %c0_94, %c0_95], %183 {strides = array<i32>} : memref<4x17x32xf32, #tpu.memory_space<vmem>>, vector<1x17x32xf32>,
    }
    %c4_i32_46 = arith.constant 4 : i32
    %c0_47 = arith.constant 0 : index
    %c0_48 = arith.constant 0 : index
    %c0_49 = arith.constant 0 : index
    %94 = vector.load %arg15[%c0_47, %c0_48, %c0_49] : memref<4x17x32xf32, #tpu.memory_space<vmem>>, vector<1x17x32xf32>
    %95 = vector.shape_cast %94 : vector<1x17x32xf32> to vector<17x32xf32>
    %c1_50 = arith.constant 1 : index
    %c0_51 = arith.constant 0 : index
    %c0_52 = arith.constant 0 : index
    %96 = vector.load %arg15[%c1_50, %c0_51, %c0_52] : memref<4x17x32xf32, #tpu.memory_space<vmem>>, vector<1x17x32xf32>
    %97 = vector.shape_cast %96 : vector<1x17x32xf32> to vector<17x32xf32>
    %c2_53 = arith.constant 2 : index
    %c0_54 = arith.constant 0 : index
    %c0_55 = arith.constant 0 : index
    %98 = vector.load %arg15[%c2_53, %c0_54, %c0_55] : memref<4x17x32xf32, #tpu.memory_space<vmem>>, vector<1x17x32xf32>
    %99 = vector.shape_cast %98 : vector<1x17x32xf32> to vector<17x32xf32>
    %c3_56 = arith.constant 3 : index
    %c0_57 = arith.constant 0 : index
    %c0_58 = arith.constant 0 : index
    %100 = vector.load %arg15[%c3_56, %c0_57, %c0_58] : memref<4x17x32xf32, #tpu.memory_space<vmem>>, vector<1x17x32xf32>
    %101 = vector.shape_cast %100 : vector<1x17x32xf32> to vector<17x32xf32>
    %102 = tpu.concatenate %95, %97, %99, %101 in 1 : vector<17x32xf32>, vector<17x32xf32>, vector<17x32xf32>, vector<17x32xf32> -> vector<17x128xf32>
    %103 = arith.truncf %102 : vector<17x128xf32> to vector<17x128xbf16>
    %c0_59 = arith.constant 0 : index
    %c0_60 = arith.constant 0 : index
    %104 = vector.load %arg5[%c0_59, %c0_60] : memref<128x128xbf16, #tpu.memory_space<vmem>>, vector<128x128xbf16>
    %cst_61 = arith.constant dense<0.000000e+00> : vector<17x128xf32>
    %105 = tpu.matmul %103, %104, %cst_61 {dimension_numbers = #tpu.dot_dimension_numbers<[1], [0], [0], [1], [0, 0, 1, 1], [], []>} : vector<17x128xbf16>, vector<128x128xbf16>, vector<17x128xf32> -> vector<17x128xf32>
    %c0_62 = arith.constant 0 : index
    %c0_63 = arith.constant 0 : index
    %106 = vector.load %arg6[%c0_62, %c0_63] : memref<1x128xf32, #tpu.memory_space<vmem>>, vector<1x128xf32>
    %107 = vector.broadcast %106 : vector<1x128xf32> to vector<17x128xf32>
    %108 = arith.addf %105, %107 : vector<17x128xf32>
    %109 = arith.addf %108, %1 : vector<17x128xf32>
    %110 = vector.extract_strided_slice %2 {offsets = [2, 0], sizes = [1, 128], strides = [1, 1]} : vector<4x128xf32> to vector<1x128xf32>
    %111 = vector.extract_strided_slice %2 {offsets = [3, 0], sizes = [1, 128], strides = [1, 1]} : vector<4x128xf32> to vector<1x128xf32>
    %cst_64 = arith.constant dense<0.000000e+00> : vector<17xf32>
    %112 = vector.multi_reduction <add>, %109, %cst_64 [1] : vector<17x128xf32> to vector<17xf32>
    %113 = vector.shape_cast %112 : vector<17xf32> to vector<17x1xf32>
    %cst_65 = arith.constant 1.280000e+02 : f32
    %114 = vector.broadcast %cst_65 : f32 to vector<17x1xf32>
    %115 = arith.divf %113, %114 : vector<17x1xf32>
    %116 = vector.broadcast %115 : vector<17x1xf32> to vector<17x128xf32>
    %117 = arith.subf %109, %116 : vector<17x128xf32>
    %118 = arith.mulf %117, %117 : vector<17x128xf32>
    %cst_66 = arith.constant dense<0.000000e+00> : vector<17xf32>
    %119 = vector.multi_reduction <add>, %118, %cst_66 [1] : vector<17x128xf32> to vector<17xf32>
    %120 = vector.shape_cast %119 : vector<17xf32> to vector<17x1xf32>
    %cst_67 = arith.constant 1.280000e+02 : f32
    %121 = vector.broadcast %cst_67 : f32 to vector<17x1xf32>
    %122 = arith.divf %120, %121 : vector<17x1xf32>
    %123 = vector.broadcast %115 : vector<17x1xf32> to vector<17x128xf32>
    %124 = arith.subf %109, %123 : vector<17x128xf32>
    %cst_68 = arith.constant 9.99999974E-6 : f32
    %125 = vector.broadcast %cst_68 : f32 to vector<17x1xf32>
    %126 = arith.addf %122, %125 : vector<17x1xf32>
    %127 = math.rsqrt %126 : vector<17x1xf32>
    %128 = vector.broadcast %127 : vector<17x1xf32> to vector<17x128xf32>
    %129 = arith.mulf %124, %128 : vector<17x128xf32>
    %130 = vector.broadcast %110 : vector<1x128xf32> to vector<17x128xf32>
    %131 = arith.mulf %129, %130 : vector<17x128xf32>
    %132 = vector.broadcast %111 : vector<1x128xf32> to vector<17x128xf32>
    %133 = arith.addf %131, %132 : vector<17x128xf32>
    %134 = arith.truncf %133 : vector<17x128xf32> to vector<17x128xbf16>
    %c0_69 = arith.constant 0 : index
    %c0_70 = arith.constant 0 : index
    %135 = vector.load %arg7[%c0_69, %c0_70] : memref<128x512xbf16, #tpu.memory_space<vmem>>, vector<128x512xbf16>
    %cst_71 = arith.constant dense<0.000000e+00> : vector<17x512xf32>
    %136 = tpu.matmul %134, %135, %cst_71 {dimension_numbers = #tpu.dot_dimension_numbers<[1], [0], [0], [1], [0, 0, 1, 1], [], []>} : vector<17x128xbf16>, vector<128x512xbf16>, vector<17x512xf32> -> vector<17x512xf32>
    %c0_72 = arith.constant 0 : index
    %c0_73 = arith.constant 0 : index
    %137 = vector.load %arg8[%c0_72, %c0_73] : memref<1x512xf32, #tpu.memory_space<vmem>>, vector<1x512xf32>
    %138 = vector.broadcast %137 : vector<1x512xf32> to vector<17x512xf32>
    %139 = arith.addf %136, %138 : vector<17x512xf32>
    %cst_74 = arith.constant 1.702000e+00 : f32
    %140 = vector.broadcast %cst_74 : f32 to vector<17x512xf32>
    %141 = arith.mulf %140, %139 : vector<17x512xf32>
    %142 = arith.negf %141 : vector<17x512xf32>
    %143 = math.exp %142 : vector<17x512xf32>
    %cst_75 = arith.constant 1.000000e+00 : f32
    %144 = vector.broadcast %cst_75 : f32 to vector<17x512xf32>
    %145 = arith.addf %144, %143 : vector<17x512xf32>
    %146 = arith.divf %144, %145 : vector<17x512xf32>
    %147 = arith.mulf %139, %146 : vector<17x512xf32>
    %148 = arith.truncf %147 : vector<17x512xf32> to vector<17x512xbf16>
    %c0_76 = arith.constant 0 : index
    %c0_77 = arith.constant 0 : index
    %149 = vector.load %arg9[%c0_76, %c0_77] : memref<512x128xbf16, #tpu.memory_space<vmem>>, vector<512x128xbf16>
    %cst_78 = arith.constant dense<0.000000e+00> : vector<17x128xf32>
    %150 = tpu.matmul %148, %149, %cst_78 {dimension_numbers = #tpu.dot_dimension_numbers<[1], [0], [0], [1], [0, 0, 1, 1], [], []>} : vector<17x512xbf16>, vector<512x128xbf16>, vector<17x128xf32> -> vector<17x128xf32>
    %c0_79 = arith.constant 0 : index
    %c0_80 = arith.constant 0 : index
    %151 = vector.load %arg10[%c0_79, %c0_80] : memref<1x128xf32, #tpu.memory_space<vmem>>, vector<1x128xf32>
    %152 = vector.broadcast %151 : vector<1x128xf32> to vector<17x128xf32>
    %153 = arith.addf %150, %152 : vector<17x128xf32>
    %154 = arith.addf %153, %109 : vector<17x128xf32>
    %c0_81 = arith.constant 0 : index
    %c0_82 = arith.constant 0 : index
    %c0_83 = arith.constant 0 : index
    %155 = vector.load %arg11[%c0_81, %c0_82, %c0_83] : memref<1x17x128xf32, #tpu.memory_space<vmem>>, vector<1x17x128xf32>
    %156 = vector.shape_cast %155 : vector<1x17x128xf32> to vector<17x128xf32>
    %157 = vector.shape_cast %154 : vector<17x128xf32> to vector<1x17x128xf32>
    tpu.vector_store %arg11[%c0_81, %c0_82, %c0_83], %157 {strides = array<i32>} : memref<1x17x128xf32, #tpu.memory_space<vmem>>, vector<1x17x128xf32>,
    return
  }
  func.func @transform_0(%arg0: i32) -> (i32, i32, i32) {
    %c0_i32 = arith.constant 0 : i32
    %c0_i32_0 = arith.constant 0 : i32
    %c0_i32_1 = arith.constant 0 : i32
    return %arg0, %c0_i32, %c0_i32_0 : i32, i32, i32
  }
  func.func @transform_1(%arg0: i32) -> (i32, i32) {
    %c0_i32 = arith.constant 0 : i32
    %c0_i32_0 = arith.constant 0 : i32
    %c0_i32_1 = arith.constant 0 : i32
    return %c0_i32, %c0_i32_0 : i32, i32
  }
  func.func @transform_2(%arg0: i32) -> (i32, i32) {
    %c0_i32 = arith.constant 0 : i32
    %c0_i32_0 = arith.constant 0 : i32
    %c0_i32_1 = arith.constant 0 : i32
    return %c0_i32, %c0_i32_0 : i32, i32
  }
  func.func @transform_3(%arg0: i32) -> (i32, i32) {
    %c0_i32 = arith.constant 0 : i32
    %c0_i32_0 = arith.constant 0 : i32
    %c0_i32_1 = arith.constant 0 : i32
    return %c0_i32, %c0_i32_0 : i32, i32
  }
  func.func @transform_4(%arg0: i32) -> (i32, i32) {
    %c0_i32 = arith.constant 0 : i32
    %c0_i32_0 = arith.constant 0 : i32
    %c0_i32_1 = arith.constant 0 : i32
    return %c0_i32, %c0_i32_0 : i32, i32
  }
  func.func @transform_5(%arg0: i32) -> (i32, i32) {
    %c0_i32 = arith.constant 0 : i32
    %c0_i32_0 = arith.constant 0 : i32
    %c0_i32_1 = arith.constant 0 : i32
    return %c0_i32, %c0_i32_0 : i32, i32
  }
  func.func @transform_6(%arg0: i32) -> (i32, i32) {
    %c0_i32 = arith.constant 0 : i32
    %c0_i32_0 = arith.constant 0 : i32
    %c0_i32_1 = arith.constant 0 : i32
    return %c0_i32, %c0_i32_0 : i32, i32
  }
  func.func @transform_7(%arg0: i32) -> (i32, i32) {
    %c0_i32 = arith.constant 0 : i32
    %c0_i32_0 = arith.constant 0 : i32
    %c0_i32_1 = arith.constant 0 : i32
    return %c0_i32, %c0_i32_0 : i32, i32
  }
  func.func @transform_8(%arg0: i32) -> (i32, i32) {
    %c0_i32 = arith.constant 0 : i32
    %c0_i32_0 = arith.constant 0 : i32
    %c0_i32_1 = arith.constant 0 : i32
    return %c0_i32, %c0_i32_0 : i32, i32
  }
  func.func @transform_9(%arg0: i32) -> (i32, i32) {
    %c0_i32 = arith.constant 0 : i32
    %c0_i32_0 = arith.constant 0 : i32
    %c0_i32_1 = arith.constant 0 : i32
    return %c0_i32, %c0_i32_0 : i32, i32
  }
  func.func @transform_10(%arg0: i32) -> (i32, i32, i32) {
    %c0_i32 = arith.constant 0 : i32
    %c0_i32_0 = arith.constant 0 : i32
    %c0_i32_1 = arith.constant 0 : i32
    return %arg0, %c0_i32, %c0_i32_0 : i32, i32, i32
  }
}

</mosaic_0001>

<llo_original>
// kernel: tpu_custom_call.1
$region0: #{tpu_custom_call.1}
  #allocation0 [shape = 'u32[]', space=smem, size = 0x4, offset = 0x4, fixed_abs, tag = 'smem constant byte address 0x4 - core index']
  #allocation1 [shape = 'u32[144,128]{1,0:T(1,128)}', space=vmem, size = 0x12000, scoped, tag = 'internal scratch']
  %s0 = inlined_call_operand.hbm [shape: f32[8,128], index: 0, kind: input, shape index: {}]
  %s1 = inlined_call_operand.hbm [shape: f32[16,128], index: 1, kind: output, shape index: {}]
  %s2 = sld [smem:[#allocation0]]
  $region41: #{tpu_custom_call.1} parent=0
    _
  %s4 = ssub.s32 1, %s2
  %s5 = scalar_select 0, %s4, %s2
  $region1: #{tpu_custom_call.1} parent=0
    #allocation2 [shape = 'u8[4096]{0}', space=vmem, size = 0x1000, scoped, tag = 'input window, operand 0, single buffered']
    #allocation3 [shape = 's32[2]{0}', space=sflag, size = 0x8, scoped, tag = 'scoped memory for tpu_custom_call.1']
    #allocation4 [shape = 's32[2]{0}', space=sflag, size = 0x8, scoped, tag = 'scoped memory for tpu_custom_call.1']
    #allocation5 [shape = 'u8[8192]{0}', space=vmem, size = 0x2000, scoped, tag = 'output window, operand 0']
    %6 = vsyncpa [#allocation3], 0
    %7 = vsyncpa [#allocation4], 0
    %s8 = scalar_lea.sflag [#allocation4], 1
    %9 = vsyncpa %s8, 0
    loop: start=0, step=1, limit=4
    $region2: #{tpu_custom_call.1} parent=1 // loop_pre_header
      _
    $region3: #{tpu_custom_call.1} parent=1 // loop_header
      %s11 = sphi 0, %s15
      %p12 = scmp.ge.s32.totalorder %s11, 4
      %s19 = sphi 0, %s19
      %s21 = sphi 0, %s19
      %s22 = sphi 0, %s21
      %s36 = sphi 0, %s22
      %s42 = sphi 0, %s44
      %s45 = sphi 0, %s42
      %s46 = sphi 0, %s45
      %s62 = sphi 0, %s46
    $region4: #{tpu_custom_call.1} parent=1 // loop_header_branch
      %14 = sbr.rel (%p12) target = $region8
    $region5: #{tpu_custom_call.1} parent=1 // loop_body
      %s16 = ssub.s32 %s11, 1
      %s17 = ssub.s32 %s11, 2
      %s18 = sadd.s32 %s11, 1
      %s20 = sadd.s32 %s19, 1
      %p23 = scmp.eq.s32.totalorder %s11, 1
      %p24 = scmp.ne.s32.totalorder %s19, %s21
      %p25 = scmp.eq.s32.totalorder %s11, 0
      %p26 = por %p24, %p25
      %p27 = scmp.ne.s32.totalorder %s19, %s21
      %p28 = scmp.eq.s32.totalorder %s16, 1
      %p29 = por %p27, %p28
      %p30 = scmp.ne.s32.totalorder %s21, %s22
      %p31 = scmp.eq.s32.totalorder %s16, 0
      %p32 = por %p30, %p31
      %p33 = scmp.ne.s32.totalorder %s21, %s22
      %p34 = scmp.eq.s32.totalorder %s17, 1
      %p35 = por %p33, %p34
      %p37 = scmp.ne.s32.totalorder %s22, %s36
      %p38 = scmp.eq.s32.totalorder %s17, 0
      %p39 = por %p37, %p38
      %s40 = ssub.s32 %s11, %s18
      %p41 = scmp.eq.s32.totalorder %s40, 0
      %s43 = sadd.s32 %s42, 1
      %s44 = scalar_select %p41, %s42, %s43
      %p47 = pneg %p41
      %p48 = scmp.eq.s32.totalorder %s11, 1
      %p49 = por %p47, %p48
      %p50 = scmp.ne.s32.totalorder %s42, %s45
      %p51 = scmp.eq.s32.totalorder %s11, 0
      %p52 = por %p50, %p51
      %p53 = scmp.ne.s32.totalorder %s42, %s45
      %p54 = scmp.eq.s32.totalorder %s16, 1
      %p55 = por %p53, %p54
      %p56 = scmp.ne.s32.totalorder %s45, %s46
      %p57 = scmp.eq.s32.totalorder %s16, 0
      %p58 = por %p56, %p57
      %p59 = scmp.ne.s32.totalorder %s45, %s46
      %p60 = scmp.eq.s32.totalorder %s17, 1
      %p61 = por %p59, %p60
      %p63 = scmp.ne.s32.totalorder %s46, %s62
      %p64 = scmp.eq.s32.totalorder %s17, 0
      %p65 = por %p63, %p64
      %p66 = scmp.le.s32.totalorder 1, %s11
      %p67 = scmp.lt.s32.totalorder %s11, 3
      %p68 = pnand %p66, %p67
      %p69 = pneg %p68
      // Predicated region
      $region9: #{tpu_custom_call.1} parent=5 // pred_check
        _
      $region10: #{tpu_custom_call.1} parent=5 // pred_check_branch
        %71 = sbr.rel (%p68) target = $region12
      $region11: #{tpu_custom_call.1} parent=5 // pred_region
        %s72 = ssub.s32 %s11, 1
        // Predicated region
        $region13: #{tpu_custom_call.1} parent=11 // pred_check
          %p73 = pneg %p32
        $region14: #{tpu_custom_call.1} parent=11 // pred_check_branch
          %75 = sbr.rel (%p73) target = $region16
        $region15: #{tpu_custom_call.1} parent=11 // pred_region
          %s77 = ssub.s32 128, 128
          %78 = vsyncadd [#allocation3], %s77
          %s80 = sshll.u32 [#allocation2], 4
          %s81 = int_to_ptr.vmem [resolvable:$true] %s80
          %83 = dma.hbm_to_vmem [thread:$0]  %s0, 128, %s81, [#allocation3]
        $region16: #{tpu_custom_call.1} parent=11 // pred_fallthru
          _
      $region12: #{tpu_custom_call.1} parent=5 // pred_fallthru
        _
      %p84 = scmp.lt.s32.totalorder %s11, 2
      // Predicated region
      $region17: #{tpu_custom_call.1} parent=5 // pred_check
        %p85 = pneg %p84
      $region18: #{tpu_custom_call.1} parent=5 // pred_check_branch
        %87 = sbr.rel (%p85) target = $region20
      $region19: #{tpu_custom_call.1} parent=5 // pred_region
        _
      $region20: #{tpu_custom_call.1} parent=5 // pred_fallthru
        _
      %p88 = scmp.le.s32.totalorder 1, %s11
      %p89 = scmp.lt.s32.totalorder %s11, 3
      %p90 = pnand %p88, %p89
      %p91 = pneg %p90
      // Predicated region
      $region21: #{tpu_custom_call.1} parent=5 // pred_check
        _
      $region22: #{tpu_custom_call.1} parent=5 // pred_check_branch
        %93 = sbr.rel (%p90) target = $region24
      $region23: #{tpu_custom_call.1} parent=5 // pred_region
        %s94 = ssub.s32 %s11, 1
        // Predicated region
        $region25: #{tpu_custom_call.1} parent=23 // pred_check
          %p95 = pneg %p32
        $region26: #{tpu_custom_call.1} parent=23 // pred_check_branch
          %97 = sbr.rel (%p95) target = $region28
        $region27: #{tpu_custom_call.1} parent=23 // pred_region
          %98 = dma.done [#allocation3], 128
        $region28: #{tpu_custom_call.1} parent=23 // pred_fallthru
          _
        %p99 = pneg %p32
        %p100 = pneg %p29
        %p101 = pneg %p58
        %p102 = pneg %p55
        %s103 = sand.u32 %s45, 1
        %s104 = scalar_lea.sflag [#allocation4], %s103
        %s105 = sand.u32 %s45, 1
        %s106 = smul.addr %s105, 8
        %s107 = scalar_lea.vmem [#allocation5], %s106
        %v108 = vld [vmem:[#allocation2] sm:$0xff]
        %v109 = vadd.f32 %v108, 1.0
        %110 = vst [vmem:[%s107] sm:$0xff] %v109
        %s111 = sand.u32 %s45, 1
        %s112 = scalar_lea.sflag [#allocation4], %s111
        %s113 = sand.u32 %s45, 1
        %s114 = smul.addr %s113, 8
        %s115 = scalar_lea.vmem [#allocation5], %s114
        // Predicated region
        $region29: #{tpu_custom_call.1} parent=23 // pred_check
          %p116 = pneg %p55
        $region30: #{tpu_custom_call.1} parent=23 // pred_check_branch
          %118 = sbr.rel (%p116) target = $region32
        $region31: #{tpu_custom_call.1} parent=23 // pred_region
          %s120 = ssub.s32 128, 128
          %121 = vsyncadd %s112, %s120
          %s122 = smul.addr %s16, 128
          %s123 = scalar_lea.hbm %s1, %s122
          %s125 = sshll.u32 %s115, 4
          %s126 = int_to_ptr.vmem [resolvable:$true] %s125
          %128 = dma.vmem_to_hbm [thread:$0]  %s126, 128, %s123, %s112
        $region32: #{tpu_custom_call.1} parent=23 // pred_fallthru
          _
      $region24: #{tpu_custom_call.1} parent=5 // pred_fallthru
        _
      %p129 = scmp.le.s32.totalorder 2, %s11
      // Predicated region
      $region33: #{tpu_custom_call.1} parent=5 // pred_check
        %p130 = pneg %p129
      $region34: #{tpu_custom_call.1} parent=5 // pred_check_branch
        %132 = sbr.rel (%p130) target = $region36
      $region35: #{tpu_custom_call.1} parent=5 // pred_region
        %s133 = ssub.s32 %s11, 2
        // Predicated region
        $region37: #{tpu_custom_call.1} parent=35 // pred_check
          %p134 = pneg %p61
        $region38: #{tpu_custom_call.1} parent=35 // pred_check_branch
          %136 = sbr.rel (%p134) target = $region40
        $region39: #{tpu_custom_call.1} parent=35 // pred_region
          %s137 = sand.u32 %s46, 1
          %s138 = scalar_lea.sflag [#allocation4], %s137
          %s139 = sand.u32 %s46, 1
          %s140 = smul.addr %s139, 8
          %s141 = scalar_lea.vmem [#allocation5], %s140
          %142 = dma.done %s138, 128
        $region40: #{tpu_custom_call.1} parent=35 // pred_fallthru
          _
      $region36: #{tpu_custom_call.1} parent=5 // pred_fallthru
        _
    $region6: #{tpu_custom_call.1} parent=1 // loop_footer
      %s15 = sadd.s32 1, %s11
    $region7: #{tpu_custom_call.1} parent=1 // loop_footer_branch
      %10 = sbr.rel target = $region3
    $region8: #{tpu_custom_call.1} parent=1 // loop_exit
      _
    %143 = vsyncpa [#allocation3], 1
    %s144 = scalar_lea.sflag [#allocation3], 1
    %145 = vsyncpa %s144, 1
    %146 = vsyncpa [#allocation4], 1
    %s147 = scalar_lea.sflag [#allocation4], 1
    %148 = vsyncpa %s147, 1

// kernel: clip_vision_tower_forward.3
$region0: #{clip_vision_tower_forward.3}
  #allocation0 [shape = 'u32[]', space=smem, size = 0x4, offset = 0x4, fixed_abs, tag = 'smem constant byte address 0x4 - core index']
  #allocation1 [shape = 'u32[144,128]{1,0:T(1,128)}', space=vmem, size = 0x12000, scoped, tag = 'internal scratch']
  %s0 = inlined_call_operand.vmem [shape: bf16[2,17,192], index: 0, kind: input, shape index: {}]
  %s1 = inlined_call_operand.vmem [shape: bf16[192,128], index: 1, kind: input, shape index: {}]
  %s2 = inlined_call_operand.vmem [shape: f32[17,128], index: 2, kind: input, shape index: {}]
  %s3 = inlined_call_operand.vmem [shape: f32[2,128], index: 3, kind: input, shape index: {}]
  %s4 = inlined_call_operand.vmem [shape: f32[2,17,128], index: 4, kind: output, shape index: {}]
  %s5 = sld [smem:[#allocation0]]
  $region49: #{clip_vision_tower_forward.3} parent=0
    _
  %s7 = ssub.s32 1, %s5
  %s8 = scalar_select 0, %s7, %s5
  loop: start=0, step=1, limit=4
  $region2: #{clip_vision_tower_forward.3} parent=0 // loop_pre_header
    _
  $region3: #{clip_vision_tower_forward.3} parent=0 // loop_header
    %s10 = sphi 0, %s14
    %p11 = scmp.ge.s32.totalorder %s10, 4
    %s20 = sphi 0, %s22
    %s23 = sphi 0, %s20
    %s24 = sphi 0, %s23
    %s40 = sphi 0, %s24
    %s44 = sphi 0, %s44
    %s46 = sphi 0, %s44
    %s47 = sphi 0, %s46
    %s61 = sphi 0, %s47
    %s65 = sphi 0, %s65
    %s67 = sphi 0, %s65
    %s68 = sphi 0, %s67
    %s82 = sphi 0, %s68
    %s86 = sphi 0, %s86
    %s88 = sphi 0, %s86
    %s89 = sphi 0, %s88
    %s103 = sphi 0, %s89
    %s109 = sphi 0, %s111
    %s112 = sphi 0, %s109
    %s113 = sphi 0, %s112
    %s129 = sphi 0, %s113
  $region4: #{clip_vision_tower_forward.3} parent=0 // loop_header_branch
    %13 = sbr.rel (%p11) target = $region8
  $region5: #{clip_vision_tower_forward.3} parent=0 // loop_body
    %s15 = ssub.s32 %s10, 1
    %s16 = ssub.s32 %s10, 2
    %s17 = sadd.s32 %s10, 1
    %s18 = ssub.s32 %s10, %s17
    %p19 = scmp.eq.s32.totalorder %s18, 0
    %s21 = sadd.s32 %s20, 1
    %s22 = scalar_select %p19, %s20, %s21
    %p25 = pneg %p19
    %p26 = scmp.eq.s32.totalorder %s10, 1
    %p27 = por %p25, %p26
    %p28 = scmp.ne.s32.totalorder %s20, %s23
    %p29 = scmp.eq.s32.totalorder %s10, 0
    %p30 = por %p28, %p29
    %p31 = scmp.ne.s32.totalorder %s20, %s23
    %p32 = scmp.eq.s32.totalorder %s15, 1
    %p33 = por %p31, %p32
    %p34 = scmp.ne.s32.totalorder %s23, %s24
    %p35 = scmp.eq.s32.totalorder %s15, 0
    %p36 = por %p34, %p35
    %p37 = scmp.ne.s32.totalorder %s23, %s24
    %p38 = scmp.eq.s32.totalorder %s16, 1
    %p39 = por %p37, %p38
    %p41 = scmp.ne.s32.totalorder %s24, %s40
    %p42 = scmp.eq.s32.totalorder %s16, 0
    %p43 = por %p41, %p42
    %s45 = sadd.s32 %s44, 1
    %p48 = scmp.eq.s32.totalorder %s10, 1
    %p49 = scmp.ne.s32.totalorder %s44, %s46
    %p50 = scmp.eq.s32.totalorder %s10, 0
    %p51 = por %p49, %p50
    %p52 = scmp.ne.s32.totalorder %s44, %s46
    %p53 = scmp.eq.s32.totalorder %s15, 1
    %p54 = por %p52, %p53
    %p55 = scmp.ne.s32.totalorder %s46, %s47
    %p56 = scmp.eq.s32.totalorder %s15, 0
    %p57 = por %p55, %p56
    %p58 = scmp.ne.s32.totalorder %s46, %s47
    %p59 = scmp.eq.s32.totalorder %s16, 1
    %p60 = por %p58, %p59
    %p62 = scmp.ne.s32.totalorder %s47, %s61
    %p63 = scmp.eq.s32.totalorder %s16, 0
    %p64 = por %p62, %p63
    %s66 = sadd.s32 %s65, 1
    %p69 = scmp.eq.s32.totalorder %s10, 1
    %p70 = scmp.ne.s32.totalorder %s65, %s67
    %p71 = scmp.eq.s32.totalorder %s10, 0
    %p72 = por %p70, %p71
    %p73 = scmp.ne.s32.totalorder %s65, %s67
    %p74 = scmp.eq.s32.totalorder %s15, 1
    %p75 = por %p73, %p74
    %p76 = scmp.ne.s32.totalorder %s67, %s68
    %p77 = scmp.eq.s32.totalorder %s15, 0
    %p78 = por %p76, %p77
    %p79 = scmp.ne.s32.totalorder %s67, %s68
    %p80 = scmp.eq.s32.totalorder %s16, 1
    %p81 = por %p79, %p80
    %p83 = scmp.ne.s32.totalorder %s68, %s82
    %p84 = scmp.eq.s32.totalorder %s16, 0
    %p85 = por %p83, %p84
    %s87 = sadd.s32 %s86, 1
    %p90 = scmp.eq.s32.totalorder %s10, 1
    %p91 = scmp.ne.s32.totalorder %s86, %s88
    %p92 = scmp.eq.s32.totalorder %s10, 0
    %p93 = por %p91, %p92
    %p94 = scmp.ne.s32.totalorder %s86, %s88
    %p95 = scmp.eq.s32.totalorder %s15, 1
    %p96 = por %p94, %p95
    %p97 = scmp.ne.s32.totalorder %s88, %s89
    %p98 = scmp.eq.s32.totalorder %s15, 0
    %p99 = por %p97, %p98
    %p100 = scmp.ne.s32.totalorder %s88, %s89
    %p101 = scmp.eq.s32.totalorder %s16, 1
    %p102 = por %p100, %p101
    %p104 = scmp.ne.s32.totalorder %s89, %s103
    %p105 = scmp.eq.s32.totalorder %s16, 0
    %p106 = por %p104, %p105
    %s107 = ssub.s32 %s10, %s17
    %p108 = scmp.eq.s32.totalorder %s107, 0
    %s110 = sadd.s32 %s109, 1
    %s111 = scalar_select %p108, %s109, %s110
    %p114 = pneg %p108
    %p115 = scmp.eq.s32.totalorder %s10, 1
    %p116 = por %p114, %p115
    %p117 = scmp.ne.s32.totalorder %s109, %s112
    %p118 = scmp.eq.s32.totalorder %s10, 0
    %p119 = por %p117, %p118
    %p120 = scmp.ne.s32.totalorder %s109, %s112
    %p121 = scmp.eq.s32.totalorder %s15, 1
    %p122 = por %p120, %p121
    %p123 = scmp.ne.s32.totalorder %s112, %s113
    %p124 = scmp.eq.s32.totalorder %s15, 0
    %p125 = por %p123, %p124
    %p126 = scmp.ne.s32.totalorder %s112, %s113
    %p127 = scmp.eq.s32.totalorder %s16, 1
    %p128 = por %p126, %p127
    %p130 = scmp.ne.s32.totalorder %s113, %s129
    %p131 = scmp.eq.s32.totalorder %s16, 0
    %p132 = por %p130, %p131
    %p133 = scmp.le.s32.totalorder 1, %s10
    %p134 = scmp.lt.s32.totalorder %s10, 3
    %p135 = pnand %p133, %p134
    %p136 = pneg %p135
    // Predicated region
    $region9: #{clip_vision_tower_forward.3} parent=5 // pred_check
      _
    $region10: #{clip_vision_tower_forward.3} parent=5 // pred_check_branch
      %138 = sbr.rel (%p135) target = $region12
    $region11: #{clip_vision_tower_forward.3} parent=5 // pred_region
      %s139 = ssub.s32 %s10, 1
      // Predicated region
      $region13: #{clip_vision_tower_forward.3} parent=11 // pred_check
        %p140 = pneg %p57
      $region14: #{clip_vision_tower_forward.3} parent=11 // pred_check_branch
        %142 = sbr.rel (%p140) target = $region16
      $region15: #{clip_vision_tower_forward.3} parent=11 // pred_region
        _
      $region16: #{clip_vision_tower_forward.3} parent=11 // pred_fallthru
        _
      // Predicated region
      $region17: #{clip_vision_tower_forward.3} parent=11 // pred_check
        %p143 = pneg %p78
      $region18: #{clip_vision_tower_forward.3} parent=11 // pred_check_branch
        %145 = sbr.rel (%p143) target = $region20
      $region19: #{clip_vision_tower_forward.3} parent=11 // pred_region
        _
      $region20: #{clip_vision_tower_forward.3} parent=11 // pred_fallthru
        _
      // Predicated region
      $region21: #{clip_vision_tower_forward.3} parent=11 // pred_check
        %p146 = pneg %p99
      $region22: #{clip_vision_tower_forward.3} parent=11 // pred_check_branch
        %148 = sbr.rel (%p146) target = $region24
      $region23: #{clip_vision_tower_forward.3} parent=11 // pred_region
        _
      $region24: #{clip_vision_tower_forward.3} parent=11 // pred_fallthru
        _
    $region12: #{clip_vision_tower_forward.3} parent=5 // pred_fallthru
      _
    %p149 = scmp.lt.s32.totalorder %s10, 2
    // Predicated region
    $region25: #{clip_vision_tower_forward.3} parent=5 // pred_check
      %p150 = pneg %p149
    $region26: #{clip_vision_tower_forward.3} parent=5 // pred_check_branch
      %152 = sbr.rel (%p150) target = $region28
    $region27: #{clip_vision_tower_forward.3} parent=5 // pred_region
      // Predicated region
      $region29: #{clip_vision_tower_forward.3} parent=27 // pred_check
        %p153 = pneg %p30
      $region30: #{clip_vision_tower_forward.3} parent=27 // pred_check_branch
        %155 = sbr.rel (%p153) target = $region32
      $region31: #{clip_vision_tower_forward.3} parent=27 // pred_region
        %p156 = scmp.lt.s32.totalorder %s10, 1
        %s157 = scalar_select %p156, %s10, 1
        %s158 = smul.addr %s157, 6
        %s159 = smul.addr %s158, 4
        %s160 = scalar_lea.vmem %s0, %s159
      $region32: #{clip_vision_tower_forward.3} parent=27 // pred_fallthru
        _
    $region28: #{clip_vision_tower_forward.3} parent=5 // pred_fallthru
      _
    %p161 = scmp.le.s32.totalorder 1, %s10
    %p162 = scmp.lt.s32.totalorder %s10, 3
    %p163 = pnand %p161, %p162
    %p164 = pneg %p163
    // Predicated region
    $region33: #{clip_vision_tower_forward.3} parent=5 // pred_check
      _
    $region34: #{clip_vision_tower_forward.3} parent=5 // pred_check_branch
      %166 = sbr.rel (%p163) target = $region36
    $region35: #{clip_vision_tower_forward.3} parent=5 // pred_region
      %s167 = ssub.s32 %s10, 1
      %p168 = scmp.lt.s32.totalorder %s15, 1
      %s169 = scalar_select %p168, %s15, 1
      %s170 = smul.addr %s169, 6
      %s171 = smul.addr %s170, 4
      %s172 = scalar_lea.vmem %s0, %s171
      %p173 = pneg %p36
      %p174 = pneg %p33
      %p175 = pneg %p57
      %p176 = pneg %p54
      %p177 = pneg %p78
      %p178 = pneg %p75
      %p179 = pneg %p99
      %p180 = pneg %p96
      %p181 = pneg %p125
      %p182 = pneg %p122
      %p183 = scmp.lt.s32.totalorder %s15, 1
      %s184 = scalar_select %p183, %s15, 1
      %s185 = smul.addr %s184, 3
      %s186 = smul.addr %s185, 8
      %s187 = scalar_lea.vmem %s4, %s186
      %p188 = scmp.lt.s32.totalorder %s15, 1
      %s189 = scalar_select %p188, %s15, 1
      %s190 = smul.addr %s189, 6
      %s191 = smul.addr %s190, 4
      %s192 = scalar_lea.vmem %s0, %s191
      %p193 = scmp.lt.s32.totalorder %s15, 1
      %s194 = scalar_select %p193, %s15, 1
      %s195 = smul.addr %s194, 3
      %s196 = smul.addr %s195, 8
      %s197 = scalar_lea.vmem %s4, %s196
      %v199 = vld [vmem:[%s192] sm:$0xff]
      %v200 = vld [vmem:[%s192 + $0x8] sm:$0xff]
      %v201 = vld [vmem:[%s192 + $0x10] sm:$0x11]
      %v202 = vld [vmem:[%s1] sm:$0xf]
      %v203 = vld [vmem:[%s1 + $0x4] sm:$0xf]
      %v204 = vld [vmem:[%s1 + $0x8] sm:$0xf]
      %v205 = vld [vmem:[%s1 + $0xc] sm:$0xf]
      %v206 = vld [vmem:[%s1 + $0x10] sm:$0xf]
      %v207 = vld [vmem:[%s1 + $0x14] sm:$0xf]
      %v208 = vld [vmem:[%s1 + $0x18] sm:$0xf]
      %v209 = vld [vmem:[%s1 + $0x1c] sm:$0xf]
      %v210 = vld [vmem:[%s1 + $0x20] sm:$0xf]
      %v211 = vld [vmem:[%s1 + $0x24] sm:$0xf]
      %v212 = vld [vmem:[%s1 + $0x28] sm:$0xf]
      %v213 = vld [vmem:[%s1 + $0x2c] sm:$0xf]
      %v214 = vld [vmem:[%s1 + $0x30] sm:$0xf]
      %v215 = vld [vmem:[%s1 + $0x34] sm:$0xf]
      %v216 = vld [vmem:[%s1 + $0x38] sm:$0xf]
      %v217 = vld [vmem:[%s1 + $0x3c] sm:$0xf]
      %v218 = vld [vmem:[%s1 + $0x40] sm:$0xf]
      %v219 = vld [vmem:[%s1 + $0x44] sm:$0xf]
      %v220 = vld [vmem:[%s1 + $0x48] sm:$0xf]
      %v221 = vld [vmem:[%s1 + $0x4c] sm:$0xf]
      %v222 = vld [vmem:[%s1 + $0x50] sm:$0xf]
      %v223 = vld [vmem:[%s1 + $0x54] sm:$0xf]
      %v224 = vld [vmem:[%s1 + $0x58] sm:$0xf]
      %v225 = vld [vmem:[%s1 + $0x5c] sm:$0xf]
      %v226 = vld [vmem:[%s2] sm:$0xff]
      %v227 = vld [vmem:[%s2 + $0x8] sm:$0xff]
      %v228 = vld [vmem:[%s2 + $0x10] sm:$0x1]
      %v232 = vunpack.c.l.b16 %v199
      %v233 = vunpack.c.h.b16 %v199
      %v234 = vunpack.c.l.b16 %v200
      %v235 = vunpack.c.h.b16 %v200
      %v236 = vunpack.c.l.b16 %v201
      %v237 = vunpack.c.h.b16 %v201
      %v238 = vpack.c.b16 %v234, %v232
      %v239 = vpack.c.b16 %v235, %v233
      %v240 = vpack.c.b16 %v236, %v236
      %v241 = vpack.c.b16 %v237, %v237
      %v268 = vunpack.c.l.b16 %v202
      %v269 = vunpack.c.l.b16 %v203
      %v270 = vunpack.c.l.b16 %v204
      %v271 = vunpack.c.l.b16 %v205
      %v272 = vunpack.c.l.b16 %v206
      %v273 = vunpack.c.l.b16 %v207
      %v274 = vunpack.c.l.b16 %v208
      %v275 = vunpack.c.l.b16 %v209
      %v276 = vunpack.c.l.b16 %v210
      %v277 = vunpack.c.l.b16 %v211
      %v278 = vunpack.c.l.b16 %v212
      %v279 = vunpack.c.l.b16 %v213
      %v280 = vunpack.c.l.b16 %v214
      %v281 = vunpack.c.l.b16 %v215
      %v282 = vunpack.c.l.b16 %v216
      %v283 = vunpack.c.l.b16 %v217
      %v284 = vunpack.c.l.b16 %v218
      %v285 = vunpack.c.l.b16 %v219
      %v286 = vunpack.c.l.b16 %v220
      %v287 = vunpack.c.l.b16 %v221
      %v288 = vunpack.c.l.b16 %v222
      %v289 = vunpack.c.l.b16 %v223
      %v290 = vunpack.c.l.b16 %v224
      %v291 = vunpack.c.l.b16 %v225
      %v292 = vpack.c.b16 %v269, %v268
      %v293 = vpack.c.b16 %v271, %v270
      %v294 = vpack.c.b16 %v273, %v272
      %v295 = vpack.c.b16 %v275, %v274
      %v296 = vpack.c.b16 %v277, %v276
      %v297 = vpack.c.b16 %v279, %v278
      %v298 = vpack.c.b16 %v281, %v280
      %v299 = vpack.c.b16 %v283, %v282
      %v300 = vpack.c.b16 %v285, %v284
      %v301 = vpack.c.b16 %v287, %v286
      %v302 = vpack.c.b16 %v289, %v288
      %v303 = vpack.c.b16 %v291, %v290
      %vm316 = vcmask 523264
      %v318 = vsel %vm316, %v239, 0
      %v321 = vsel %vm316, %v241, 0
      %323 = vmatprep.subr.bf16.mxu0 0
      %324 = vmatpush1.bf16.msra.mxu0 %v299
      %325 = vmatprep.subr.bf16.mxu0 0
      %326 = vmatpush1.bf16.msra.mxu0 %v298
      %327 = vmatprep.subr.bf16.mxu0 0
      %328 = vmatpush1.bf16.msra.mxu0 %v297
      %329 = vmatprep.subr.bf16.mxu0 0
      %330 = vmatpush1.bf16.msra.mxu0 %v296
      %331 = vmatprep.subr.bf16.mxu0 0
      %332 = vmatpush1.bf16.msra.mxu0 %v295
      %333 = vmatprep.subr.bf16.mxu0 0
      %334 = vmatpush1.bf16.msra.mxu0 %v294
      %335 = vmatprep.subr.bf16.mxu0 0
      %336 = vmatpush1.bf16.msra.mxu0 %v293
      %337 = vmatprep.subr.bf16.mxu0 0
      %338 = vmatpush1.bf16.msra.mxu0 %v292
      %339 = vmatprep.subr.bf16.mxu0 0
      %340 = vmatpush2.bf16.msra.mxu0 0
      %341 = vmatprep.subr.bf16.mxu0 0
      %342 = vmatpush2.bf16.msra.mxu0 0
      %343 = vmatprep.subr.bf16.mxu0 0
      %344 = vmatpush2.bf16.msra.mxu0 0
      %345 = vmatprep.subr.bf16.mxu0 0
      %346 = vmatpush2.bf16.msra.mxu0 0
      %347 = vmatprep.subr.bf16.mxu0 0
      %348 = vmatpush2.bf16.msra.mxu0 %v303
      %349 = vmatprep.subr.bf16.mxu0 0
      %350 = vmatpush2.bf16.msra.mxu0 %v302
      %351 = vmatprep.subr.bf16.mxu0 0
      %352 = vmatpush2.bf16.msra.mxu0 %v301
      %353 = vmatprep.subr.bf16.mxu0 0
      %354 = vmatpush2.bf16.msra.mxu0 %v300
      %355 = vmatprep.mubr.bf16.mxu0 %v318
      %356 = vmatmul.mubr.bf16.gmra.mxu0 %v238
      %v357 = vpop.f32.mrf.mxu0
      %v358 = vadd.f32 %v226, %v357
      %v359 = vpop.f32.mrf.mxu0
      %v360 = vpop.f32.mrf.mxu0
      %v361 = vadd.f32 %v227, %v360
      %v362 = vpop.f32.mrf.mxu0
      %363 = vmatprep.mubr.bf16.mxu0 %v321
      %364 = vmatmul.mubr.bf16.gmra.mxu0 %v240
      %v365 = vpop.f32.mrf.mxu0
      %v366 = vadd.f32 %v228, %v365
      %v367 = vpop.f32.mrf.mxu0
      %v368 = vpop.f32.mrf.mxu0
      %v369 = vpop.f32.mrf.mxu0
      %370 = vdwg.mxu0
      %v371 = vld [vmem:[%s3] sm:$0x3]
      %372 = vadd.xlane.f32.xlu0 %v358
      %v373 = vpop.xlane.xlu0 %372
      %374 = vadd.xlane.f32.xlu0 %v361
      %v375 = vpop.xlane.xlu0 %374
      %vm376 = vcmask 1040384
      %v377 = vsel %vm376, %v366, 0.0
      %378 = vadd.xlane.f32.xlu0 %v377
      %v379 = vpop.xlane.xlu0 %378
      %v380 = vrcp.pop 128.0
      %v381 = vmul.f32 %v373, %v380
      %v382 = vmul.f32 %v375, %v380
      %v383 = vmul.f32 %v379, %v380
      %v384 = vsub.f32 %v358, %v381
      %v385 = vsub.f32 %v361, %v382
      %v386 = vsub.f32 %v366, %v383
      %v387 = vmul.f32 %v384, %v384
      %v388 = vmul.f32 %v385, %v385
      %v389 = vmul.f32 %v386, %v386
      %390 = vadd.xlane.f32.xlu0 %v387
      %v391 = vpop.xlane.xlu0 %390
      %392 = vadd.xlane.f32.xlu0 %v388
      %v393 = vpop.xlane.xlu0 %392
      %v394 = vsel %vm376, %v389, 0.0
      %395 = vadd.xlane.f32.xlu0 %v394
      %v396 = vpop.xlane.xlu0 %395
      %v397 = vmul.f32 %v391, %v380
      %v398 = vmul.f32 %v393, %v380
      %v399 = vmul.f32 %v396, %v380
      %v400 = vadd.f32 %v397, 1e-05
      %v401 = vadd.f32 %v398, 1e-05
      %v402 = vadd.f32 %v399, 1e-05
      %v403 = vrsqrt.pop %v400
      %v404 = vrsqrt.pop %v401
      %v405 = vrsqrt.pop %v402
      %v406 = vmul.f32 %v384, %v403
      %v407 = vmul.f32 %v385, %v404
      %v408 = vmul.f32 %v386, %v405
      %v409 = vlaneseq
      %v410 = vshrl.u32 %v409, 7
      %v411 = vsub.s32 0, %v410
      %v412 = vrot.slane %v371, %v411
      %v413 = vmul.f32 %v406, %v412
      %v414 = vmul.f32 %v407, %v412
      %v415 = vmul.f32 %v408, %v412
      %v416 = vlaneseq
      %v417 = vshrl.u32 %v416, 7
      %v418 = vsub.s32 1, %v417
      %v419 = vrot.slane %v371, %v418
      %v420 = vadd.f32 %v413, %v419
      %v421 = vadd.f32 %v414, %v419
      %v422 = vadd.f32 %v415, %v419
      %423 = vst [vmem:[%s197] sm:$0xff] %v420
      %424 = vst [vmem:[%s197 + $0x8] sm:$0xff] %v421
      %425 = vst [vmem:[%s197 + $0x10] sm:$0x1] %v422
      %p426 = scmp.lt.s32.totalorder %s15, 1
      %s427 = scalar_select %p426, %s15, 1
      %s428 = smul.addr %s427, 3
      %s429 = smul.addr %s428, 8
      %s430 = scalar_lea.vmem %s4, %s429
      // Predicated region
      $region37: #{clip_vision_tower_forward.3} parent=35 // pred_check
        %p431 = pneg %p122
      $region38: #{clip_vision_tower_forward.3} parent=35 // pred_check_branch
        %433 = sbr.rel (%p431) target = $region40
      $region39: #{clip_vision_tower_forward.3} parent=35 // pred_region
        _
      $region40: #{clip_vision_tower_forward.3} parent=35 // pred_fallthru
        _
    $region36: #{clip_vision_tower_forward.3} parent=5 // pred_fallthru
      _
    %p434 = scmp.le.s32.totalorder 2, %s10
    // Predicated region
    $region41: #{clip_vision_tower_forward.3} parent=5 // pred_check
      %p435 = pneg %p434
    $region42: #{clip_vision_tower_forward.3} parent=5 // pred_check_branch
      %437 = sbr.rel (%p435) target = $region44
    $region43: #{clip_vision_tower_forward.3} parent=5 // pred_region
      %s438 = ssub.s32 %s10, 2
      // Predicated region
      $region45: #{clip_vision_tower_forward.3} parent=43 // pred_check
        %p439 = pneg %p128
      $region46: #{clip_vision_tower_forward.3} parent=43 // pred_check_branch
        %441 = sbr.rel (%p439) target = $region48
      $region47: #{clip_vision_tower_forward.3} parent=43 // pred_region
        %p442 = scmp.lt.s32.totalorder %s16, 1
        %s443 = scalar_select %p442, %s16, 1
        %s444 = smul.addr %s443, 3
        %s445 = smul.addr %s444, 8
        %s446 = scalar_lea.vmem %s4, %s445
      $region48: #{clip_vision_tower_forward.3} parent=43 // pred_fallthru
        _
    $region44: #{clip_vision_tower_forward.3} parent=5 // pred_fallthru
      _
  $region6: #{clip_vision_tower_forward.3} parent=0 // loop_footer
    %s14 = sadd.s32 1, %s10
  $region7: #{clip_vision_tower_forward.3} parent=0 // loop_footer_branch
    %9 = sbr.rel target = $region3
  $region8: #{clip_vision_tower_forward.3} parent=0 // loop_exit
    _

// kernel: clip_vision_tower_forward.4
$region0: #{clip_vision_tower_forward.4}
  #allocation0 [shape = 'u32[]', space=smem, size = 0x4, offset = 0x4, fixed_abs, tag = 'smem constant byte address 0x4 - core index']
  #allocation1 [shape = 'u32[144,128]{1,0:T(1,128)}', space=vmem, size = 0x12000, scoped, tag = 'internal scratch']
  #allocation2 [shape = 'bf16[4,17,32]{2,1,0:T(8,128)(2,1)}', space=vmem, size = 0x6000, scoped, tag = 'scratch operand']
  #allocation3 [shape = 'bf16[4,17,32]{2,1,0:T(8,128)(2,1)}', space=vmem, size = 0x6000, scoped, tag = 'scratch operand']
  #allocation4 [shape = 'bf16[4,17,32]{2,1,0:T(8,128)(2,1)}', space=vmem, size = 0x6000, scoped, tag = 'scratch operand']
  #allocation5 [shape = 'f32[4,17,32]{2,1,0:T(8,128)}', space=vmem, size = 0xc000, scoped, tag = 'scratch operand']
  %s0 = inlined_call_operand.vmem [shape: f32[2,17,128], index: 0, kind: input, shape index: {}, may-alias: {0,10}]
  %s1 = inlined_call_operand.vmem [shape: f32[4,128], index: 1, kind: input, shape index: {}]
  %s2 = inlined_call_operand.vmem [shape: bf16[128,384], index: 2, kind: input, shape index: {}]
  %s3 = inlined_call_operand.vmem [shape: f32[1,384], index: 3, kind: input, shape index: {}]
  %s4 = inlined_call_operand.vmem [shape: bf16[128,128], index: 4, kind: input, shape index: {}]
  %s5 = inlined_call_operand.vmem [shape: f32[1,128], index: 5, kind: input, shape index: {}]
  %s6 = inlined_call_operand.vmem [shape: bf16[128,512], index: 6, kind: input, shape index: {}]
  %s7 = inlined_call_operand.vmem [shape: f32[1,512], index: 7, kind: input, shape index: {}]
  %s8 = inlined_call_operand.vmem [shape: bf16[512,128], index: 8, kind: input, shape index: {}]
  %s9 = inlined_call_operand.vmem [shape: f32[1,128], index: 9, kind: input, shape index: {}]
  %s10 = inlined_call_operand.vmem [shape: f32[2,17,128], index: 10, kind: output, shape index: {}, may-alias: {0,10}]
  %s11 = sld [smem:[#allocation0]]
  $region80: #{clip_vision_tower_forward.4} parent=0
    _
  %s13 = ssub.s32 1, %s11
  %s14 = scalar_select 0, %s13, %s11
  loop: start=0, step=1, limit=4
  $region2: #{clip_vision_tower_forward.4} parent=0 // loop_pre_header
    _
  $region3: #{clip_vision_tower_forward.4} parent=0 // loop_header
    %s16 = sphi 0, %s20
    %p17 = scmp.ge.s32.totalorder %s16, 4
    %s26 = sphi 0, %s28
    %s29 = sphi 0, %s26
    %s30 = sphi 0, %s29
    %s46 = sphi 0, %s30
    %s50 = sphi 0, %s50
    %s52 = sphi 0, %s50
    %s53 = sphi 0, %s52
    %s67 = sphi 0, %s53
    %s71 = sphi 0, %s71
    %s73 = sphi 0, %s71
    %s74 = sphi 0, %s73
    %s88 = sphi 0, %s74
    %s92 = sphi 0, %s92
    %s94 = sphi 0, %s92
    %s95 = sphi 0, %s94
    %s109 = sphi 0, %s95
    %s113 = sphi 0, %s113
    %s115 = sphi 0, %s113
    %s116 = sphi 0, %s115
    %s130 = sphi 0, %s116
    %s134 = sphi 0, %s134
    %s136 = sphi 0, %s134
    %s137 = sphi 0, %s136
    %s151 = sphi 0, %s137
    %s155 = sphi 0, %s155
    %s157 = sphi 0, %s155
    %s158 = sphi 0, %s157
    %s172 = sphi 0, %s158
    %s176 = sphi 0, %s176
    %s178 = sphi 0, %s176
    %s179 = sphi 0, %s178
    %s193 = sphi 0, %s179
    %s197 = sphi 0, %s197
    %s199 = sphi 0, %s197
    %s200 = sphi 0, %s199
    %s214 = sphi 0, %s200
    %s218 = sphi 0, %s218
    %s220 = sphi 0, %s218
    %s221 = sphi 0, %s220
    %s235 = sphi 0, %s221
    %s241 = sphi 0, %s243
    %s244 = sphi 0, %s241
    %s245 = sphi 0, %s244
    %s261 = sphi 0, %s245
  $region4: #{clip_vision_tower_forward.4} parent=0 // loop_header_branch
    %19 = sbr.rel (%p17) target = $region8
  $region5: #{clip_vision_tower_forward.4} parent=0 // loop_body
    %s21 = ssub.s32 %s16, 1
    %s22 = ssub.s32 %s16, 2
    %s23 = sadd.s32 %s16, 1
    %s24 = ssub.s32 %s16, %s23
    %p25 = scmp.eq.s32.totalorder %s24, 0
    %s27 = sadd.s32 %s26, 1
    %s28 = scalar_select %p25, %s26, %s27
    %p31 = pneg %p25
    %p32 = scmp.eq.s32.totalorder %s16, 1
    %p33 = por %p31, %p32
    %p34 = scmp.ne.s32.totalorder %s26, %s29
    %p35 = scmp.eq.s32.totalorder %s16, 0
    %p36 = por %p34, %p35
    %p37 = scmp.ne.s32.totalorder %s26, %s29
    %p38 = scmp.eq.s32.totalorder %s21, 1
    %p39 = por %p37, %p38
    %p40 = scmp.ne.s32.totalorder %s29, %s30
    %p41 = scmp.eq.s32.totalorder %s21, 0
    %p42 = por %p40, %p41
    %p43 = scmp.ne.s32.totalorder %s29, %s30
    %p44 = scmp.eq.s32.totalorder %s22, 1
    %p45 = por %p43, %p44
    %p47 = scmp.ne.s32.totalorder %s30, %s46
    %p48 = scmp.eq.s32.totalorder %s22, 0
    %p49 = por %p47, %p48
    %s51 = sadd.s32 %s50, 1
    %p54 = scmp.eq.s32.totalorder %s16, 1
    %p55 = scmp.ne.s32.totalorder %s50, %s52
    %p56 = scmp.eq.s32.totalorder %s16, 0
    %p57 = por %p55, %p56
    %p58 = scmp.ne.s32.totalorder %s50, %s52
    %p59 = scmp.eq.s32.totalorder %s21, 1
    %p60 = por %p58, %p59
    %p61 = scmp.ne.s32.totalorder %s52, %s53
    %p62 = scmp.eq.s32.totalorder %s21, 0
    %p63 = por %p61, %p62
    %p64 = scmp.ne.s32.totalorder %s52, %s53
    %p65 = scmp.eq.s32.totalorder %s22, 1
    %p66 = por %p64, %p65
    %p68 = scmp.ne.s32.totalorder %s53, %s67
    %p69 = scmp.eq.s32.totalorder %s22, 0
    %p70 = por %p68, %p69
    %s72 = sadd.s32 %s71, 1
    %p75 = scmp.eq.s32.totalorder %s16, 1
    %p76 = scmp.ne.s32.totalorder %s71, %s73
    %p77 = scmp.eq.s32.totalorder %s16, 0
    %p78 = por %p76, %p77
    %p79 = scmp.ne.s32.totalorder %s71, %s73
    %p80 = scmp.eq.s32.totalorder %s21, 1
    %p81 = por %p79, %p80
    %p82 = scmp.ne.s32.totalorder %s73, %s74
    %p83 = scmp.eq.s32.totalorder %s21, 0
    %p84 = por %p82, %p83
    %p85 = scmp.ne.s32.totalorder %s73, %s74
    %p86 = scmp.eq.s32.totalorder %s22, 1
    %p87 = por %p85, %p86
    %p89 = scmp.ne.s32.totalorder %s74, %s88
    %p90 = scmp.eq.s32.totalorder %s22, 0
    %p91 = por %p89, %p90
    %s93 = sadd.s32 %s92, 1
    %p96 = scmp.eq.s32.totalorder %s16, 1
    %p97 = scmp.ne.s32.totalorder %s92, %s94
    %p98 = scmp.eq.s32.totalorder %s16, 0
    %p99 = por %p97, %p98
    %p100 = scmp.ne.s32.totalorder %s92, %s94
    %p101 = scmp.eq.s32.totalorder %s21, 1
    %p102 = por %p100, %p101
    %p103 = scmp.ne.s32.totalorder %s94, %s95
    %p104 = scmp.eq.s32.totalorder %s21, 0
    %p105 = por %p103, %p104
    %p106 = scmp.ne.s32.totalorder %s94, %s95
    %p107 = scmp.eq.s32.totalorder %s22, 1
    %p108 = por %p106, %p107
    %p110 = scmp.ne.s32.totalorder %s95, %s109
    %p111 = scmp.eq.s32.totalorder %s22, 0
    %p112 = por %p110, %p111
    %s114 = sadd.s32 %s113, 1
    %p117 = scmp.eq.s32.totalorder %s16, 1
    %p118 = scmp.ne.s32.totalorder %s113, %s115
    %p119 = scmp.eq.s32.totalorder %s16, 0
    %p120 = por %p118, %p119
    %p121 = scmp.ne.s32.totalorder %s113, %s115
    %p122 = scmp.eq.s32.totalorder %s21, 1
    %p123 = por %p121, %p122
    %p124 = scmp.ne.s32.totalorder %s115, %s116
    %p125 = scmp.eq.s32.totalorder %s21, 0
    %p126 = por %p124, %p125
    %p127 = scmp.ne.s32.totalorder %s115, %s116
    %p128 = scmp.eq.s32.totalorder %s22, 1
    %p129 = por %p127, %p128
    %p131 = scmp.ne.s32.totalorder %s116, %s130
    %p132 = scmp.eq.s32.totalorder %s22, 0
    %p133 = por %p131, %p132
    %s135 = sadd.s32 %s134, 1
    %p138 = scmp.eq.s32.totalorder %s16, 1
    %p139 = scmp.ne.s32.totalorder %s134, %s136
    %p140 = scmp.eq.s32.totalorder %s16, 0
    %p141 = por %p139, %p140
    %p142 = scmp.ne.s32.totalorder %s134, %s136
    %p143 = scmp.eq.s32.totalorder %s21, 1
    %p144 = por %p142, %p143
    %p145 = scmp.ne.s32.totalorder %s136, %s137
    %p146 = scmp.eq.s32.totalorder %s21, 0
    %p147 = por %p145, %p146
    %p148 = scmp.ne.s32.totalorder %s136, %s137
    %p149 = scmp.eq.s32.totalorder %s22, 1
    %p150 = por %p148, %p149
    %p152 = scmp.ne.s32.totalorder %s137, %s151
    %p153 = scmp.eq.s32.totalorder %s22, 0
    %p154 = por %p152, %p153
    %s156 = sadd.s32 %s155, 1
    %p159 = scmp.eq.s32.totalorder %s16, 1
    %p160 = scmp.ne.s32.totalorder %s155, %s157
    %p161 = scmp.eq.s32.totalorder %s16, 0
    %p162 = por %p160, %p161
    %p163 = scmp.ne.s32.totalorder %s155, %s157
    %p164 = scmp.eq.s32.totalorder %s21, 1
    %p165 = por %p163, %p164
    %p166 = scmp.ne.s32.totalorder %s157, %s158
    %p167 = scmp.eq.s32.totalorder %s21, 0
    %p168 = por %p166, %p167
    %p169 = scmp.ne.s32.totalorder %s157, %s158
    %p170 = scmp.eq.s32.totalorder %s22, 1
    %p171 = por %p169, %p170
    %p173 = scmp.ne.s32.totalorder %s158, %s172
    %p174 = scmp.eq.s32.totalorder %s22, 0
    %p175 = por %p173, %p174
    %s177 = sadd.s32 %s176, 1
    %p180 = scmp.eq.s32.totalorder %s16, 1
    %p181 = scmp.ne.s32.totalorder %s176, %s178
    %p182 = scmp.eq.s32.totalorder %s16, 0
    %p183 = por %p181, %p182
    %p184 = scmp.ne.s32.totalorder %s176, %s178
    %p185 = scmp.eq.s32.totalorder %s21, 1
    %p186 = por %p184, %p185
    %p187 = scmp.ne.s32.totalorder %s178, %s179
    %p188 = scmp.eq.s32.totalorder %s21, 0
    %p189 = por %p187, %p188
    %p190 = scmp.ne.s32.totalorder %s178, %s179
    %p191 = scmp.eq.s32.totalorder %s22, 1
    %p192 = por %p190, %p191
    %p194 = scmp.ne.s32.totalorder %s179, %s193
    %p195 = scmp.eq.s32.totalorder %s22, 0
    %p196 = por %p194, %p195
    %s198 = sadd.s32 %s197, 1
    %p201 = scmp.eq.s32.totalorder %s16, 1
    %p202 = scmp.ne.s32.totalorder %s197, %s199
    %p203 = scmp.eq.s32.totalorder %s16, 0
    %p204 = por %p202, %p203
    %p205 = scmp.ne.s32.totalorder %s197, %s199
    %p206 = scmp.eq.s32.totalorder %s21, 1
    %p207 = por %p205, %p206
    %p208 = scmp.ne.s32.totalorder %s199, %s200
    %p209 = scmp.eq.s32.totalorder %s21, 0
    %p210 = por %p208, %p209
    %p211 = scmp.ne.s32.totalorder %s199, %s200
    %p212 = scmp.eq.s32.totalorder %s22, 1
    %p213 = por %p211, %p212
    %p215 = scmp.ne.s32.totalorder %s200, %s214
    %p216 = scmp.eq.s32.totalorder %s22, 0
    %p217 = por %p215, %p216
    %s219 = sadd.s32 %s218, 1
    %p222 = scmp.eq.s32.totalorder %s16, 1
    %p223 = scmp.ne.s32.totalorder %s218, %s220
    %p224 = scmp.eq.s32.totalorder %s16, 0
    %p225 = por %p223, %p224
    %p226 = scmp.ne.s32.totalorder %s218, %s220
    %p227 = scmp.eq.s32.totalorder %s21, 1
    %p228 = por %p226, %p227
    %p229 = scmp.ne.s32.totalorder %s220, %s221
    %p230 = scmp.eq.s32.totalorder %s21, 0
    %p231 = por %p229, %p230
    %p232 = scmp.ne.s32.totalorder %s220, %s221
    %p233 = scmp.eq.s32.totalorder %s22, 1
    %p234 = por %p232, %p233
    %p236 = scmp.ne.s32.totalorder %s221, %s235
    %p237 = scmp.eq.s32.totalorder %s22, 0
    %p238 = por %p236, %p237
    %s239 = ssub.s32 %s16, %s23
    %p240 = scmp.eq.s32.totalorder %s239, 0
    %s242 = sadd.s32 %s241, 1
    %s243 = scalar_select %p240, %s241, %s242
    %p246 = pneg %p240
    %p247 = scmp.eq.s32.totalorder %s16, 1
    %p248 = por %p246, %p247
    %p249 = scmp.ne.s32.totalorder %s241, %s244
    %p250 = scmp.eq.s32.totalorder %s16, 0
    %p251 = por %p249, %p250
    %p252 = scmp.ne.s32.totalorder %s241, %s244
    %p253 = scmp.eq.s32.totalorder %s21, 1
    %p254 = por %p252, %p253
    %p255 = scmp.ne.s32.totalorder %s244, %s245
    %p256 = scmp.eq.s32.totalorder %s21, 0
    %p257 = por %p255, %p256
    %p258 = scmp.ne.s32.totalorder %s244, %s245
    %p259 = scmp.eq.s32.totalorder %s22, 1
    %p260 = por %p258, %p259
    %p262 = scmp.ne.s32.totalorder %s245, %s261
    %p263 = scmp.eq.s32.totalorder %s22, 0
    %p264 = por %p262, %p263
    %p265 = scmp.le.s32.totalorder 1, %s16
    %p266 = scmp.lt.s32.totalorder %s16, 3
    %p267 = pnand %p265, %p266
    %p268 = pneg %p267
    // Predicated region
    $region9: #{clip_vision_tower_forward.4} parent=5 // pred_check
      _
    $region10: #{clip_vision_tower_forward.4} parent=5 // pred_check_branch
      %270 = sbr.rel (%p267) target = $region12
    $region11: #{clip_vision_tower_forward.4} parent=5 // pred_region
      %s271 = ssub.s32 %s16, 1
      // Predicated region
      $region13: #{clip_vision_tower_forward.4} parent=11 // pred_check
        %p272 = pneg %p63
      $region14: #{clip_vision_tower_forward.4} parent=11 // pred_check_branch
        %274 = sbr.rel (%p272) target = $region16
      $region15: #{clip_vision_tower_forward.4} parent=11 // pred_region
        _
      $region16: #{clip_vision_tower_forward.4} parent=11 // pred_fallthru
        _
      // Predicated region
      $region17: #{clip_vision_tower_forward.4} parent=11 // pred_check
        %p275 = pneg %p84
      $region18: #{clip_vision_tower_forward.4} parent=11 // pred_check_branch
        %277 = sbr.rel (%p275) target = $region20
      $region19: #{clip_vision_tower_forward.4} parent=11 // pred_region
        _
      $region20: #{clip_vision_tower_forward.4} parent=11 // pred_fallthru
        _
      // Predicated region
      $region21: #{clip_vision_tower_forward.4} parent=11 // pred_check
        %p278 = pneg %p105
      $region22: #{clip_vision_tower_forward.4} parent=11 // pred_check_branch
        %280 = sbr.rel (%p278) target = $region24
      $region23: #{clip_vision_tower_forward.4} parent=11 // pred_region
        _
      $region24: #{clip_vision_tower_forward.4} parent=11 // pred_fallthru
        _
      // Predicated region
      $region25: #{clip_vision_tower_forward.4} parent=11 // pred_check
        %p281 = pneg %p126
      $region26: #{clip_vision_tower_forward.4} parent=11 // pred_check_branch
        %283 = sbr.rel (%p281) target = $region28
      $region27: #{clip_vision_tower_forward.4} parent=11 // pred_region
        _
      $region28: #{clip_vision_tower_forward.4} parent=11 // pred_fallthru
        _
      // Predicated region
      $region29: #{clip_vision_tower_forward.4} parent=11 // pred_check
        %p284 = pneg %p147
      $region30: #{clip_vision_tower_forward.4} parent=11 // pred_check_branch
        %286 = sbr.rel (%p284) target = $region32
      $region31: #{clip_vision_tower_forward.4} parent=11 // pred_region
        _
      $region32: #{clip_vision_tower_forward.4} parent=11 // pred_fallthru
        _
      // Predicated region
      $region33: #{clip_vision_tower_forward.4} parent=11 // pred_check
        %p287 = pneg %p168
      $region34: #{clip_vision_tower_forward.4} parent=11 // pred_check_branch
        %289 = sbr.rel (%p287) target = $region36
      $region35: #{clip_vision_tower_forward.4} parent=11 // pred_region
        _
      $region36: #{clip_vision_tower_forward.4} parent=11 // pred_fallthru
        _
      // Predicated region
      $region37: #{clip_vision_tower_forward.4} parent=11 // pred_check
        %p290 = pneg %p189
      $region38: #{clip_vision_tower_forward.4} parent=11 // pred_check_branch
        %292 = sbr.rel (%p290) target = $region40
      $region39: #{clip_vision_tower_forward.4} parent=11 // pred_region
        _
      $region40: #{clip_vision_tower_forward.4} parent=11 // pred_fallthru
        _
      // Predicated region
      $region41: #{clip_vision_tower_forward.4} parent=11 // pred_check
        %p293 = pneg %p210
      $region42: #{clip_vision_tower_forward.4} parent=11 // pred_check_branch
        %295 = sbr.rel (%p293) target = $region44
      $region43: #{clip_vision_tower_forward.4} parent=11 // pred_region
        _
      $region44: #{clip_vision_tower_forward.4} parent=11 // pred_fallthru
        _
      // Predicated region
      $region45: #{clip_vision_tower_forward.4} parent=11 // pred_check
        %p296 = pneg %p231
      $region46: #{clip_vision_tower_forward.4} parent=11 // pred_check_branch
        %298 = sbr.rel (%p296) target = $region48
      $region47: #{clip_vision_tower_forward.4} parent=11 // pred_region
        _
      $region48: #{clip_vision_tower_forward.4} parent=11 // pred_fallthru
        _
    $region12: #{clip_vision_tower_forward.4} parent=5 // pred_fallthru
      _
    %p299 = scmp.lt.s32.totalorder %s16, 2
    // Predicated region
    $region49: #{clip_vision_tower_forward.4} parent=5 // pred_check
      %p300 = pneg %p299
    $region50: #{clip_vision_tower_forward.4} parent=5 // pred_check_branch
      %302 = sbr.rel (%p300) target = $region52
    $region51: #{clip_vision_tower_forward.4} parent=5 // pred_region
      // Predicated region
      $region53: #{clip_vision_tower_forward.4} parent=51 // pred_check
        %p303 = pneg %p36
      $region54: #{clip_vision_tower_forward.4} parent=51 // pred_check_branch
        %305 = sbr.rel (%p303) target = $region56
      $region55: #{clip_vision_tower_forward.4} parent=51 // pred_region
        %p306 = scmp.lt.s32.totalorder %s16, 1
        %s307 = scalar_select %p306, %s16, 1
        %s308 = smul.addr %s307, 3
        %s309 = smul.addr %s308, 8
        %s310 = scalar_lea.vmem %s0, %s309
      $region56: #{clip_vision_tower_forward.4} parent=51 // pred_fallthru
        _
    $region52: #{clip_vision_tower_forward.4} parent=5 // pred_fallthru
      _
    %p311 = scmp.le.s32.totalorder 1, %s16
    %p312 = scmp.lt.s32.totalorder %s16, 3
    %p313 = pnand %p311, %p312
    %p314 = pneg %p313
    // Predicated region
    $region57: #{clip_vision_tower_forward.4} parent=5 // pred_check
      _
    $region58: #{clip_vision_tower_forward.4} parent=5 // pred_check_branch
      %316 = sbr.rel (%p313) target = $region60
    $region59: #{clip_vision_tower_forward.4} parent=5 // pred_region
      %s317 = ssub.s32 %s16, 1
      %p318 = scmp.lt.s32.totalorder %s21, 1
      %s319 = scalar_select %p318, %s21, 1
      %s320 = smul.addr %s319, 3
      %s321 = smul.addr %s320, 8
      %s322 = scalar_lea.vmem %s0, %s321
      %p323 = pneg %p42
      %p324 = pneg %p39
      %p325 = pneg %p63
      %p326 = pneg %p60
      %p327 = pneg %p84
      %p328 = pneg %p81
      %p329 = pneg %p105
      %p330 = pneg %p102
      %p331 = pneg %p126
      %p332 = pneg %p123
      %p333 = pneg %p147
      %p334 = pneg %p144
      %p335 = pneg %p168
      %p336 = pneg %p165
      %p337 = pneg %p189
      %p338 = pneg %p186
      %p339 = pneg %p210
      %p340 = pneg %p207
      %p341 = pneg %p231
      %p342 = pneg %p228
      %p343 = pneg %p257
      %p344 = pneg %p254
      %p345 = scmp.lt.s32.totalorder %s21, 1
      %s346 = scalar_select %p345, %s21, 1
      %s347 = smul.addr %s346, 3
      %s348 = smul.addr %s347, 8
      %s349 = scalar_lea.vmem %s10, %s348
      %p350 = scmp.lt.s32.totalorder %s21, 1
      %s351 = scalar_select %p350, %s21, 1
      %s352 = smul.addr %s351, 3
      %s353 = smul.addr %s352, 8
      %s354 = scalar_lea.vmem %s0, %s353
      %p355 = scmp.lt.s32.totalorder %s21, 1
      %s356 = scalar_select %p355, %s21, 1
      %s357 = smul.addr %s356, 3
      %s358 = smul.addr %s357, 8
      %s359 = scalar_lea.vmem %s10, %s358
      %v361 = vld [vmem:[%s354] sm:$0xff]
      %v362 = vld [vmem:[%s354 + $0x8] sm:$0xff]
      %v363 = vld [vmem:[%s354 + $0x10] sm:$0x1]
      %v364 = vld [vmem:[%s1] sm:$0xf]
      %365 = vadd.xlane.f32.xlu0 %v361
      %v366 = vpop.xlane.xlu0 %365
      %367 = vadd.xlane.f32.xlu0 %v362
      %v368 = vpop.xlane.xlu0 %367
      %vm369 = vcmask 1040384
      %v370 = vsel %vm369, %v363, 0.0
      %371 = vadd.xlane.f32.xlu0 %v370
      %v372 = vpop.xlane.xlu0 %371
      %v373 = vrcp.pop 128.0
      %v374 = vmul.f32 %v366, %v373
      %v375 = vmul.f32 %v368, %v373
      %v376 = vmul.f32 %v372, %v373
      %v377 = vsub.f32 %v361, %v374
      %v378 = vsub.f32 %v362, %v375
      %v379 = vsub.f32 %v363, %v376
      %v380 = vmul.f32 %v377, %v377
      %v381 = vmul.f32 %v378, %v378
      %v382 = vmul.f32 %v379, %v379
      %383 = vadd.xlane.f32.xlu0 %v380
      %v384 = vpop.xlane.xlu0 %383
      %385 = vadd.xlane.f32.xlu0 %v381
      %v386 = vpop.xlane.xlu0 %385
      %v387 = vsel %vm369, %v382, 0.0
      %388 = vadd.xlane.f32.xlu0 %v387
      %v389 = vpop.xlane.xlu0 %388
      %v390 = vmul.f32 %v384, %v373
      %v391 = vmul.f32 %v386, %v373
      %v392 = vmul.f32 %v389, %v373
      %v393 = vadd.f32 %v390, 1e-05
      %v394 = vadd.f32 %v391, 1e-05
      %v395 = vadd.f32 %v392, 1e-05
      %v396 = vrsqrt.pop %v393
      %v397 = vrsqrt.pop %v394
      %v398 = vrsqrt.pop %v395
      %v399 = vmul.f32 %v377, %v396
      %v400 = vmul.f32 %v378, %v397
      %v401 = vmul.f32 %v379, %v398
      %v402 = vlaneseq
      %v403 = vshrl.u32 %v402, 7
      %v404 = vsub.s32 0, %v403
      %v405 = vrot.slane %v364, %v404
      %v406 = vmul.f32 %v399, %v405
      %v407 = vmul.f32 %v400, %v405
      %v408 = vmul.f32 %v401, %v405
      %v409 = vlaneseq
      %v410 = vshrl.u32 %v409, 7
      %v411 = vsub.s32 1, %v410
      %v412 = vrot.slane %v364, %v411
      %v413 = vadd.f32 %v406, %v412
      %v414 = vadd.f32 %v407, %v412
      %v415 = vadd.f32 %v408, %v412
      %v416 = vpack.c.bf16 %v414, %v413
      %v417 = vpack.c.bf16 %v415, %v415
      %v418 = vld [vmem:[%s2] sm:$0xff]
      %v419 = vld [vmem:[%s2 + $0x8] sm:$0xf]
      %v420 = vld [vmem:[%s2 + $0xc] sm:$0xff]
      %v421 = vld [vmem:[%s2 + $0x14] sm:$0xf]
      %v422 = vld [vmem:[%s2 + $0x18] sm:$0xff]
      %v423 = vld [vmem:[%s2 + $0x20] sm:$0xf]
      %v424 = vld [vmem:[%s2 + $0x24] sm:$0xff]
      %v425 = vld [vmem:[%s2 + $0x2c] sm:$0xf]
      %v426 = vld [vmem:[%s2 + $0x30] sm:$0xff]
      %v427 = vld [vmem:[%s2 + $0x38] sm:$0xf]
      %v428 = vld [vmem:[%s2 + $0x3c] sm:$0xff]
      %v429 = vld [vmem:[%s2 + $0x44] sm:$0xf]
      %v430 = vld [vmem:[%s2 + $0x48] sm:$0xff]
      %v431 = vld [vmem:[%s2 + $0x50] sm:$0xf]
      %v432 = vld [vmem:[%s2 + $0x54] sm:$0xff]
      %v433 = vld [vmem:[%s2 + $0x5c] sm:$0xf]
      %v434 = vld [vmem:[%s2 + $0x60] sm:$0xff]
      %v435 = vld [vmem:[%s2 + $0x68] sm:$0xf]
      %v436 = vld [vmem:[%s2 + $0x6c] sm:$0xff]
      %v437 = vld [vmem:[%s2 + $0x74] sm:$0xf]
      %v438 = vld [vmem:[%s2 + $0x78] sm:$0xff]
      %v439 = vld [vmem:[%s2 + $0x80] sm:$0xf]
      %v440 = vld [vmem:[%s2 + $0x84] sm:$0xff]
      %v441 = vld [vmem:[%s2 + $0x8c] sm:$0xf]
      %v442 = vld [vmem:[%s2 + $0x90] sm:$0xff]
      %v443 = vld [vmem:[%s2 + $0x98] sm:$0xf]
      %v444 = vld [vmem:[%s2 + $0x9c] sm:$0xff]
      %v445 = vld [vmem:[%s2 + $0xa4] sm:$0xf]
      %v446 = vld [vmem:[%s2 + $0xa8] sm:$0xff]
      %v447 = vld [vmem:[%s2 + $0xb0] sm:$0xf]
      %v448 = vld [vmem:[%s2 + $0xb4] sm:$0xff]
      %v449 = vld [vmem:[%s2 + $0xbc] sm:$0xf]
      %v450 = vld [vmem:[%s3] sm:$0x7]
      %v452 = vlaneseq
      %v453 = vshrl.u32 %v452, 7
      %v454 = vsub.s32 0, %v453
      %v455 = vrot.slane %v450, %v454
      %v456 = vlaneseq
      %v457 = vshrl.u32 %v456, 7
      %v458 = vsub.s32 1, %v457
      %v459 = vrot.slane %v450, %v458
      %v460 = vlaneseq
      %v461 = vshrl.u32 %v460, 7
      %v462 = vsub.s32 2, %v461
      %v463 = vrot.slane %v450, %v462
      %v499 = vunpack.c.l.b16 %v418
      %v500 = vunpack.c.h.b16 %v418
      %v501 = vunpack.c.l.b16 %v419
      %v502 = vunpack.c.l.b16 %v420
      %v503 = vunpack.c.h.b16 %v420
      %v504 = vunpack.c.l.b16 %v421
      %v505 = vunpack.c.l.b16 %v422
      %v506 = vunpack.c.h.b16 %v422
      %v507 = vunpack.c.l.b16 %v423
      %v508 = vunpack.c.l.b16 %v424
      %v509 = vunpack.c.h.b16 %v424
      %v510 = vunpack.c.l.b16 %v425
      %v511 = vunpack.c.l.b16 %v426
      %v512 = vunpack.c.h.b16 %v426
      %v513 = vunpack.c.l.b16 %v427
      %v514 = vunpack.c.l.b16 %v428
      %v515 = vunpack.c.h.b16 %v428
      %v516 = vunpack.c.l.b16 %v429
      %v517 = vunpack.c.l.b16 %v430
      %v518 = vunpack.c.h.b16 %v430
      %v519 = vunpack.c.l.b16 %v431
      %v520 = vunpack.c.l.b16 %v432
      %v521 = vunpack.c.h.b16 %v432
      %v522 = vunpack.c.l.b16 %v433
      %v523 = vunpack.c.l.b16 %v434
      %v524 = vunpack.c.h.b16 %v434
      %v525 = vunpack.c.l.b16 %v435
      %v526 = vunpack.c.l.b16 %v436
      %v527 = vunpack.c.h.b16 %v436
      %v528 = vunpack.c.l.b16 %v437
      %v529 = vunpack.c.l.b16 %v438
      %v530 = vunpack.c.h.b16 %v438
      %v531 = vunpack.c.l.b16 %v439
      %v532 = vunpack.c.l.b16 %v440
      %v533 = vunpack.c.h.b16 %v440
      %v534 = vunpack.c.l.b16 %v441
      %v535 = vunpack.c.l.b16 %v442
      %v536 = vunpack.c.h.b16 %v442
      %v537 = vunpack.c.l.b16 %v443
      %v538 = vunpack.c.l.b16 %v444
      %v539 = vunpack.c.h.b16 %v444
      %v540 = vunpack.c.l.b16 %v445
      %v541 = vunpack.c.l.b16 %v446
      %v542 = vunpack.c.h.b16 %v446
      %v543 = vunpack.c.l.b16 %v447
      %v544 = vunpack.c.l.b16 %v448
      %v545 = vunpack.c.h.b16 %v448
      %v546 = vunpack.c.l.b16 %v449
      %v547 = vpack.c.b16 %v502, %v499
      %v548 = vpack.c.b16 %v503, %v500
      %v549 = vpack.c.b16 %v504, %v501
      %v550 = vpack.c.b16 %v508, %v505
      %v551 = vpack.c.b16 %v509, %v506
      %v552 = vpack.c.b16 %v510, %v507
      %v553 = vpack.c.b16 %v514, %v511
      %v554 = vpack.c.b16 %v515, %v512
      %v555 = vpack.c.b16 %v516, %v513
      %v556 = vpack.c.b16 %v520, %v517
      %v557 = vpack.c.b16 %v521, %v518
      %v558 = vpack.c.b16 %v522, %v519
      %v559 = vpack.c.b16 %v526, %v523
      %v560 = vpack.c.b16 %v527, %v524
      %v561 = vpack.c.b16 %v528, %v525
      %v562 = vpack.c.b16 %v532, %v529
      %v563 = vpack.c.b16 %v533, %v530
      %v564 = vpack.c.b16 %v534, %v531
      %v565 = vpack.c.b16 %v538, %v535
      %v566 = vpack.c.b16 %v539, %v536
      %v567 = vpack.c.b16 %v540, %v537
      %v568 = vpack.c.b16 %v544, %v541
      %v569 = vpack.c.b16 %v545, %v542
      %v570 = vpack.c.b16 %v546, %v543
      %595 = vmatprep.subr.bf16.mxu0 %v569
      %596 = vmatpush1.bf16.msra.mxu0 %v568
      %597 = vmatprep.subr.bf16.mxu0 %v566
      %598 = vmatpush1.bf16.msra.mxu0 %v565
      %599 = vmatprep.subr.bf16.mxu0 %v563
      %600 = vmatpush1.bf16.msra.mxu0 %v562
      %601 = vmatprep.subr.bf16.mxu0 %v560
      %602 = vmatpush1.bf16.msra.mxu0 %v559
      %603 = vmatprep.subr.bf16.mxu0 %v557
      %604 = vmatpush1.bf16.msra.mxu0 %v556
      %605 = vmatprep.subr.bf16.mxu0 %v554
      %606 = vmatpush1.bf16.msra.mxu0 %v553
      %607 = vmatprep.subr.bf16.mxu0 %v551
      %608 = vmatpush1.bf16.msra.mxu0 %v550
      %609 = vmatprep.subr.bf16.mxu0 %v548
      %610 = vmatpush1.bf16.msra.mxu0 %v547
      %611 = vmatprep.subr.bf16.mxu0 0
      %612 = vmatpush2.bf16.msra.mxu0 0
      %613 = vmatprep.subr.bf16.mxu0 0
      %614 = vmatpush2.bf16.msra.mxu0 0
      %615 = vmatprep.subr.bf16.mxu0 0
      %616 = vmatpush2.bf16.msra.mxu0 0
      %617 = vmatprep.subr.bf16.mxu0 0
      %618 = vmatpush2.bf16.msra.mxu0 0
      %619 = vmatprep.subr.bf16.mxu0 0
      %620 = vmatpush2.bf16.msra.mxu0 0
      %621 = vmatprep.subr.bf16.mxu0 0
      %622 = vmatpush2.bf16.msra.mxu0 0
      %623 = vmatprep.subr.bf16.mxu0 0
      %624 = vmatpush2.bf16.msra.mxu0 0
      %625 = vmatprep.subr.bf16.mxu0 0
      %626 = vmatpush2.bf16.msra.mxu0 0
      %627 = vmatprep.mubr.bf16.mxu0 0
      %628 = vmatmul.mubr.bf16.gmra.mxu0 %v416
      %v629 = vpop.f32.mrf.mxu0
      %v630 = vadd.f32 %v455, %v629
      %v631 = vpop.f32.mrf.mxu0
      %v632 = vadd.f32 %v459, %v631
      %v633 = vpop.f32.mrf.mxu0
      %v634 = vadd.f32 %v455, %v633
      %v635 = vpop.f32.mrf.mxu0
      %v636 = vadd.f32 %v459, %v635
      %637 = vmatprep.mubr.bf16.mxu0 0
      %638 = vmatmul.mubr.bf16.gmra.mxu0 %v417
      %v639 = vpop.f32.mrf.mxu0
      %v640 = vadd.f32 %v455, %v639
      %v641 = vpop.f32.mrf.mxu0
      %v642 = vadd.f32 %v459, %v641
      %v643 = vpop.f32.mrf.mxu0
      %v644 = vpop.f32.mrf.mxu0
      %645 = vdwg.mxu0
      %646 = vmatprep.subr.bf16.mxu0 0
      %647 = vmatpush1.bf16.msra.mxu0 %v570
      %648 = vmatprep.subr.bf16.mxu0 0
      %649 = vmatpush1.bf16.msra.mxu0 %v567
      %650 = vmatprep.subr.bf16.mxu0 0
      %651 = vmatpush1.bf16.msra.mxu0 %v564
      %652 = vmatprep.subr.bf16.mxu0 0
      %653 = vmatpush1.bf16.msra.mxu0 %v561
      %654 = vmatprep.subr.bf16.mxu0 0
      %655 = vmatpush1.bf16.msra.mxu0 %v558
      %656 = vmatprep.subr.bf16.mxu0 0
      %657 = vmatpush1.bf16.msra.mxu0 %v555
      %658 = vmatprep.subr.bf16.mxu0 0
      %659 = vmatpush1.bf16.msra.mxu0 %v552
      %660 = vmatprep.subr.bf16.mxu0 0
      %661 = vmatpush1.bf16.msra.mxu0 %v549
      %662 = vmatprep.subr.bf16.mxu0 0
      %663 = vmatpush2.bf16.msra.mxu0 0
      %664 = vmatprep.subr.bf16.mxu0 0
      %665 = vmatpush2.bf16.msra.mxu0 0
      %666 = vmatprep.subr.bf16.mxu0 0
      %667 = vmatpush2.bf16.msra.mxu0 0
      %668 = vmatprep.subr.bf16.mxu0 0
      %669 = vmatpush2.bf16.msra.mxu0 0
      %670 = vmatprep.subr.bf16.mxu0 0
      %671 = vmatpush2.bf16.msra.mxu0 0
      %672 = vmatprep.subr.bf16.mxu0 0
      %673 = vmatpush2.bf16.msra.mxu0 0
      %674 = vmatprep.subr.bf16.mxu0 0
      %675 = vmatpush2.bf16.msra.mxu0 0
      %676 = vmatprep.subr.bf16.mxu0 0
      %677 = vmatpush2.bf16.msra.mxu0 0
      %678 = vmatprep.mubr.bf16.mxu0 0
      %679 = vmatmul.mubr.bf16.gmra.mxu0 %v416
      %v680 = vpop.f32.mrf.mxu0
      %v681 = vadd.f32 %v463, %v680
      %v682 = vpop.f32.mrf.mxu0
      %v683 = vpop.f32.mrf.mxu0
      %v684 = vadd.f32 %v463, %v683
      %v685 = vpop.f32.mrf.mxu0
      %686 = vmatprep.mubr.bf16.mxu0 0
      %687 = vmatmul.mubr.bf16.gmra.mxu0 %v417
      %v688 = vpop.f32.mrf.mxu0
      %v689 = vadd.f32 %v463, %v688
      %v690 = vpop.f32.mrf.mxu0
      %v691 = vpop.f32.mrf.mxu0
      %v692 = vpop.f32.mrf.mxu0
      %693 = vdwg.mxu0
      %v694 = vpack.c.bf16 %v634, %v630
      %v695 = vpack.c.bf16 %v640, %v640
      %v698 = vunpack.c.l.b16 %v694
      %v699 = vunpack.c.h.b16 %v694
      %v700 = vunpack.c.l.b16 %v695
      %v701 = vpack.c.b16 %v698, %v698
      %v702 = vpack.c.b16 %v699, %v699
      %v703 = vpack.c.b16 %v700, %v700
      %vm707 = vcmask 257024
      %708 = vst.msk [vmem:[#allocation2] sm:$0xf] %vm707, %v701
      %709 = vst.msk [vmem:[#allocation2 + $0x4] sm:$0xf] %vm707, %v702
      %vm710 = vcmask 253952
      %vm711 = vsmask.f32 256
      %vm712 = vmand %vm710, %vm711
      %v713 = vld [vmem:[#allocation2 + $0x8] sm:$0x1]
      %v714 = vsel %vm712, %v703, %v713
      %715 = vst [vmem:[#allocation2 + $0x8] sm:$0x1] %v714
      %v716 = vpack.c.bf16 %v636, %v632
      %v717 = vpack.c.bf16 %v642, %v642
      %v720 = vunpack.c.l.b16 %v716
      %v721 = vunpack.c.h.b16 %v716
      %v722 = vunpack.c.l.b16 %v717
      %v723 = vpack.c.b16 %v720, %v720
      %v724 = vpack.c.b16 %v721, %v721
      %v725 = vpack.c.b16 %v722, %v722
      %729 = vst.msk [vmem:[#allocation3] sm:$0xf] %vm707, %v723
      %730 = vst.msk [vmem:[#allocation3 + $0x4] sm:$0xf] %vm707, %v724
      %v731 = vld [vmem:[#allocation3 + $0x8] sm:$0x1]
      %v732 = vsel %vm712, %v725, %v731
      %733 = vst [vmem:[#allocation3 + $0x8] sm:$0x1] %v732
      %v734 = vpack.c.bf16 %v684, %v681
      %v735 = vpack.c.bf16 %v689, %v689
      %v738 = vunpack.c.l.b16 %v734
      %v739 = vunpack.c.h.b16 %v734
      %v740 = vunpack.c.l.b16 %v735
      %v741 = vpack.c.b16 %v738, %v738
      %v742 = vpack.c.b16 %v739, %v739
      %v743 = vpack.c.b16 %v740, %v740
      %747 = vst.msk [vmem:[#allocation4] sm:$0xf] %vm707, %v741
      %748 = vst.msk [vmem:[#allocation4 + $0x4] sm:$0xf] %vm707, %v742
      %v749 = vld [vmem:[#allocation4 + $0x8] sm:$0x1]
      %v750 = vsel %vm712, %v743, %v749
      %751 = vst [vmem:[#allocation4 + $0x8] sm:$0x1] %v750
      %752 = vrot.lane.b32.xlu0 %v701, 96
      %v753 = vpop.permute.xlu0 %752
      %754 = vrot.lane.b32.xlu0 %v702, 96
      %v755 = vpop.permute.xlu0 %754
      %756 = vrot.lane.b32.xlu0 %v703, 96
      %v757 = vpop.permute.xlu0 %756
      %s761 = scalar_lea.vmem [#allocation2], 12
      %762 = vst.msk [vmem:[%s761] sm:$0xf] %vm707, %v753
      %763 = vst.msk [vmem:[%s761 + $0x4] sm:$0xf] %vm707, %v755
      %v764 = vld [vmem:[%s761 + $0x8] sm:$0x1]
      %v765 = vsel %vm712, %v757, %v764
      %766 = vst [vmem:[%s761 + $0x8] sm:$0x1] %v765
      %767 = vrot.lane.b32.xlu0 %v723, 96
      %v768 = vpop.permute.xlu0 %767
      %769 = vrot.lane.b32.xlu0 %v724, 96
      %v770 = vpop.permute.xlu0 %769
      %771 = vrot.lane.b32.xlu0 %v725, 96
      %v772 = vpop.permute.xlu0 %771
      %s776 = scalar_lea.vmem [#allocation3], 12
      %777 = vst.msk [vmem:[%s776] sm:$0xf] %vm707, %v768
      %778 = vst.msk [vmem:[%s776 + $0x4] sm:$0xf] %vm707, %v770
      %v779 = vld [vmem:[%s776 + $0x8] sm:$0x1]
      %v780 = vsel %vm712, %v772, %v779
      %781 = vst [vmem:[%s776 + $0x8] sm:$0x1] %v780
      %782 = vrot.lane.b32.xlu0 %v741, 96
      %v783 = vpop.permute.xlu0 %782
      %784 = vrot.lane.b32.xlu0 %v742, 96
      %v785 = vpop.permute.xlu0 %784
      %786 = vrot.lane.b32.xlu0 %v743, 96
      %v787 = vpop.permute.xlu0 %786
      %s791 = scalar_lea.vmem [#allocation4], 12
      %792 = vst.msk [vmem:[%s791] sm:$0xf] %vm707, %v783
      %793 = vst.msk [vmem:[%s791 + $0x4] sm:$0xf] %vm707, %v785
      %v794 = vld [vmem:[%s791 + $0x8] sm:$0x1]
      %v795 = vsel %vm712, %v787, %v794
      %796 = vst [vmem:[%s791 + $0x8] sm:$0x1] %v795
      %797 = vrot.lane.b32.xlu0 %v701, 64
      %v798 = vpop.permute.xlu0 %797
      %799 = vrot.lane.b32.xlu0 %v702, 64
      %v800 = vpop.permute.xlu0 %799
      %801 = vrot.lane.b32.xlu0 %v703, 64
      %v802 = vpop.permute.xlu0 %801
      %s806 = scalar_lea.vmem [#allocation2], 24
      %807 = vst.msk [vmem:[%s806] sm:$0xf] %vm707, %v798
      %808 = vst.msk [vmem:[%s806 + $0x4] sm:$0xf] %vm707, %v800
      %v809 = vld [vmem:[%s806 + $0x8] sm:$0x1]
      %v810 = vsel %vm712, %v802, %v809
      %811 = vst [vmem:[%s806 + $0x8] sm:$0x1] %v810
      %812 = vrot.lane.b32.xlu0 %v723, 64
      %v813 = vpop.permute.xlu0 %812
      %814 = vrot.lane.b32.xlu0 %v724, 64
      %v815 = vpop.permute.xlu0 %814
      %816 = vrot.lane.b32.xlu0 %v725, 64
      %v817 = vpop.permute.xlu0 %816
      %s821 = scalar_lea.vmem [#allocation3], 24
      %822 = vst.msk [vmem:[%s821] sm:$0xf] %vm707, %v813
      %823 = vst.msk [vmem:[%s821 + $0x4] sm:$0xf] %vm707, %v815
      %v824 = vld [vmem:[%s821 + $0x8] sm:$0x1]
      %v825 = vsel %vm712, %v817, %v824
      %826 = vst [vmem:[%s821 + $0x8] sm:$0x1] %v825
      %827 = vrot.lane.b32.xlu0 %v741, 64
      %v828 = vpop.permute.xlu0 %827
      %829 = vrot.lane.b32.xlu0 %v742, 64
      %v830 = vpop.permute.xlu0 %829
      %831 = vrot.lane.b32.xlu0 %v743, 64
      %v832 = vpop.permute.xlu0 %831
      %s836 = scalar_lea.vmem [#allocation4], 24
      %837 = vst.msk [vmem:[%s836] sm:$0xf] %vm707, %v828
      %838 = vst.msk [vmem:[%s836 + $0x4] sm:$0xf] %vm707, %v830
      %v839 = vld [vmem:[%s836 + $0x8] sm:$0x1]
      %v840 = vsel %vm712, %v832, %v839
      %841 = vst [vmem:[%s836 + $0x8] sm:$0x1] %v840
      %842 = vrot.lane.b32.xlu0 %v701, 32
      %v843 = vpop.permute.xlu0 %842
      %844 = vrot.lane.b32.xlu0 %v702, 32
      %v845 = vpop.permute.xlu0 %844
      %846 = vrot.lane.b32.xlu0 %v703, 32
      %v847 = vpop.permute.xlu0 %846
      %s851 = scalar_lea.vmem [#allocation2], 36
      %852 = vst.msk [vmem:[%s851] sm:$0xf] %vm707, %v843
      %853 = vst.msk [vmem:[%s851 + $0x4] sm:$0xf] %vm707, %v845
      %v854 = vld [vmem:[%s851 + $0x8] sm:$0x1]
      %v855 = vsel %vm712, %v847, %v854
      %856 = vst [vmem:[%s851 + $0x8] sm:$0x1] %v855
      %857 = vrot.lane.b32.xlu0 %v723, 32
      %v858 = vpop.permute.xlu0 %857
      %859 = vrot.lane.b32.xlu0 %v724, 32
      %v860 = vpop.permute.xlu0 %859
      %861 = vrot.lane.b32.xlu0 %v725, 32
      %v862 = vpop.permute.xlu0 %861
      %s866 = scalar_lea.vmem [#allocation3], 36
      %867 = vst.msk [vmem:[%s866] sm:$0xf] %vm707, %v858
      %868 = vst.msk [vmem:[%s866 + $0x4] sm:$0xf] %vm707, %v860
      %v869 = vld [vmem:[%s866 + $0x8] sm:$0x1]
      %v870 = vsel %vm712, %v862, %v869
      %871 = vst [vmem:[%s866 + $0x8] sm:$0x1] %v870
      %872 = vrot.lane.b32.xlu0 %v741, 32
      %v873 = vpop.permute.xlu0 %872
      %874 = vrot.lane.b32.xlu0 %v742, 32
      %v875 = vpop.permute.xlu0 %874
      %876 = vrot.lane.b32.xlu0 %v743, 32
      %v877 = vpop.permute.xlu0 %876
      %s881 = scalar_lea.vmem [#allocation4], 36
      %882 = vst.msk [vmem:[%s881] sm:$0xf] %vm707, %v873
      %883 = vst.msk [vmem:[%s881 + $0x4] sm:$0xf] %vm707, %v875
      %v884 = vld [vmem:[%s881 + $0x8] sm:$0x1]
      %v885 = vsel %vm712, %v877, %v884
      %886 = vst [vmem:[%s881 + $0x8] sm:$0x1] %v885
      loop: start=0, step=1, limit=4
      $region61: #{clip_vision_tower_forward.4} parent=59 // loop_pre_header
        _
      $region62: #{clip_vision_tower_forward.4} parent=59 // loop_header
        %s888 = sphi 0, %s892
        %p889 = scmp.ge.s32.totalorder %s888, 4
      $region63: #{clip_vision_tower_forward.4} parent=59 // loop_header_branch
        %891 = sbr.rel (%p889) target = $region67
      $region64: #{clip_vision_tower_forward.4} parent=59 // loop_body
        %s893 = smul.u32 %s888, 3
        %s894 = smul.addr %s893, 4
        %s895 = scalar_lea.vmem [#allocation2], %s894
        %v896 = vld [vmem:[%s895] sm:$0xf]
        %v897 = vld [vmem:[%s895 + $0x4] sm:$0xf]
        %v898 = vld [vmem:[%s895 + $0x8] sm:$0x1]
        %s899 = smul.addr %s893, 4
        %s900 = scalar_lea.vmem [#allocation3], %s899
        %v901 = vld [vmem:[%s900] sm:$0xf]
        %v902 = vld [vmem:[%s900 + $0x4] sm:$0xf]
        %v903 = vld [vmem:[%s900 + $0x8] sm:$0x1]
        %s904 = smul.addr %s893, 4
        %s905 = scalar_lea.vmem [#allocation4], %s904
        %v906 = vld [vmem:[%s905] sm:$0xf]
        %v907 = vld [vmem:[%s905 + $0x4] sm:$0xf]
        %v908 = vld [vmem:[%s905 + $0x8] sm:$0x1]
        %v912 = vunpack.c.l.b16 %v896
        %v913 = vunpack.c.l.b16 %v897
        %v914 = vunpack.c.l.b16 %v898
        %v915 = vpack.c.b16 %v913, %v912
        %v916 = vpack.c.b16 %v914, %v914
        %v920 = vunpack.c.l.b16 %v901
        %v921 = vunpack.c.l.b16 %v902
        %v922 = vunpack.c.l.b16 %v903
        %v923 = vpack.c.b16 %v921, %v920
        %v924 = vpack.c.b16 %v922, %v922
        %vm925 = vcmask 261120
        %v927 = vsel %vm925, %v915, 0
        %v930 = vsel %vm925, %v916, 0
        %v933 = vsel %vm925, %v923, 0
        %v936 = vsel %vm925, %v924, 0
        %938 = vmatprep.subr.bf16.mxu0 0
        %939 = vmatpush1.bf16.xpose.msra.mxu0 0
        %940 = vmatprep.subr.bf16.mxu0 0
        %941 = vmatpush1.bf16.xpose.msra.mxu0 0
        %942 = vmatprep.subr.bf16.mxu0 0
        %943 = vmatpush1.bf16.xpose.msra.mxu0 0
        %944 = vmatprep.subr.bf16.mxu0 0
        %945 = vmatpush1.bf16.xpose.msra.mxu0 0
        %946 = vmatprep.subr.bf16.mxu0 0
        %947 = vmatpush1.bf16.xpose.msra.mxu0 0
        %948 = vmatprep.subr.bf16.mxu0 0
        %949 = vmatpush1.bf16.xpose.msra.mxu0 0
        %950 = vmatprep.subr.bf16.mxu0 0
        %951 = vmatpush1.bf16.xpose.msra.mxu0 %v936
        %952 = vmatprep.subr.bf16.mxu0 0
        %953 = vmatpush1.bf16.xpose.msra.mxu0 %v933
        %954 = vmatprep.subr.bf16.mxu0 0
        %955 = vmatpush2.bf16.xpose.msra.mxu0 0
        %956 = vmatprep.subr.bf16.mxu0 0
        %957 = vmatpush2.bf16.xpose.msra.mxu0 0
        %958 = vmatprep.subr.bf16.mxu0 0
        %959 = vmatpush2.bf16.xpose.msra.mxu0 0
        %960 = vmatprep.subr.bf16.mxu0 0
        %961 = vmatpush2.bf16.xpose.msra.mxu0 0
        %962 = vmatprep.subr.bf16.mxu0 0
        %963 = vmatpush2.bf16.xpose.msra.mxu0 0
        %964 = vmatprep.subr.bf16.mxu0 0
        %965 = vmatpush2.bf16.xpose.msra.mxu0 0
        %966 = vmatprep.subr.bf16.mxu0 0
        %967 = vmatpush2.bf16.xpose.msra.mxu0 0
        %968 = vmatprep.subr.bf16.mxu0 0
        %969 = vmatpush2.bf16.xpose.msra.mxu0 0
        %970 = vmatprep.mubr.bf16.mxu0 0
        %971 = vmatmul.mubr.bf16.gmra.mxu0 %v927
        %v972 = vpop.f32.mrf.mxu0
        %v973 = vadd.f32 0.0, %v972
        %v974 = vpop.f32.mrf.mxu0
        %v975 = vpop.f32.mrf.mxu0
        %v976 = vadd.f32 0.0, %v975
        %v977 = vpop.f32.mrf.mxu0
        %978 = vmatprep.mubr.bf16.mxu0 0
        %979 = vmatmul.mubr.bf16.gmra.mxu0 %v930
        %v980 = vpop.f32.mrf.mxu0
        %v981 = vadd.f32 0.0, %v980
        %v982 = vpop.f32.mrf.mxu0
        %v983 = vpop.f32.mrf.mxu0
        %v984 = vpop.f32.mrf.mxu0
        %985 = vdwg.mxu0
        %vm986 = vcmask 138240
        %v987 = vsel %vm986, %v973, -inf
        %988 = vmax.xlane.f32.xlu0 %v987
        %v989 = vpop.xlane.xlu0 %988
        %v990 = vsel %vm986, %v976, -inf
        %991 = vmax.xlane.f32.xlu0 %v990
        %v992 = vpop.xlane.xlu0 %991
        %vm993 = vcmask 131072
        %v994 = vsel %vm993, %v981, -inf
        %995 = vmax.xlane.f32.xlu0 %v994
        %v996 = vpop.xlane.xlu0 %995
        %v997 = vsub.f32 %v973, %v989
        %v998 = vsub.f32 %v976, %v992
        %v999 = vsub.f32 %v981, %v996
        %v1000 = vmul.f32 %v997, 1.442695
        %v1001 = vpow.pop %v1000
        %v1002 = vmul.f32 %v998, 1.442695
        %v1003 = vpow.pop %v1002
        %v1004 = vmul.f32 %v999, 1.442695
        %v1005 = vpow.pop %v1004
        %v1006 = vsel %vm986, %v1001, 0.0
        %1007 = vadd.xlane.f32.xlu0 %v1006
        %v1008 = vpop.xlane.xlu0 %1007
        %v1009 = vsel %vm986, %v1003, 0.0
        %1010 = vadd.xlane.f32.xlu0 %v1009
        %v1011 = vpop.xlane.xlu0 %1010
        %v1012 = vsel %vm993, %v1005, 0.0
        %1013 = vadd.xlane.f32.xlu0 %v1012
        %v1014 = vpop.xlane.xlu0 %1013
        %v1015 = vrcp.pop %v1008
        %v1016 = vrcp.pop %v1011
        %v1017 = vrcp.pop %v1014
        %v1018 = vmul.f32 %v1001, %v1015
        %v1019 = vmul.f32 %v1003, %v1016
        %v1020 = vmul.f32 %v1005, %v1017
        %v1021 = vpack.c.bf16 %v1019, %v1018
        %v1022 = vpack.c.bf16 %v1020, %v1020
        %v1026 = vunpack.c.l.b16 %v906
        %v1027 = vunpack.c.l.b16 %v907
        %v1028 = vunpack.c.l.b16 %v908
        %v1029 = vpack.c.b16 %v1027, %v1026
        %v1030 = vpack.c.b16 %v1028, %v1028
        %v1033 = vsel %vm986, %v1021, 0
        %v1036 = vsel %vm986, %v1022, 0
        %v1038 = vsel 0, 4294967295, 65535
        %v1039 = vsel %vm369, %v1038, 0
        %v1041 = vand.u32 %v1030, %v1039
        %1043 = vmatprep.subr.bf16.mxu0 0
        %1044 = vmatpush1.bf16.msra.mxu0 0
        %1045 = vmatprep.subr.bf16.mxu0 0
        %1046 = vmatpush1.bf16.msra.mxu0 0
        %1047 = vmatprep.subr.bf16.mxu0 0
        %1048 = vmatpush1.bf16.msra.mxu0 0
        %1049 = vmatprep.subr.bf16.mxu0 0
        %1050 = vmatpush1.bf16.msra.mxu0 0
        %1051 = vmatprep.subr.bf16.mxu0 0
        %1052 = vmatpush1.bf16.msra.mxu0 0
        %1053 = vmatprep.subr.bf16.mxu0 0
        %1054 = vmatpush1.bf16.msra.mxu0 0
        %1055 = vmatprep.subr.bf16.mxu0 0
        %1056 = vmatpush1.bf16.msra.mxu0 %v1041
        %1057 = vmatprep.subr.bf16.mxu0 0
        %1058 = vmatpush1.bf16.msra.mxu0 %v1029
        %1059 = vmatprep.subr.bf16.mxu0 0
        %1060 = vmatpush2.bf16.msra.mxu0 0
        %1061 = vmatprep.subr.bf16.mxu0 0
        %1062 = vmatpush2.bf16.msra.mxu0 0
        %1063 = vmatprep.subr.bf16.mxu0 0
        %1064 = vmatpush2.bf16.msra.mxu0 0
        %1065 = vmatprep.subr.bf16.mxu0 0
        %1066 = vmatpush2.bf16.msra.mxu0 0
        %1067 = vmatprep.subr.bf16.mxu0 0
        %1068 = vmatpush2.bf16.msra.mxu0 0
        %1069 = vmatprep.subr.bf16.mxu0 0
        %1070 = vmatpush2.bf16.msra.mxu0 0
        %1071 = vmatprep.subr.bf16.mxu0 0
        %1072 = vmatpush2.bf16.msra.mxu0 0
        %1073 = vmatprep.subr.bf16.mxu0 0
        %1074 = vmatpush2.bf16.msra.mxu0 0
        %1075 = vmatprep.mubr.bf16.mxu0 0
        %1076 = vmatmul.mubr.bf16.gmra.mxu0 %v1033
        %v1077 = vpop.f32.mrf.mxu0
        %v1078 = vadd.f32 0.0, %v1077
        %v1079 = vpop.f32.mrf.mxu0
        %v1080 = vpop.f32.mrf.mxu0
        %v1081 = vadd.f32 0.0, %v1080
        %v1082 = vpop.f32.mrf.mxu0
        %1083 = vmatprep.mubr.bf16.mxu0 0
        %1084 = vmatmul.mubr.bf16.gmra.mxu0 %v1036
        %v1085 = vpop.f32.mrf.mxu0
        %v1086 = vadd.f32 0.0, %v1085
        %v1087 = vpop.f32.mrf.mxu0
        %v1088 = vpop.f32.mrf.mxu0
        %v1089 = vpop.f32.mrf.mxu0
        %1090 = vdwg.mxu0
        %s1091 = smul.u32 %s888, 24
        %s1092 = scalar_lea.vmem [#allocation5], %s1091
        %1093 = vst.msk [vmem:[%s1092] sm:$0xff] %vm925, %v1078
        %1094 = vst.msk [vmem:[%s1092 + $0x8] sm:$0xff] %vm925, %v1081
        %vm1095 = vcmask 253952
        %1096 = vst.msk [vmem:[%s1092 + $0x10] sm:$0x1] %vm1095, %v1086
      $region65: #{clip_vision_tower_forward.4} parent=59 // loop_footer
        %s892 = sadd.s32 1, %s888
      $region66: #{clip_vision_tower_forward.4} parent=59 // loop_footer_branch
        %887 = sbr.rel target = $region62
      $region67: #{clip_vision_tower_forward.4} parent=59 // loop_exit
        _
      %v1097 = vld [vmem:[#allocation5] sm:$0xff]
      %v1098 = vld [vmem:[#allocation5 + $0x8] sm:$0xff]
      %v1099 = vld [vmem:[#allocation5 + $0x10] sm:$0x1]
      %s1100 = scalar_lea.vmem [#allocation5], 24
      %v1101 = vld [vmem:[%s1100] sm:$0xff]
      %v1102 = vld [vmem:[%s1100 + $0x8] sm:$0xff]
      %v1103 = vld [vmem:[%s1100 + $0x10] sm:$0x1]
      %s1104 = scalar_lea.vmem [#allocation5], 48
      %v1105 = vld [vmem:[%s1104] sm:$0xff]
      %v1106 = vld [vmem:[%s1104 + $0x8] sm:$0xff]
      %v1107 = vld [vmem:[%s1104 + $0x10] sm:$0x1]
      %s1108 = scalar_lea.vmem [#allocation5], 72
      %v1109 = vld [vmem:[%s1108] sm:$0xff]
      %v1110 = vld [vmem:[%s1108 + $0x8] sm:$0xff]
      %v1111 = vld [vmem:[%s1108 + $0x10] sm:$0x1]
      %1115 = vrot.lane.b32.xlu0 %v1101, 32
      %v1116 = vpop.permute.xlu0 %1115
      %1117 = vrot.lane.b32.xlu0 %v1102, 32
      %v1118 = vpop.permute.xlu0 %1117
      %1119 = vrot.lane.b32.xlu0 %v1103, 32
      %v1120 = vpop.permute.xlu0 %1119
      %1127 = vrot.lane.b32.xlu0 %v1105, 64
      %v1128 = vpop.permute.xlu0 %1127
      %1129 = vrot.lane.b32.xlu0 %v1106, 64
      %v1130 = vpop.permute.xlu0 %1129
      %1131 = vrot.lane.b32.xlu0 %v1107, 64
      %v1132 = vpop.permute.xlu0 %1131
      %1139 = vrot.lane.b32.xlu0 %v1109, 96
      %v1140 = vpop.permute.xlu0 %1139
      %1141 = vrot.lane.b32.xlu0 %v1110, 96
      %v1142 = vpop.permute.xlu0 %1141
      %1143 = vrot.lane.b32.xlu0 %v1111, 96
      %v1144 = vpop.permute.xlu0 %1143
      %vm1148 = vcmask 261120
      %v1149 = vsel %vm1148, %v1097, %v1116
      %v1150 = vsel %vm1148, %v1098, %v1118
      %v1151 = vsel %vm1148, %v1099, %v1120
      %vm1152 = vcmask 523264
      %v1153 = vsel %vm1152, %v1149, %v1128
      %v1154 = vsel %vm1152, %v1150, %v1130
      %v1155 = vsel %vm1152, %v1151, %v1132
      %vm1156 = vcmask 785408
      %v1157 = vsel %vm1156, %v1153, %v1140
      %v1158 = vsel %vm1156, %v1154, %v1142
      %v1159 = vsel %vm1156, %v1155, %v1144
      %v1160 = vpack.c.bf16 %v1158, %v1157
      %v1161 = vpack.c.bf16 %v1159, %v1159
      %v1162 = vld [vmem:[%s4] sm:$0xf]
      %v1163 = vld [vmem:[%s4 + $0x4] sm:$0xf]
      %v1164 = vld [vmem:[%s4 + $0x8] sm:$0xf]
      %v1165 = vld [vmem:[%s4 + $0xc] sm:$0xf]
      %v1166 = vld [vmem:[%s4 + $0x10] sm:$0xf]
      %v1167 = vld [vmem:[%s4 + $0x14] sm:$0xf]
      %v1168 = vld [vmem:[%s4 + $0x18] sm:$0xf]
      %v1169 = vld [vmem:[%s4 + $0x1c] sm:$0xf]
      %v1170 = vld [vmem:[%s4 + $0x20] sm:$0xf]
      %v1171 = vld [vmem:[%s4 + $0x24] sm:$0xf]
      %v1172 = vld [vmem:[%s4 + $0x28] sm:$0xf]
      %v1173 = vld [vmem:[%s4 + $0x2c] sm:$0xf]
      %v1174 = vld [vmem:[%s4 + $0x30] sm:$0xf]
      %v1175 = vld [vmem:[%s4 + $0x34] sm:$0xf]
      %v1176 = vld [vmem:[%s4 + $0x38] sm:$0xf]
      %v1177 = vld [vmem:[%s4 + $0x3c] sm:$0xf]
      %v1178 = vld [vmem:[%s5] sm:$0x1]
      %v1180 = vlaneseq
      %v1181 = vshrl.u32 %v1180, 7
      %v1182 = vsub.s32 0, %v1181
      %v1183 = vrot.slane %v1178, %v1182
      %v1201 = vunpack.c.l.b16 %v1162
      %v1202 = vunpack.c.l.b16 %v1163
      %v1203 = vunpack.c.l.b16 %v1164
      %v1204 = vunpack.c.l.b16 %v1165
      %v1205 = vunpack.c.l.b16 %v1166
      %v1206 = vunpack.c.l.b16 %v1167
      %v1207 = vunpack.c.l.b16 %v1168
      %v1208 = vunpack.c.l.b16 %v1169
      %v1209 = vunpack.c.l.b16 %v1170
      %v1210 = vunpack.c.l.b16 %v1171
      %v1211 = vunpack.c.l.b16 %v1172
      %v1212 = vunpack.c.l.b16 %v1173
      %v1213 = vunpack.c.l.b16 %v1174
      %v1214 = vunpack.c.l.b16 %v1175
      %v1215 = vunpack.c.l.b16 %v1176
      %v1216 = vunpack.c.l.b16 %v1177
      %v1217 = vpack.c.b16 %v1202, %v1201
      %v1218 = vpack.c.b16 %v1204, %v1203
      %v1219 = vpack.c.b16 %v1206, %v1205
      %v1220 = vpack.c.b16 %v1208, %v1207
      %v1221 = vpack.c.b16 %v1210, %v1209
      %v1222 = vpack.c.b16 %v1212, %v1211
      %v1223 = vpack.c.b16 %v1214, %v1213
      %v1224 = vpack.c.b16 %v1216, %v1215
      %1233 = vmatprep.subr.bf16.mxu0 0
      %1234 = vmatpush1.bf16.msra.mxu0 %v1224
      %1235 = vmatprep.subr.bf16.mxu0 0
      %1236 = vmatpush1.bf16.msra.mxu0 %v1223
      %1237 = vmatprep.subr.bf16.mxu0 0
      %1238 = vmatpush1.bf16.msra.mxu0 %v1222
      %1239 = vmatprep.subr.bf16.mxu0 0
      %1240 = vmatpush1.bf16.msra.mxu0 %v1221
      %1241 = vmatprep.subr.bf16.mxu0 0
      %1242 = vmatpush1.bf16.msra.mxu0 %v1220
      %1243 = vmatprep.subr.bf16.mxu0 0
      %1244 = vmatpush1.bf16.msra.mxu0 %v1219
      %1245 = vmatprep.subr.bf16.mxu0 0
      %1246 = vmatpush1.bf16.msra.mxu0 %v1218
      %1247 = vmatprep.subr.bf16.mxu0 0
      %1248 = vmatpush1.bf16.msra.mxu0 %v1217
      %1249 = vmatprep.subr.bf16.mxu0 0
      %1250 = vmatpush2.bf16.msra.mxu0 0
      %1251 = vmatprep.subr.bf16.mxu0 0
      %1252 = vmatpush2.bf16.msra.mxu0 0
      %1253 = vmatprep.subr.bf16.mxu0 0
      %1254 = vmatpush2.bf16.msra.mxu0 0
      %1255 = vmatprep.subr.bf16.mxu0 0
      %1256 = vmatpush2.bf16.msra.mxu0 0
      %1257 = vmatprep.subr.bf16.mxu0 0
      %1258 = vmatpush2.bf16.msra.mxu0 0
      %1259 = vmatprep.subr.bf16.mxu0 0
      %1260 = vmatpush2.bf16.msra.mxu0 0
      %1261 = vmatprep.subr.bf16.mxu0 0
      %1262 = vmatpush2.bf16.msra.mxu0 0
      %1263 = vmatprep.subr.bf16.mxu0 0
      %1264 = vmatpush2.bf16.msra.mxu0 0
      %1265 = vmatprep.mubr.bf16.mxu0 0
      %1266 = vmatmul.mubr.bf16.gmra.mxu0 %v1160
      %v1267 = vpop.f32.mrf.mxu0
      %v1268 = vadd.f32 %v1183, %v1267
      %v1269 = vpop.f32.mrf.mxu0
      %v1270 = vpop.f32.mrf.mxu0
      %v1271 = vadd.f32 %v1183, %v1270
      %v1272 = vpop.f32.mrf.mxu0
      %1273 = vmatprep.mubr.bf16.mxu0 0
      %1274 = vmatmul.mubr.bf16.gmra.mxu0 %v1161
      %v1275 = vpop.f32.mrf.mxu0
      %v1276 = vadd.f32 %v1183, %v1275
      %v1277 = vpop.f32.mrf.mxu0
      %v1278 = vpop.f32.mrf.mxu0
      %v1279 = vpop.f32.mrf.mxu0
      %1280 = vdwg.mxu0
      %v1281 = vadd.f32 %v1268, %v361
      %v1282 = vadd.f32 %v1271, %v362
      %v1283 = vadd.f32 %v1276, %v363
      %1284 = vadd.xlane.f32.xlu0 %v1281
      %v1285 = vpop.xlane.xlu0 %1284
      %1286 = vadd.xlane.f32.xlu0 %v1282
      %v1287 = vpop.xlane.xlu0 %1286
      %v1288 = vsel %vm369, %v1283, 0.0
      %1289 = vadd.xlane.f32.xlu0 %v1288
      %v1290 = vpop.xlane.xlu0 %1289
      %v1291 = vmul.f32 %v1285, %v373
      %v1292 = vmul.f32 %v1287, %v373
      %v1293 = vmul.f32 %v1290, %v373
      %v1294 = vsub.f32 %v1281, %v1291
      %v1295 = vsub.f32 %v1282, %v1292
      %v1296 = vsub.f32 %v1283, %v1293
      %v1297 = vmul.f32 %v1294, %v1294
      %v1298 = vmul.f32 %v1295, %v1295
      %v1299 = vmul.f32 %v1296, %v1296
      %1300 = vadd.xlane.f32.xlu0 %v1297
      %v1301 = vpop.xlane.xlu0 %1300
      %1302 = vadd.xlane.f32.xlu0 %v1298
      %v1303 = vpop.xlane.xlu0 %1302
      %v1304 = vsel %vm369, %v1299, 0.0
      %1305 = vadd.xlane.f32.xlu0 %v1304
      %v1306 = vpop.xlane.xlu0 %1305
      %v1307 = vmul.f32 %v1301, %v373
      %v1308 = vmul.f32 %v1303, %v373
      %v1309 = vmul.f32 %v1306, %v373
      %v1310 = vadd.f32 %v1307, 1e-05
      %v1311 = vadd.f32 %v1308, 1e-05
      %v1312 = vadd.f32 %v1309, 1e-05
      %v1313 = vrsqrt.pop %v1310
      %v1314 = vrsqrt.pop %v1311
      %v1315 = vrsqrt.pop %v1312
      %v1316 = vmul.f32 %v1294, %v1313
      %v1317 = vmul.f32 %v1295, %v1314
      %v1318 = vmul.f32 %v1296, %v1315
      %v1319 = vlaneseq
      %v1320 = vshrl.u32 %v1319, 7
      %v1321 = vsub.s32 2, %v1320
      %v1322 = vrot.slane %v364, %v1321
      %v1323 = vmul.f32 %v1316, %v1322
      %v1324 = vmul.f32 %v1317, %v1322
      %v1325 = vmul.f32 %v1318, %v1322
      %v1326 = vlaneseq
      %v1327 = vshrl.u32 %v1326, 7
      %v1328 = vsub.s32 3, %v1327
      %v1329 = vrot.slane %v364, %v1328
      %v1330 = vadd.f32 %v1323, %v1329
      %v1331 = vadd.f32 %v1324, %v1329
      %v1332 = vadd.f32 %v1325, %v1329
      %v1333 = vpack.c.bf16 %v1331, %v1330
      %v1334 = vpack.c.bf16 %v1332, %v1332
      %v1335 = vld [vmem:[%s6] sm:$0xff]
      %v1336 = vld [vmem:[%s6 + $0x8] sm:$0xff]
      %v1337 = vld [vmem:[%s6 + $0x10] sm:$0xff]
      %v1338 = vld [vmem:[%s6 + $0x18] sm:$0xff]
      %v1339 = vld [vmem:[%s6 + $0x20] sm:$0xff]
      %v1340 = vld [vmem:[%s6 + $0x28] sm:$0xff]
      %v1341 = vld [vmem:[%s6 + $0x30] sm:$0xff]
      %v1342 = vld [vmem:[%s6 + $0x38] sm:$0xff]
      %v1343 = vld [vmem:[%s6 + $0x40] sm:$0xff]
      %v1344 = vld [vmem:[%s6 + $0x48] sm:$0xff]
      %v1345 = vld [vmem:[%s6 + $0x50] sm:$0xff]
      %v1346 = vld [vmem:[%s6 + $0x58] sm:$0xff]
      %v1347 = vld [vmem:[%s6 + $0x60] sm:$0xff]
      %v1348 = vld [vmem:[%s6 + $0x68] sm:$0xff]
      %v1349 = vld [vmem:[%s6 + $0x70] sm:$0xff]
      %v1350 = vld [vmem:[%s6 + $0x78] sm:$0xff]
      %v1351 = vld [vmem:[%s6 + $0x80] sm:$0xff]
      %v1352 = vld [vmem:[%s6 + $0x88] sm:$0xff]
      %v1353 = vld [vmem:[%s6 + $0x90] sm:$0xff]
      %v1354 = vld [vmem:[%s6 + $0x98] sm:$0xff]
      %v1355 = vld [vmem:[%s6 + $0xa0] sm:$0xff]
      %v1356 = vld [vmem:[%s6 + $0xa8] sm:$0xff]
      %v1357 = vld [vmem:[%s6 + $0xb0] sm:$0xff]
      %v1358 = vld [vmem:[%s6 + $0xb8] sm:$0xff]
      %v1359 = vld [vmem:[%s6 + $0xc0] sm:$0xff]
      %v1360 = vld [vmem:[%s6 + $0xc8] sm:$0xff]
      %v1361 = vld [vmem:[%s6 + $0xd0] sm:$0xff]
      %v1362 = vld [vmem:[%s6 + $0xd8] sm:$0xff]
      %v1363 = vld [vmem:[%s6 + $0xe0] sm:$0xff]
      %v1364 = vld [vmem:[%s6 + $0xe8] sm:$0xff]
      %v1365 = vld [vmem:[%s6 + $0xf0] sm:$0xff]
      %v1366 = vld [vmem:[%s6 + $0xf8] sm:$0xff]
      %v1367 = vld [vmem:[%s7] sm:$0xf]
      %v1369 = vlaneseq
      %v1370 = vshrl.u32 %v1369, 7
      %v1371 = vsub.s32 0, %v1370
      %v1372 = vrot.slane %v1367, %v1371
      %v1373 = vlaneseq
      %v1374 = vshrl.u32 %v1373, 7
      %v1375 = vsub.s32 1, %v1374
      %v1376 = vrot.slane %v1367, %v1375
      %v1377 = vlaneseq
      %v1378 = vshrl.u32 %v1377, 7
      %v1379 = vsub.s32 2, %v1378
      %v1380 = vrot.slane %v1367, %v1379
      %v1381 = vlaneseq
      %v1382 = vshrl.u32 %v1381, 7
      %v1383 = vsub.s32 3, %v1382
      %v1384 = vrot.slane %v1367, %v1383
      %v1421 = vunpack.c.l.b16 %v1335
      %v1422 = vunpack.c.h.b16 %v1335
      %v1423 = vunpack.c.l.b16 %v1336
      %v1424 = vunpack.c.h.b16 %v1336
      %v1425 = vunpack.c.l.b16 %v1337
      %v1426 = vunpack.c.h.b16 %v1337
      %v1427 = vunpack.c.l.b16 %v1338
      %v1428 = vunpack.c.h.b16 %v1338
      %v1429 = vunpack.c.l.b16 %v1339
      %v1430 = vunpack.c.h.b16 %v1339
      %v1431 = vunpack.c.l.b16 %v1340
      %v1432 = vunpack.c.h.b16 %v1340
      %v1433 = vunpack.c.l.b16 %v1341
      %v1434 = vunpack.c.h.b16 %v1341
      %v1435 = vunpack.c.l.b16 %v1342
      %v1436 = vunpack.c.h.b16 %v1342
      %v1437 = vunpack.c.l.b16 %v1343
      %v1438 = vunpack.c.h.b16 %v1343
      %v1439 = vunpack.c.l.b16 %v1344
      %v1440 = vunpack.c.h.b16 %v1344
      %v1441 = vunpack.c.l.b16 %v1345
      %v1442 = vunpack.c.h.b16 %v1345
      %v1443 = vunpack.c.l.b16 %v1346
      %v1444 = vunpack.c.h.b16 %v1346
      %v1445 = vunpack.c.l.b16 %v1347
      %v1446 = vunpack.c.h.b16 %v1347
      %v1447 = vunpack.c.l.b16 %v1348
      %v1448 = vunpack.c.h.b16 %v1348
      %v1449 = vunpack.c.l.b16 %v1349
      %v1450 = vunpack.c.h.b16 %v1349
      %v1451 = vunpack.c.l.b16 %v1350
      %v1452 = vunpack.c.h.b16 %v1350
      %v1453 = vunpack.c.l.b16 %v1351
      %v1454 = vunpack.c.h.b16 %v1351
      %v1455 = vunpack.c.l.b16 %v1352
      %v1456 = vunpack.c.h.b16 %v1352
      %v1457 = vunpack.c.l.b16 %v1353
      %v1458 = vunpack.c.h.b16 %v1353
      %v1459 = vunpack.c.l.b16 %v1354
      %v1460 = vunpack.c.h.b16 %v1354
      %v1461 = vunpack.c.l.b16 %v1355
      %v1462 = vunpack.c.h.b16 %v1355
      %v1463 = vunpack.c.l.b16 %v1356
      %v1464 = vunpack.c.h.b16 %v1356
      %v1465 = vunpack.c.l.b16 %v1357
      %v1466 = vunpack.c.h.b16 %v1357
      %v1467 = vunpack.c.l.b16 %v1358
      %v1468 = vunpack.c.h.b16 %v1358
      %v1469 = vunpack.c.l.b16 %v1359
      %v1470 = vunpack.c.h.b16 %v1359
      %v1471 = vunpack.c.l.b16 %v1360
      %v1472 = vunpack.c.h.b16 %v1360
      %v1473 = vunpack.c.l.b16 %v1361
      %v1474 = vunpack.c.h.b16 %v1361
      %v1475 = vunpack.c.l.b16 %v1362
      %v1476 = vunpack.c.h.b16 %v1362
      %v1477 = vunpack.c.l.b16 %v1363
      %v1478 = vunpack.c.h.b16 %v1363
      %v1479 = vunpack.c.l.b16 %v1364
      %v1480 = vunpack.c.h.b16 %v1364
      %v1481 = vunpack.c.l.b16 %v1365
      %v1482 = vunpack.c.h.b16 %v1365
      %v1483 = vunpack.c.l.b16 %v1366
      %v1484 = vunpack.c.h.b16 %v1366
      %v1485 = vpack.c.b16 %v1425, %v1421
      %v1486 = vpack.c.b16 %v1426, %v1422
      %v1487 = vpack.c.b16 %v1427, %v1423
      %v1488 = vpack.c.b16 %v1428, %v1424
      %v1489 = vpack.c.b16 %v1433, %v1429
      %v1490 = vpack.c.b16 %v1434, %v1430
      %v1491 = vpack.c.b16 %v1435, %v1431
      %v1492 = vpack.c.b16 %v1436, %v1432
      %v1493 = vpack.c.b16 %v1441, %v1437
      %v1494 = vpack.c.b16 %v1442, %v1438
      %v1495 = vpack.c.b16 %v1443, %v1439
      %v1496 = vpack.c.b16 %v1444, %v1440
      %v1497 = vpack.c.b16 %v1449, %v1445
      %v1498 = vpack.c.b16 %v1450, %v1446
      %v1499 = vpack.c.b16 %v1451, %v1447
      %v1500 = vpack.c.b16 %v1452, %v1448
      %v1501 = vpack.c.b16 %v1457, %v1453
      %v1502 = vpack.c.b16 %v1458, %v1454
      %v1503 = vpack.c.b16 %v1459, %v1455
      %v1504 = vpack.c.b16 %v1460, %v1456
      %v1505 = vpack.c.b16 %v1465, %v1461
      %v1506 = vpack.c.b16 %v1466, %v1462
      %v1507 = vpack.c.b16 %v1467, %v1463
      %v1508 = vpack.c.b16 %v1468, %v1464
      %v1509 = vpack.c.b16 %v1473, %v1469
      %v1510 = vpack.c.b16 %v1474, %v1470
      %v1511 = vpack.c.b16 %v1475, %v1471
      %v1512 = vpack.c.b16 %v1476, %v1472
      %v1513 = vpack.c.b16 %v1481, %v1477
      %v1514 = vpack.c.b16 %v1482, %v1478
      %v1515 = vpack.c.b16 %v1483, %v1479
      %v1516 = vpack.c.b16 %v1484, %v1480
      %1549 = vmatprep.subr.bf16.mxu0 %v1514
      %1550 = vmatpush1.bf16.msra.mxu0 %v1513
      %1551 = vmatprep.subr.bf16.mxu0 %v1510
      %1552 = vmatpush1.bf16.msra.mxu0 %v1509
      %1553 = vmatprep.subr.bf16.mxu0 %v1506
      %1554 = vmatpush1.bf16.msra.mxu0 %v1505
      %1555 = vmatprep.subr.bf16.mxu0 %v1502
      %1556 = vmatpush1.bf16.msra.mxu0 %v1501
      %1557 = vmatprep.subr.bf16.mxu0 %v1498
      %1558 = vmatpush1.bf16.msra.mxu0 %v1497
      %1559 = vmatprep.subr.bf16.mxu0 %v1494
      %1560 = vmatpush1.bf16.msra.mxu0 %v1493
      %1561 = vmatprep.subr.bf16.mxu0 %v1490
      %1562 = vmatpush1.bf16.msra.mxu0 %v1489
      %1563 = vmatprep.subr.bf16.mxu0 %v1486
      %1564 = vmatpush1.bf16.msra.mxu0 %v1485
      %1565 = vmatprep.subr.bf16.mxu0 0
      %1566 = vmatpush2.bf16.msra.mxu0 0
      %1567 = vmatprep.subr.bf16.mxu0 0
      %1568 = vmatpush2.bf16.msra.mxu0 0
      %1569 = vmatprep.subr.bf16.mxu0 0
      %1570 = vmatpush2.bf16.msra.mxu0 0
      %1571 = vmatprep.subr.bf16.mxu0 0
      %1572 = vmatpush2.bf16.msra.mxu0 0
      %1573 = vmatprep.subr.bf16.mxu0 0
      %1574 = vmatpush2.bf16.msra.mxu0 0
      %1575 = vmatprep.subr.bf16.mxu0 0
      %1576 = vmatpush2.bf16.msra.mxu0 0
      %1577 = vmatprep.subr.bf16.mxu0 0
      %1578 = vmatpush2.bf16.msra.mxu0 0
      %1579 = vmatprep.subr.bf16.mxu0 0
      %1580 = vmatpush2.bf16.msra.mxu0 0
      %1581 = vmatprep.mubr.bf16.mxu0 0
      %1582 = vmatmul.mubr.bf16.gmra.mxu0 %v1333
      %v1583 = vpop.f32.mrf.mxu0
      %v1584 = vadd.f32 %v1372, %v1583
      %v1585 = vpop.f32.mrf.mxu0
      %v1586 = vadd.f32 %v1376, %v1585
      %v1587 = vpop.f32.mrf.mxu0
      %v1588 = vadd.f32 %v1372, %v1587
      %v1589 = vpop.f32.mrf.mxu0
      %v1590 = vadd.f32 %v1376, %v1589
      %1591 = vmatprep.mubr.bf16.mxu0 0
      %1592 = vmatmul.mubr.bf16.gmra.mxu0 %v1334
      %v1593 = vpop.f32.mrf.mxu0
      %v1594 = vadd.f32 %v1372, %v1593
      %v1595 = vpop.f32.mrf.mxu0
      %v1596 = vadd.f32 %v1376, %v1595
      %v1597 = vpop.f32.mrf.mxu0
      %v1598 = vpop.f32.mrf.mxu0
      %1599 = vdwg.mxu0
      %1600 = vmatprep.subr.bf16.mxu0 %v1516
      %1601 = vmatpush1.bf16.msra.mxu0 %v1515
      %1602 = vmatprep.subr.bf16.mxu0 %v1512
      %1603 = vmatpush1.bf16.msra.mxu0 %v1511
      %1604 = vmatprep.subr.bf16.mxu0 %v1508
      %1605 = vmatpush1.bf16.msra.mxu0 %v1507
      %1606 = vmatprep.subr.bf16.mxu0 %v1504
      %1607 = vmatpush1.bf16.msra.mxu0 %v1503
      %1608 = vmatprep.subr.bf16.mxu0 %v1500
      %1609 = vmatpush1.bf16.msra.mxu0 %v1499
      %1610 = vmatprep.subr.bf16.mxu0 %v1496
      %1611 = vmatpush1.bf16.msra.mxu0 %v1495
      %1612 = vmatprep.subr.bf16.mxu0 %v1492
      %1613 = vmatpush1.bf16.msra.mxu0 %v1491
      %1614 = vmatprep.subr.bf16.mxu0 %v1488
      %1615 = vmatpush1.bf16.msra.mxu0 %v1487
      %1616 = vmatprep.subr.bf16.mxu0 0
      %1617 = vmatpush2.bf16.msra.mxu0 0
      %1618 = vmatprep.subr.bf16.mxu0 0
      %1619 = vmatpush2.bf16.msra.mxu0 0
      %1620 = vmatprep.subr.bf16.mxu0 0
      %1621 = vmatpush2.bf16.msra.mxu0 0
      %1622 = vmatprep.subr.bf16.mxu0 0
      %1623 = vmatpush2.bf16.msra.mxu0 0
      %1624 = vmatprep.subr.bf16.mxu0 0
      %1625 = vmatpush2.bf16.msra.mxu0 0
      %1626 = vmatprep.subr.bf16.mxu0 0
      %1627 = vmatpush2.bf16.msra.mxu0 0
      %1628 = vmatprep.subr.bf16.mxu0 0
      %1629 = vmatpush2.bf16.msra.mxu0 0
      %1630 = vmatprep.subr.bf16.mxu0 0
      %1631 = vmatpush2.bf16.msra.mxu0 0
      %1632 = vmatprep.mubr.bf16.mxu0 0
      %1633 = vmatmul.mubr.bf16.gmra.mxu0 %v1333
      %v1634 = vpop.f32.mrf.mxu0
      %v1635 = vadd.f32 %v1380, %v1634
      %v1636 = vpop.f32.mrf.mxu0
      %v1637 = vadd.f32 %v1384, %v1636
      %v1638 = vpop.f32.mrf.mxu0
      %v1639 = vadd.f32 %v1380, %v1638
      %v1640 = vpop.f32.mrf.mxu0
      %v1641 = vadd.f32 %v1384, %v1640
      %1642 = vmatprep.mubr.bf16.mxu0 0
      %1643 = vmatmul.mubr.bf16.gmra.mxu0 %v1334
      %v1644 = vpop.f32.mrf.mxu0
      %v1645 = vadd.f32 %v1380, %v1644
      %v1646 = vpop.f32.mrf.mxu0
      %v1647 = vadd.f32 %v1384, %v1646
      %v1648 = vpop.f32.mrf.mxu0
      %v1649 = vpop.f32.mrf.mxu0
      %1650 = vdwg.mxu0
      %v1651 = vmul.f32 %v1584, 1.702
      %v1652 = vmul.f32 %v1586, 1.702
      %v1653 = vmul.f32 %v1635, 1.702
      %v1654 = vmul.f32 %v1637, 1.702
      %v1655 = vmul.f32 %v1588, 1.702
      %v1656 = vmul.f32 %v1590, 1.702
      %v1657 = vmul.f32 %v1639, 1.702
      %v1658 = vmul.f32 %v1641, 1.702
      %v1659 = vmul.f32 %v1594, 1.702
      %v1660 = vmul.f32 %v1596, 1.702
      %v1661 = vmul.f32 %v1645, 1.702
      %v1662 = vmul.f32 %v1647, 1.702
      %v1663 = vxor.u32 %v1651, 2147483648
      %v1664 = vxor.u32 %v1652, 2147483648
      %v1665 = vxor.u32 %v1653, 2147483648
      %v1666 = vxor.u32 %v1654, 2147483648
      %v1667 = vxor.u32 %v1655, 2147483648
      %v1668 = vxor.u32 %v1656, 2147483648
      %v1669 = vxor.u32 %v1657, 2147483648
      %v1670 = vxor.u32 %v1658, 2147483648
      %v1671 = vxor.u32 %v1659, 2147483648
      %v1672 = vxor.u32 %v1660, 2147483648
      %v1673 = vxor.u32 %v1661, 2147483648
      %v1674 = vxor.u32 %v1662, 2147483648
      %v1675 = vmul.f32 %v1663, 1.442695
      %v1676 = vpow.pop %v1675
      %v1677 = vmul.f32 %v1664, 1.442695
      %v1678 = vpow.pop %v1677
      %v1679 = vmul.f32 %v1665, 1.442695
      %v1680 = vpow.pop %v1679
      %v1681 = vmul.f32 %v1666, 1.442695
      %v1682 = vpow.pop %v1681
      %v1683 = vmul.f32 %v1667, 1.442695
      %v1684 = vpow.pop %v1683
      %v1685 = vmul.f32 %v1668, 1.442695
      %v1686 = vpow.pop %v1685
      %v1687 = vmul.f32 %v1669, 1.442695
      %v1688 = vpow.pop %v1687
      %v1689 = vmul.f32 %v1670, 1.442695
      %v1690 = vpow.pop %v1689
      %v1691 = vmul.f32 %v1671, 1.442695
      %v1692 = vpow.pop %v1691
      %v1693 = vmul.f32 %v1672, 1.442695
      %v1694 = vpow.pop %v1693
      %v1695 = vmul.f32 %v1673, 1.442695
      %v1696 = vpow.pop %v1695
      %v1697 = vmul.f32 %v1674, 1.442695
      %v1698 = vpow.pop %v1697
      %v1699 = vadd.f32 %v1676, 1.0
      %v1700 = vadd.f32 %v1678, 1.0
      %v1701 = vadd.f32 %v1680, 1.0
      %v1702 = vadd.f32 %v1682, 1.0
      %v1703 = vadd.f32 %v1684, 1.0
      %v1704 = vadd.f32 %v1686, 1.0
      %v1705 = vadd.f32 %v1688, 1.0
      %v1706 = vadd.f32 %v1690, 1.0
      %v1707 = vadd.f32 %v1692, 1.0
      %v1708 = vadd.f32 %v1694, 1.0
      %v1709 = vadd.f32 %v1696, 1.0
      %v1710 = vadd.f32 %v1698, 1.0
      %v1711 = vrcp.pop %v1699
      %v1712 = vmul.f32 1.0, %v1711
      %v1713 = vrcp.pop %v1700
      %v1714 = vmul.f32 1.0, %v1713
      %v1715 = vrcp.pop %v1701
      %v1716 = vmul.f32 1.0, %v1715
      %v1717 = vrcp.pop %v1702
      %v1718 = vmul.f32 1.0, %v1717
      %v1719 = vrcp.pop %v1703
      %v1720 = vmul.f32 1.0, %v1719
      %v1721 = vrcp.pop %v1704
      %v1722 = vmul.f32 1.0, %v1721
      %v1723 = vrcp.pop %v1705
      %v1724 = vmul.f32 1.0, %v1723
      %v1725 = vrcp.pop %v1706
      %v1726 = vmul.f32 1.0, %v1725
      %v1727 = vrcp.pop %v1707
      %v1728 = vmul.f32 1.0, %v1727
      %v1729 = vrcp.pop %v1708
      %v1730 = vmul.f32 1.0, %v1729
      %v1731 = vrcp.pop %v1709
      %v1732 = vmul.f32 1.0, %v1731
      %v1733 = vrcp.pop %v1710
      %v1734 = vmul.f32 1.0, %v1733
      %v1735 = vmul.f32 %v1584, %v1712
      %v1736 = vmul.f32 %v1586, %v1714
      %v1737 = vmul.f32 %v1635, %v1716
      %v1738 = vmul.f32 %v1637, %v1718
      %v1739 = vmul.f32 %v1588, %v1720
      %v1740 = vmul.f32 %v1590, %v1722
      %v1741 = vmul.f32 %v1639, %v1724
      %v1742 = vmul.f32 %v1641, %v1726
      %v1743 = vmul.f32 %v1594, %v1728
      %v1744 = vmul.f32 %v1596, %v1730
      %v1745 = vmul.f32 %v1645, %v1732
      %v1746 = vmul.f32 %v1647, %v1734
      %v1747 = vpack.c.bf16 %v1739, %v1735
      %v1748 = vpack.c.bf16 %v1740, %v1736
      %v1749 = vpack.c.bf16 %v1741, %v1737
      %v1750 = vpack.c.bf16 %v1742, %v1738
      %v1751 = vpack.c.bf16 %v1743, %v1743
      %v1752 = vpack.c.bf16 %v1744, %v1744
      %v1753 = vpack.c.bf16 %v1745, %v1745
      %v1754 = vpack.c.bf16 %v1746, %v1746
      %v1755 = vld [vmem:[%s8] sm:$0xf]
      %v1756 = vld [vmem:[%s8 + $0x4] sm:$0xf]
      %v1757 = vld [vmem:[%s8 + $0x8] sm:$0xf]
      %v1758 = vld [vmem:[%s8 + $0xc] sm:$0xf]
      %v1759 = vld [vmem:[%s8 + $0x10] sm:$0xf]
      %v1760 = vld [vmem:[%s8 + $0x14] sm:$0xf]
      %v1761 = vld [vmem:[%s8 + $0x18] sm:$0xf]
      %v1762 = vld [vmem:[%s8 + $0x1c] sm:$0xf]
      %v1763 = vld [vmem:[%s8 + $0x20] sm:$0xf]
      %v1764 = vld [vmem:[%s8 + $0x24] sm:$0xf]
      %v1765 = vld [vmem:[%s8 + $0x28] sm:$0xf]
      %v1766 = vld [vmem:[%s8 + $0x2c] sm:$0xf]
      %v1767 = vld [vmem:[%s8 + $0x30] sm:$0xf]
      %v1768 = vld [vmem:[%s8 + $0x34] sm:$0xf]
      %v1769 = vld [vmem:[%s8 + $0x38] sm:$0xf]
      %v1770 = vld [vmem:[%s8 + $0x3c] sm:$0xf]
      %v1771 = vld [vmem:[%s8 + $0x40] sm:$0xf]
      %v1772 = vld [vmem:[%s8 + $0x44] sm:$0xf]
      %v1773 = vld [vmem:[%s8 + $0x48] sm:$0xf]
      %v1774 = vld [vmem:[%s8 + $0x4c] sm:$0xf]
      %v1775 = vld [vmem:[%s8 + $0x50] sm:$0xf]
      %v1776 = vld [vmem:[%s8 + $0x54] sm:$0xf]
      %v1777 = vld [vmem:[%s8 + $0x58] sm:$0xf]
      %v1778 = vld [vmem:[%s8 + $0x5c] sm:$0xf]
      %v1779 = vld [vmem:[%s8 + $0x60] sm:$0xf]
      %v1780 = vld [vmem:[%s8 + $0x64] sm:$0xf]
      %v1781 = vld [vmem:[%s8 + $0x68] sm:$0xf]
      %v1782 = vld [vmem:[%s8 + $0x6c] sm:$0xf]
      %v1783 = vld [vmem:[%s8 + $0x70] sm:$0xf]
      %v1784 = vld [vmem:[%s8 + $0x74] sm:$0xf]
      %v1785 = vld [vmem:[%s8 + $0x78] sm:$0xf]
      %v1786 = vld [vmem:[%s8 + $0x7c] sm:$0xf]
      %v1787 = vld [vmem:[%s8 + $0x80] sm:$0xf]
      %v1788 = vld [vmem:[%s8 + $0x84] sm:$0xf]
      %v1789 = vld [vmem:[%s8 + $0x88] sm:$0xf]
      %v1790 = vld [vmem:[%s8 + $0x8c] sm:$0xf]
      %v1791 = vld [vmem:[%s8 + $0x90] sm:$0xf]
      %v1792 = vld [vmem:[%s8 + $0x94] sm:$0xf]
      %v1793 = vld [vmem:[%s8 + $0x98] sm:$0xf]
      %v1794 = vld [vmem:[%s8 + $0x9c] sm:$0xf]
      %v1795 = vld [vmem:[%s8 + $0xa0] sm:$0xf]
      %v1796 = vld [vmem:[%s8 + $0xa4] sm:$0xf]
      %v1797 = vld [vmem:[%s8 + $0xa8] sm:$0xf]
      %v1798 = vld [vmem:[%s8 + $0xac] sm:$0xf]
      %v1799 = vld [vmem:[%s8 + $0xb0] sm:$0xf]
      %v1800 = vld [vmem:[%s8 + $0xb4] sm:$0xf]
      %v1801 = vld [vmem:[%s8 + $0xb8] sm:$0xf]
      %v1802 = vld [vmem:[%s8 + $0xbc] sm:$0xf]
      %v1803 = vld [vmem:[%s8 + $0xc0] sm:$0xf]
      %v1804 = vld [vmem:[%s8 + $0xc4] sm:$0xf]
      %v1805 = vld [vmem:[%s8 + $0xc8] sm:$0xf]
      %v1806 = vld [vmem:[%s8 + $0xcc] sm:$0xf]
      %v1807 = vld [vmem:[%s8 + $0xd0] sm:$0xf]
      %v1808 = vld [vmem:[%s8 + $0xd4] sm:$0xf]
      %v1809 = vld [vmem:[%s8 + $0xd8] sm:$0xf]
      %v1810 = vld [vmem:[%s8 + $0xdc] sm:$0xf]
      %v1811 = vld [vmem:[%s8 + $0xe0] sm:$0xf]
      %v1812 = vld [vmem:[%s8 + $0xe4] sm:$0xf]
      %v1813 = vld [vmem:[%s8 + $0xe8] sm:$0xf]
      %v1814 = vld [vmem:[%s8 + $0xec] sm:$0xf]
      %v1815 = vld [vmem:[%s8 + $0xf0] sm:$0xf]
      %v1816 = vld [vmem:[%s8 + $0xf4] sm:$0xf]
      %v1817 = vld [vmem:[%s8 + $0xf8] sm:$0xf]
      %v1818 = vld [vmem:[%s8 + $0xfc] sm:$0xf]
      %v1819 = vld [vmem:[%s9] sm:$0x1]
      %v1821 = vlaneseq
      %v1822 = vshrl.u32 %v1821, 7
      %v1823 = vsub.s32 0, %v1822
      %v1824 = vrot.slane %v1819, %v1823
      %v1890 = vunpack.c.l.b16 %v1755
      %v1891 = vunpack.c.l.b16 %v1756
      %v1892 = vunpack.c.l.b16 %v1757
      %v1893 = vunpack.c.l.b16 %v1758
      %v1894 = vunpack.c.l.b16 %v1759
      %v1895 = vunpack.c.l.b16 %v1760
      %v1896 = vunpack.c.l.b16 %v1761
      %v1897 = vunpack.c.l.b16 %v1762
      %v1898 = vunpack.c.l.b16 %v1763
      %v1899 = vunpack.c.l.b16 %v1764
      %v1900 = vunpack.c.l.b16 %v1765
      %v1901 = vunpack.c.l.b16 %v1766
      %v1902 = vunpack.c.l.b16 %v1767
      %v1903 = vunpack.c.l.b16 %v1768
      %v1904 = vunpack.c.l.b16 %v1769
      %v1905 = vunpack.c.l.b16 %v1770
      %v1906 = vunpack.c.l.b16 %v1771
      %v1907 = vunpack.c.l.b16 %v1772
      %v1908 = vunpack.c.l.b16 %v1773
      %v1909 = vunpack.c.l.b16 %v1774
      %v1910 = vunpack.c.l.b16 %v1775
      %v1911 = vunpack.c.l.b16 %v1776
      %v1912 = vunpack.c.l.b16 %v1777
      %v1913 = vunpack.c.l.b16 %v1778
      %v1914 = vunpack.c.l.b16 %v1779
      %v1915 = vunpack.c.l.b16 %v1780
      %v1916 = vunpack.c.l.b16 %v1781
      %v1917 = vunpack.c.l.b16 %v1782
      %v1918 = vunpack.c.l.b16 %v1783
      %v1919 = vunpack.c.l.b16 %v1784
      %v1920 = vunpack.c.l.b16 %v1785
      %v1921 = vunpack.c.l.b16 %v1786
      %v1922 = vunpack.c.l.b16 %v1787
      %v1923 = vunpack.c.l.b16 %v1788
      %v1924 = vunpack.c.l.b16 %v1789
      %v1925 = vunpack.c.l.b16 %v1790
      %v1926 = vunpack.c.l.b16 %v1791
      %v1927 = vunpack.c.l.b16 %v1792
      %v1928 = vunpack.c.l.b16 %v1793
      %v1929 = vunpack.c.l.b16 %v1794
      %v1930 = vunpack.c.l.b16 %v1795
      %v1931 = vunpack.c.l.b16 %v1796
      %v1932 = vunpack.c.l.b16 %v1797
      %v1933 = vunpack.c.l.b16 %v1798
      %v1934 = vunpack.c.l.b16 %v1799
      %v1935 = vunpack.c.l.b16 %v1800
      %v1936 = vunpack.c.l.b16 %v1801
      %v1937 = vunpack.c.l.b16 %v1802
      %v1938 = vunpack.c.l.b16 %v1803
      %v1939 = vunpack.c.l.b16 %v1804
      %v1940 = vunpack.c.l.b16 %v1805
      %v1941 = vunpack.c.l.b16 %v1806
      %v1942 = vunpack.c.l.b16 %v1807
      %v1943 = vunpack.c.l.b16 %v1808
      %v1944 = vunpack.c.l.b16 %v1809
      %v1945 = vunpack.c.l.b16 %v1810
      %v1946 = vunpack.c.l.b16 %v1811
      %v1947 = vunpack.c.l.b16 %v1812
      %v1948 = vunpack.c.l.b16 %v1813
      %v1949 = vunpack.c.l.b16 %v1814
      %v1950 = vunpack.c.l.b16 %v1815
      %v1951 = vunpack.c.l.b16 %v1816
      %v1952 = vunpack.c.l.b16 %v1817
      %v1953 = vunpack.c.l.b16 %v1818
      %v1954 = vpack.c.b16 %v1891, %v1890
      %v1955 = vpack.c.b16 %v1893, %v1892
      %v1956 = vpack.c.b16 %v1895, %v1894
      %v1957 = vpack.c.b16 %v1897, %v1896
      %v1958 = vpack.c.b16 %v1899, %v1898
      %v1959 = vpack.c.b16 %v1901, %v1900
      %v1960 = vpack.c.b16 %v1903, %v1902
      %v1961 = vpack.c.b16 %v1905, %v1904
      %v1962 = vpack.c.b16 %v1907, %v1906
      %v1963 = vpack.c.b16 %v1909, %v1908
      %v1964 = vpack.c.b16 %v1911, %v1910
      %v1965 = vpack.c.b16 %v1913, %v1912
      %v1966 = vpack.c.b16 %v1915, %v1914
      %v1967 = vpack.c.b16 %v1917, %v1916
      %v1968 = vpack.c.b16 %v1919, %v1918
      %v1969 = vpack.c.b16 %v1921, %v1920
      %v1970 = vpack.c.b16 %v1923, %v1922
      %v1971 = vpack.c.b16 %v1925, %v1924
      %v1972 = vpack.c.b16 %v1927, %v1926
      %v1973 = vpack.c.b16 %v1929, %v1928
      %v1974 = vpack.c.b16 %v1931, %v1930
      %v1975 = vpack.c.b16 %v1933, %v1932
      %v1976 = vpack.c.b16 %v1935, %v1934
      %v1977 = vpack.c.b16 %v1937, %v1936
      %v1978 = vpack.c.b16 %v1939, %v1938
      %v1979 = vpack.c.b16 %v1941, %v1940
      %v1980 = vpack.c.b16 %v1943, %v1942
      %v1981 = vpack.c.b16 %v1945, %v1944
      %v1982 = vpack.c.b16 %v1947, %v1946
      %v1983 = vpack.c.b16 %v1949, %v1948
      %v1984 = vpack.c.b16 %v1951, %v1950
      %v1985 = vpack.c.b16 %v1953, %v1952
      %2018 = vmatprep.subr.bf16.mxu0 0
      %2019 = vmatpush1.bf16.msra.mxu0 %v1961
      %2020 = vmatprep.subr.bf16.mxu0 0
      %2021 = vmatpush1.bf16.msra.mxu0 %v1960
      %2022 = vmatprep.subr.bf16.mxu0 0
      %2023 = vmatpush1.bf16.msra.mxu0 %v1959
      %2024 = vmatprep.subr.bf16.mxu0 0
      %2025 = vmatpush1.bf16.msra.mxu0 %v1958
      %2026 = vmatprep.subr.bf16.mxu0 0
      %2027 = vmatpush1.bf16.msra.mxu0 %v1957
      %2028 = vmatprep.subr.bf16.mxu0 0
      %2029 = vmatpush1.bf16.msra.mxu0 %v1956
      %2030 = vmatprep.subr.bf16.mxu0 0
      %2031 = vmatpush1.bf16.msra.mxu0 %v1955
      %2032 = vmatprep.subr.bf16.mxu0 0
      %2033 = vmatpush1.bf16.msra.mxu0 %v1954
      %2034 = vmatprep.subr.bf16.mxu0 0
      %2035 = vmatpush2.bf16.msra.mxu0 %v1969
      %2036 = vmatprep.subr.bf16.mxu0 0
      %2037 = vmatpush2.bf16.msra.mxu0 %v1968
      %2038 = vmatprep.subr.bf16.mxu0 0
      %2039 = vmatpush2.bf16.msra.mxu0 %v1967
      %2040 = vmatprep.subr.bf16.mxu0 0
      %2041 = vmatpush2.bf16.msra.mxu0 %v1966
      %2042 = vmatprep.subr.bf16.mxu0 0
      %2043 = vmatpush2.bf16.msra.mxu0 %v1965
      %2044 = vmatprep.subr.bf16.mxu0 0
      %2045 = vmatpush2.bf16.msra.mxu0 %v1964
      %2046 = vmatprep.subr.bf16.mxu0 0
      %2047 = vmatpush2.bf16.msra.mxu0 %v1963
      %2048 = vmatprep.subr.bf16.mxu0 0
      %2049 = vmatpush2.bf16.msra.mxu0 %v1962
      %2050 = vmatprep.mubr.bf16.mxu0 %v1748
      %2051 = vmatmul.mubr.bf16.gmra.mxu0 %v1747
      %v2052 = vpop.f32.mrf.mxu0
      %v2053 = vadd.f32 %v1824, %v2052
      %v2054 = vpop.f32.mrf.mxu0
      %v2055 = vpop.f32.mrf.mxu0
      %v2056 = vadd.f32 %v1824, %v2055
      %v2057 = vpop.f32.mrf.mxu0
      %2058 = vmatprep.mubr.bf16.mxu0 %v1752
      %2059 = vmatmul.mubr.bf16.gmra.mxu0 %v1751
      %v2060 = vpop.f32.mrf.mxu0
      %v2061 = vadd.f32 %v1824, %v2060
      %v2062 = vpop.f32.mrf.mxu0
      %v2063 = vpop.f32.mrf.mxu0
      %v2064 = vpop.f32.mrf.mxu0
      %2065 = vdwg.mxu0
      %2066 = vmatprep.subr.bf16.mxu0 0
      %2067 = vmatpush1.bf16.msra.mxu0 %v1977
      %2068 = vmatprep.subr.bf16.mxu0 0
      %2069 = vmatpush1.bf16.msra.mxu0 %v1976
      %2070 = vmatprep.subr.bf16.mxu0 0
      %2071 = vmatpush1.bf16.msra.mxu0 %v1975
      %2072 = vmatprep.subr.bf16.mxu0 0
      %2073 = vmatpush1.bf16.msra.mxu0 %v1974
      %2074 = vmatprep.subr.bf16.mxu0 0
      %2075 = vmatpush1.bf16.msra.mxu0 %v1973
      %2076 = vmatprep.subr.bf16.mxu0 0
      %2077 = vmatpush1.bf16.msra.mxu0 %v1972
      %2078 = vmatprep.subr.bf16.mxu0 0
      %2079 = vmatpush1.bf16.msra.mxu0 %v1971
      %2080 = vmatprep.subr.bf16.mxu0 0
      %2081 = vmatpush1.bf16.msra.mxu0 %v1970
      %2082 = vmatprep.subr.bf16.mxu0 0
      %2083 = vmatpush2.bf16.msra.mxu0 %v1985
      %2084 = vmatprep.subr.bf16.mxu0 0
      %2085 = vmatpush2.bf16.msra.mxu0 %v1984
      %2086 = vmatprep.subr.bf16.mxu0 0
      %2087 = vmatpush2.bf16.msra.mxu0 %v1983
      %2088 = vmatprep.subr.bf16.mxu0 0
      %2089 = vmatpush2.bf16.msra.mxu0 %v1982
      %2090 = vmatprep.subr.bf16.mxu0 0
      %2091 = vmatpush2.bf16.msra.mxu0 %v1981
      %2092 = vmatprep.subr.bf16.mxu0 0
      %2093 = vmatpush2.bf16.msra.mxu0 %v1980
      %2094 = vmatprep.subr.bf16.mxu0 0
      %2095 = vmatpush2.bf16.msra.mxu0 %v1979
      %2096 = vmatprep.subr.bf16.mxu0 0
      %2097 = vmatpush2.bf16.msra.mxu0 %v1978
      %2098 = vmatprep.mubr.bf16.mxu0 %v1750
      %2099 = vmatmul.mubr.bf16.gmra.mxu0 %v1749
      %v2100 = vpop.f32.mrf.mxu0
      %v2101 = vadd.f32 %v2053, %v2100
      %v2102 = vpop.f32.mrf.mxu0
      %v2103 = vpop.f32.mrf.mxu0
      %v2104 = vadd.f32 %v2056, %v2103
      %v2105 = vpop.f32.mrf.mxu0
      %2106 = vmatprep.mubr.bf16.mxu0 %v1754
      %2107 = vmatmul.mubr.bf16.gmra.mxu0 %v1753
      %v2108 = vpop.f32.mrf.mxu0
      %v2109 = vadd.f32 %v2061, %v2108
      %v2110 = vpop.f32.mrf.mxu0
      %v2111 = vpop.f32.mrf.mxu0
      %v2112 = vpop.f32.mrf.mxu0
      %2113 = vdwg.mxu0
      %v2114 = vadd.f32 %v2101, %v1281
      %v2115 = vadd.f32 %v2104, %v1282
      %v2116 = vadd.f32 %v2109, %v1283
      %2117 = vst [vmem:[%s359] sm:$0xff] %v2114
      %2118 = vst [vmem:[%s359 + $0x8] sm:$0xff] %v2115
      %2119 = vst [vmem:[%s359 + $0x10] sm:$0x1] %v2116
      %p2120 = scmp.lt.s32.totalorder %s21, 1
      %s2121 = scalar_select %p2120, %s21, 1
      %s2122 = smul.addr %s2121, 3
      %s2123 = smul.addr %s2122, 8
      %s2124 = scalar_lea.vmem %s10, %s2123
      // Predicated region
      $region68: #{clip_vision_tower_forward.4} parent=59 // pred_check
        %p2125 = pneg %p254
      $region69: #{clip_vision_tower_forward.4} parent=59 // pred_check_branch
        %2127 = sbr.rel (%p2125) target = $region71
      $region70: #{clip_vision_tower_forward.4} parent=59 // pred_region
        _
      $region71: #{clip_vision_tower_forward.4} parent=59 // pred_fallthru
        _
    $region60: #{clip_vision_tower_forward.4} parent=5 // pred_fallthru
      _
    %p2128 = scmp.le.s32.totalorder 2, %s16
    // Predicated region
    $region72: #{clip_vision_tower_forward.4} parent=5 // pred_check
      %p2129 = pneg %p2128
    $region73: #{clip_vision_tower_forward.4} parent=5 // pred_check_branch
      %2131 = sbr.rel (%p2129) target = $region75
    $region74: #{clip_vision_tower_forward.4} parent=5 // pred_region
      %s2132 = ssub.s32 %s16, 2
      // Predicated region
      $region76: #{clip_vision_tower_forward.4} parent=74 // pred_check
        %p2133 = pneg %p260
      $region77: #{clip_vision_tower_forward.4} parent=74 // pred_check_branch
        %2135 = sbr.rel (%p2133) target = $region79
      $region78: #{clip_vision_tower_forward.4} parent=74 // pred_region
        %p2136 = scmp.lt.s32.totalorder %s22, 1
        %s2137 = scalar_select %p2136, %s22, 1
        %s2138 = smul.addr %s2137, 3
        %s2139 = smul.addr %s2138, 8
        %s2140 = scalar_lea.vmem %s10, %s2139
      $region79: #{clip_vision_tower_forward.4} parent=74 // pred_fallthru
        _
    $region75: #{clip_vision_tower_forward.4} parent=5 // pred_fallthru
      _
  $region6: #{clip_vision_tower_forward.4} parent=0 // loop_footer
    %s20 = sadd.s32 1, %s16
  $region7: #{clip_vision_tower_forward.4} parent=0 // loop_footer_branch
    %15 = sbr.rel target = $region3
  $region8: #{clip_vision_tower_forward.4} parent=0 // loop_exit
    _

</llo_original>
